<compile_context>
chip_gen: v6e
topology: v6e:2x2x1
jax: 0.10.0
libtpu: 0.0.40
codegen_flags: <defaults>
</compile_context>

<pallas_src>
import numpy as np

import jax
import jax.numpy as jnp
from jax.experimental import pallas as pl
from jax.experimental.pallas import tpu as pltpu


# ----------------------------------------------------------------------------
# Fused LeNet kernel: conv1+relu+pool -> conv2+relu+pool -> fc1 -> fc2 -> fc3 -> softmax
# ----------------------------------------------------------------------------
def _lenet_fused_kernel(xs_ref, w1_ref, b1_ref, w2_ref, b2_ref,
                        fw1_ref, fb1_ref, fw2_ref, fb2_ref, fw3_ref, fb3_ref,
                        out_ref):
    tb = xs_ref.shape[0]
    xs = xs_ref[...]                                   # (tb, 4, 7, 28); xs[b,p,g,:] = image row 4g+p

    w1 = w1_ref[...]                                   # (168, 288) folded conv1+pool weights
    b1 = b1_ref[...]                                   # (1, 288)
    w2 = w2_ref[...]                                   # (432, 256) folded conv2+pool weights
    b2 = b2_ref[...]                                   # (1, 256)

    # ---- conv1 + bias + relu + 2x2 max-pool --------------------------------------------
    # Rows are emitted per row-parity: pooled output row h = 2*k + parity, k = 0..5.
    # Output lanes of the matmul are ordered ((dpi,dpj) pool pos, pooled_w, c_out),
    # so the 2x2 pool is a max over 4 contiguous 72-lane blocks.
    a1 = []                                            # a1[parity]: (tb, 6, 72), lanes = (w, c)
    for par in range(2):
        slabs = []
        for di in range(6):                            # needs image row 2*h + di = 4*k + (2*par + di)
            c = 2 * par + di
            slabs.append(xs[:, c % 4, c // 4:c // 4 + 6, :])       # (tb, 6, 28), contiguous
        xr = jnp.concatenate(slabs, axis=-1).reshape(tb * 6, 168)
        y = jnp.dot(xr, w1, preferred_element_type=jnp.float32) + b1
        y = jnp.maximum(y, 0.0)                        # (tb*6, 288)
        p = jnp.maximum(jnp.maximum(y[:, 0:72], y[:, 72:144]),
                        jnp.maximum(y[:, 144:216], y[:, 216:288]))
        a1.append(p.reshape(tb, 6, 72))

    # ---- conv2 + bias + relu + 2x2 max-pool --------------------------------------------
    # Patch row for pooled output row ph2 needs conv1 activation rows h = 2*ph2 + di,
    # which live in a1[di % 2] at contiguous offsets di//2 : di//2 + 4.
    slabs2 = [a1[di % 2][:, di // 2:di // 2 + 4, :] for di in range(6)]    # 6 x (tb, 4, 72)
    xr2 = jnp.concatenate(slabs2, axis=-1).reshape(tb * 4, 432)
    y2 = jnp.dot(xr2, w2, preferred_element_type=jnp.float32) + b2
    y2 = jnp.maximum(y2, 0.0)                          # (tb*4, 256)
    a2 = jnp.maximum(jnp.maximum(y2[:, 0:64], y2[:, 64:128]),
                     jnp.maximum(y2[:, 128:192], y2[:, 192:256]))
    a2 = a2.reshape(tb, 4, 64)                         # (b, h2, (w2, c)), c fastest

    # ---- flatten + fc1 + fc2 + fc3 + softmax -------------------------------------------
    # Flatten folded into fc1 as 4 row-block dots (fc1 weight rows pre-permuted to (h,w,c)).
    fw1 = fw1_ref[...]
    h = fb1_ref[...]
    for r in range(4):
        h = h + jnp.dot(a2[:, r, :], fw1[r * 64:(r + 1) * 64, :],
                        preferred_element_type=jnp.float32)
    h = jnp.dot(h, fw2_ref[...], preferred_element_type=jnp.float32) + fb2_ref[...]
    logits = jnp.dot(h, fw3_ref[...], preferred_element_type=jnp.float32) + fb3_ref[...]

    m = jnp.max(logits, axis=-1, keepdims=True)
    e = jnp.exp(logits - m)
    out_ref[...] = e / jnp.sum(e, axis=-1, keepdims=True)   # exact softmax


# ----------------------------------------------------------------------------
# One-time host-side weight folding (conv+pool -> single matmuls, fc1 row permute)
# ----------------------------------------------------------------------------
def prepare_params(params):
    w1 = np.asarray(params["conv1_w"], np.float32)     # (6, 1, 5, 5)   [co, ci, kh, kw]
    b1 = np.asarray(params["conv1_b"], np.float32)     # (6,)
    w2 = np.asarray(params["conv2_w"], np.float32)     # (16, 6, 5, 5)
    b2 = np.asarray(params["conv2_b"], np.float32)     # (16,)

    # conv1 (+2x2 pool) as a (168, 288) matmul:
    #   row index    : di*28 + iw        (di in 0..5 -> input row 2*ph + di, iw in 0..27)
    #   column index : q*72 + pw*6 + co  (q = dpi*2+dpj pool pos, pw pooled col, co out ch)
    w1r = np.zeros((6 * 28, 4 * 12 * 6), np.float32)
    for dpi in range(2):
        for dpj in range(2):
            q = dpi * 2 + dpj
            for pw in range(12):
                for co in range(6):
                    col = q * 72 + pw * 6 + co
                    for kh in range(5):
                        for kw in range(5):
                            w1r[(dpi + kh) * 28 + (2 * pw + dpj + kw), col] = w1[co, 0, kh, kw]
    b1r = np.tile(b1, 48).reshape(1, 288)

    # conv2 (+2x2 pool) as a (432, 256) matmul:
    #   row index    : di*72 + iw*6 + ci  (di in 0..5 -> input row 2*ph2 + di, iw in 0..11, ci in 0..5)
    #   column index : q*64 + pw2*16 + co
    w2r = np.zeros((6 * 12 * 6, 4 * 4 * 16), np.float32)
    for dpi in range(2):
        for dpj in range(2):
            q = dpi * 2 + dpj
            for pw in range(4):
                for co in range(16):
                    col = q * 64 + pw * 16 + co
                    for ci in range(6):
                        for kh in range(5):
                            for kw in range(5):
                                row = (dpi + kh) * 72 + (2 * pw + dpj + kw) * 6 + ci
                                w2r[row, col] = w2[co, ci, kh, kw]
    b2r = np.tile(b2, 16).reshape(1, 256)

    # fc1 rows permuted from torch (c, h, w) flatten order to our (h, w, c) order
    fc1_wp = (np.asarray(params["fc1_w"], np.float32)
              .reshape(16, 4, 4, 120).transpose(1, 2, 0, 3).reshape(256, 120))

    return {
        "w1r": jnp.asarray(w1r), "b1r": jnp.asarray(b1r),
        "w2r": jnp.asarray(w2r), "b2r": jnp.asarray(b2r),
        "fc1_w": jnp.asarray(fc1_wp), "fc1_b": params["fc1_b"].reshape(1, 120),
        "fc2_w": params["fc2_w"],      "fc2_b": params["fc2_b"].reshape(1, 84),
        "fc3_w": params["fc3_w"],      "fc3_b": params["fc3_b"].reshape(1, 10),
    }


# ----------------------------------------------------------------------------
# Forward wrapper (single pallas_call, batched grid)
# ----------------------------------------------------------------------------
def _pick_tb(B):
    for tb in (32, 16, 8):                 # prefer >=2 grid steps (both v7x TCs busy)
        if B % tb == 0 and B // tb >= 2:
            return tb
    for tb in (32, 16, 8):
        if B % tb == 0:
            return tb
    return B


def model_forward(x_nchw, prep):
    B = x_nchw.shape[0]
    tb = _pick_tb(B)

    # One-time cheap layout op on the raw input (no inflation):
    # split the 28 image rows into 4 phase classes -> xs[b, p, g, :] = x[b, 0, 4*g + p, :]
    xs = x_nchw.reshape(B, 28, 28).reshape(B, 7, 4, 28).transpose(0, 2, 1, 3)  # (B, 4, 7, 28)

    weight_keys = ("w1r", "b1r", "w2r", "b2r",
                   "fc1_w", "fc1_b", "fc2_w", "fc2_b", "fc3_w", "fc3_b")
    weight_specs = [pl.BlockSpec(prep[k].shape, lambda i: (0, 0)) for k in weight_keys]

    return pl.pallas_call(
        _lenet_fused_kernel,
        out_shape=jax.ShapeDtypeStruct((B, 10), jnp.float32),
        grid=(B // tb,),
        in_specs=[pl.BlockSpec((tb, 4, 7, 28), lambda i: (i, 0, 0, 0))] + weight_specs,
        out_specs=pl.BlockSpec((tb, 10), lambda i: (i, 0)),
        compiler_params=pltpu.CompilerParams(dimension_semantics=("parallel",)),
    )(xs, *[prep[k] for k in weight_keys])


# ----------------------------------------------------------------------------
# Pure-JAX reference (for correctness check)
# ----------------------------------------------------------------------------
def reference_forward(x, params):
    dn = ("NCHW", "OIHW", "NCHW")
    y = jax.lax.conv_general_dilated(x, params["conv1_w"], (1, 1), "VALID",
                                     dimension_numbers=dn)
    y = jax.nn.relu(y + params["conv1_b"].reshape(1, 6, 1, 1))
    y = jax.lax.reduce_window(y, -jnp.inf, jax.lax.max, (1, 1, 2, 2), (1, 1, 2, 2), "VALID")
    y = jax.lax.conv_general_dilated(y, params["conv2_w"], (1, 1), "VALID",
                                     dimension_numbers=dn)
    y = jax.nn.relu(y + params["conv2_b"].reshape(1, 16, 1, 1))
    y = jax.lax.reduce_window(y, -jnp.inf, jax.lax.max, (1, 1, 2, 2), (1, 1, 2, 2), "VALID")
    y = y.reshape(y.shape[0], -1)
    y = y @ params["fc1_w"] + params["fc1_b"]
    y = y @ params["fc2_w"] + params["fc2_b"]
    y = y @ params["fc3_w"] + params["fc3_b"]
    return jax.nn.softmax(y, axis=1)


# ----------------------------------------------------------------------------
# Deterministic parameter init (PyTorch-style U(-1/sqrt(fan_in), 1/sqrt(fan_in)))
# ----------------------------------------------------------------------------
def init_params(key):
    def uinit(k, shape, fan_in):
        bound = 1.0 / (fan_in ** 0.5)
        return jax.random.uniform(k, shape, jnp.float32, -bound, bound)

    keys = jax.random.split(key, 10)
    return {
        "conv1_w": uinit(keys[0], (6, 1, 5, 5), 25),
        "conv1_b": uinit(keys[1], (6,), 25),
        "conv2_w": uinit(keys[2], (16, 6, 5, 5), 150),
        "conv2_b": uinit(keys[3], (16,), 150),
        "fc1_w": uinit(keys[4], (256, 120), 256),
        "fc1_b": uinit(keys[5], (120,), 256),
        "fc2_w": uinit(keys[6], (120, 84), 120),
        "fc2_b": uinit(keys[7], (84,), 120),
        "fc3_w": uinit(keys[8], (84, 10), 84),
        "fc3_b": uinit(keys[9], (10,), 84),
    }


if __name__ == "__main__":
    key = jax.random.PRNGKey(0)
    pkey, xkey = jax.random.split(key)
    params = init_params(pkey)
    prep = prepare_params(params)           # one-time host-side weight folding

    # dims[0] == 256 = 16*4*4 implies 28x28 inputs (LeNet on MNIST-sized images)
    x = jax.random.normal(xkey, (16, 1, 28, 28), jnp.float32)

    forward = jax.jit(model_forward)
    out = jax.block_until_ready(forward(x, prep))

    assert out.shape == (16, 10)
    assert bool(jnp.allclose(jnp.sum(out, axis=1), 1.0, atol=1e-3))
    ref = jax.block_until_ready(reference_forward(x, params))
    assert bool(jnp.allclose(out, ref, atol=1e-2)), float(jnp.max(jnp.abs(out - ref)))
    print("KERNEL_OK")
</pallas_src>

<mosaic_0001>
module attributes {stable_mosaic.version = 11 : i64} {
  func.func @_lenet_fused_kernel(%arg0: i32, %arg1: memref<8x4x7x28xf32, #tpu.memory_space<vmem>>, %arg2: memref<168x288xf32, #tpu.memory_space<vmem>>, %arg3: memref<1x288xf32, #tpu.memory_space<vmem>>, %arg4: memref<432x256xf32, #tpu.memory_space<vmem>>, %arg5: memref<1x256xf32, #tpu.memory_space<vmem>>, %arg6: memref<256x120xf32, #tpu.memory_space<vmem>>, %arg7: memref<1x120xf32, #tpu.memory_space<vmem>>, %arg8: memref<120x84xf32, #tpu.memory_space<vmem>>, %arg9: memref<1x84xf32, #tpu.memory_space<vmem>>, %arg10: memref<84x10xf32, #tpu.memory_space<vmem>>, %arg11: memref<1x10xf32, #tpu.memory_space<vmem>>, %arg12: memref<8x10xf32, #tpu.memory_space<vmem>>) attributes {dimension_semantics = [#tpu.dimension_semantics<parallel>], iteration_bounds = array<i64: 2>, scalar_prefetch = 0 : i64, scratch_operands = 0 : i64, tpu.core_type = #tpu.core_type<tc>, window_params = [{transform_indices = @transform_0, window_bounds = array<i64: 8, 4, 7, 28>}, {pipeline_mode = #tpu.pipeline_mode<synchronous>, transform_indices = @transform_1, window_bounds = array<i64: 168, 288>}, {pipeline_mode = #tpu.pipeline_mode<synchronous>, transform_indices = @transform_2, window_bounds = array<i64: 1, 288>}, {pipeline_mode = #tpu.pipeline_mode<synchronous>, transform_indices = @transform_3, window_bounds = array<i64: 432, 256>}, {pipeline_mode = #tpu.pipeline_mode<synchronous>, transform_indices = @transform_4, window_bounds = array<i64: 1, 256>}, {pipeline_mode = #tpu.pipeline_mode<synchronous>, transform_indices = @transform_5, window_bounds = array<i64: 256, 120>}, {pipeline_mode = #tpu.pipeline_mode<synchronous>, transform_indices = @transform_6, window_bounds = array<i64: 1, 120>}, {pipeline_mode = #tpu.pipeline_mode<synchronous>, transform_indices = @transform_7, window_bounds = array<i64: 120, 84>}, {pipeline_mode = #tpu.pipeline_mode<synchronous>, transform_indices = @transform_8, window_bounds = array<i64: 1, 84>}, {pipeline_mode = #tpu.pipeline_mode<synchronous>, transform_indices = @transform_9, window_bounds = array<i64: 84, 10>}, {pipeline_mode = #tpu.pipeline_mode<synchronous>, transform_indices = @transform_10, window_bounds = array<i64: 1, 10>}, {transform_indices = @transform_11, window_bounds = array<i64: 8, 10>}]} {
    %c0 = arith.constant 0 : index
    %c0_0 = arith.constant 0 : index
    %c0_1 = arith.constant 0 : index
    %c0_2 = arith.constant 0 : index
    %0 = vector.load %arg1[%c0, %c0_0, %c0_1, %c0_2] : memref<8x4x7x28xf32, #tpu.memory_space<vmem>>, vector<8x4x7x28xf32>
    %c0_3 = arith.constant 0 : index
    %c0_4 = arith.constant 0 : index
    %1 = vector.load %arg2[%c0_3, %c0_4] : memref<168x288xf32, #tpu.memory_space<vmem>>, vector<168x288xf32>
    %c0_5 = arith.constant 0 : index
    %c0_6 = arith.constant 0 : index
    %2 = vector.load %arg3[%c0_5, %c0_6] : memref<1x288xf32, #tpu.memory_space<vmem>>, vector<1x288xf32>
    %c0_7 = arith.constant 0 : index
    %c0_8 = arith.constant 0 : index
    %3 = vector.load %arg4[%c0_7, %c0_8] : memref<432x256xf32, #tpu.memory_space<vmem>>, vector<432x256xf32>
    %c0_9 = arith.constant 0 : index
    %c0_10 = arith.constant 0 : index
    %4 = vector.load %arg5[%c0_9, %c0_10] : memref<1x256xf32, #tpu.memory_space<vmem>>, vector<1x256xf32>
    %5 = vector.extract_strided_slice %0 {offsets = [0, 0, 0, 0], sizes = [8, 1, 6, 28], strides = [1, 1, 1, 1]} : vector<8x4x7x28xf32> to vector<8x1x6x28xf32>
    %6 = vector.shape_cast %5 : vector<8x1x6x28xf32> to vector<8x6x28xf32>
    %7 = vector.extract_strided_slice %0 {offsets = [0, 1, 0, 0], sizes = [8, 1, 6, 28], strides = [1, 1, 1, 1]} : vector<8x4x7x28xf32> to vector<8x1x6x28xf32>
    %8 = vector.shape_cast %7 : vector<8x1x6x28xf32> to vector<8x6x28xf32>
    %9 = vector.extract_strided_slice %0 {offsets = [0, 2, 0, 0], sizes = [8, 1, 6, 28], strides = [1, 1, 1, 1]} : vector<8x4x7x28xf32> to vector<8x1x6x28xf32>
    %10 = vector.shape_cast %9 : vector<8x1x6x28xf32> to vector<8x6x28xf32>
    %11 = vector.extract_strided_slice %0 {offsets = [0, 3, 0, 0], sizes = [8, 1, 6, 28], strides = [1, 1, 1, 1]} : vector<8x4x7x28xf32> to vector<8x1x6x28xf32>
    %12 = vector.shape_cast %11 : vector<8x1x6x28xf32> to vector<8x6x28xf32>
    %13 = vector.extract_strided_slice %0 {offsets = [0, 0, 1, 0], sizes = [8, 1, 6, 28], strides = [1, 1, 1, 1]} : vector<8x4x7x28xf32> to vector<8x1x6x28xf32>
    %14 = vector.shape_cast %13 : vector<8x1x6x28xf32> to vector<8x6x28xf32>
    %15 = vector.extract_strided_slice %0 {offsets = [0, 1, 1, 0], sizes = [8, 1, 6, 28], strides = [1, 1, 1, 1]} : vector<8x4x7x28xf32> to vector<8x1x6x28xf32>
    %16 = vector.shape_cast %15 : vector<8x1x6x28xf32> to vector<8x6x28xf32>
    %17 = tpu.concatenate %6, %8, %10, %12, %14, %16 in 2 : vector<8x6x28xf32>, vector<8x6x28xf32>, vector<8x6x28xf32>, vector<8x6x28xf32>, vector<8x6x28xf32>, vector<8x6x28xf32> -> vector<8x6x168xf32>
    %18 = vector.shape_cast %17 : vector<8x6x168xf32> to vector<48x168xf32>
    %cst = arith.constant dense<0.000000e+00> : vector<48x288xf32>
    %19 = tpu.matmul %18, %1, %cst {dimension_numbers = #tpu.dot_dimension_numbers<[1], [0], [0], [1], [0, 0, 1, 1], [], []>} : vector<48x168xf32>, vector<168x288xf32>, vector<48x288xf32> -> vector<48x288xf32>
    %20 = vector.broadcast %2 : vector<1x288xf32> to vector<48x288xf32>
    %21 = arith.addf %19, %20 : vector<48x288xf32>
    %cst_11 = arith.constant 0.000000e+00 : f32
    %22 = vector.broadcast %cst_11 : f32 to vector<48x288xf32>
    %23 = arith.maximumf %21, %22 : vector<48x288xf32>
    %24 = vector.extract_strided_slice %23 {offsets = [0, 0], sizes = [48, 72], strides = [1, 1]} : vector<48x288xf32> to vector<48x72xf32>
    %25 = vector.extract_strided_slice %23 {offsets = [0, 72], sizes = [48, 72], strides = [1, 1]} : vector<48x288xf32> to vector<48x72xf32>
    %26 = arith.maximumf %24, %25 : vector<48x72xf32>
    %27 = vector.extract_strided_slice %23 {offsets = [0, 144], sizes = [48, 72], strides = [1, 1]} : vector<48x288xf32> to vector<48x72xf32>
    %28 = vector.extract_strided_slice %23 {offsets = [0, 216], sizes = [48, 72], strides = [1, 1]} : vector<48x288xf32> to vector<48x72xf32>
    %29 = arith.maximumf %27, %28 : vector<48x72xf32>
    %30 = arith.maximumf %26, %29 : vector<48x72xf32>
    %31 = vector.shape_cast %30 : vector<48x72xf32> to vector<8x6x72xf32>
    %32 = vector.extract_strided_slice %0 {offsets = [0, 2, 0, 0], sizes = [8, 1, 6, 28], strides = [1, 1, 1, 1]} : vector<8x4x7x28xf32> to vector<8x1x6x28xf32>
    %33 = vector.shape_cast %32 : vector<8x1x6x28xf32> to vector<8x6x28xf32>
    %34 = vector.extract_strided_slice %0 {offsets = [0, 3, 0, 0], sizes = [8, 1, 6, 28], strides = [1, 1, 1, 1]} : vector<8x4x7x28xf32> to vector<8x1x6x28xf32>
    %35 = vector.shape_cast %34 : vector<8x1x6x28xf32> to vector<8x6x28xf32>
    %36 = vector.extract_strided_slice %0 {offsets = [0, 0, 1, 0], sizes = [8, 1, 6, 28], strides = [1, 1, 1, 1]} : vector<8x4x7x28xf32> to vector<8x1x6x28xf32>
    %37 = vector.shape_cast %36 : vector<8x1x6x28xf32> to vector<8x6x28xf32>
    %38 = vector.extract_strided_slice %0 {offsets = [0, 1, 1, 0], sizes = [8, 1, 6, 28], strides = [1, 1, 1, 1]} : vector<8x4x7x28xf32> to vector<8x1x6x28xf32>
    %39 = vector.shape_cast %38 : vector<8x1x6x28xf32> to vector<8x6x28xf32>
    %40 = vector.extract_strided_slice %0 {offsets = [0, 2, 1, 0], sizes = [8, 1, 6, 28], strides = [1, 1, 1, 1]} : vector<8x4x7x28xf32> to vector<8x1x6x28xf32>
    %41 = vector.shape_cast %40 : vector<8x1x6x28xf32> to vector<8x6x28xf32>
    %42 = vector.extract_strided_slice %0 {offsets = [0, 3, 1, 0], sizes = [8, 1, 6, 28], strides = [1, 1, 1, 1]} : vector<8x4x7x28xf32> to vector<8x1x6x28xf32>
    %43 = vector.shape_cast %42 : vector<8x1x6x28xf32> to vector<8x6x28xf32>
    %44 = tpu.concatenate %33, %35, %37, %39, %41, %43 in 2 : vector<8x6x28xf32>, vector<8x6x28xf32>, vector<8x6x28xf32>, vector<8x6x28xf32>, vector<8x6x28xf32>, vector<8x6x28xf32> -> vector<8x6x168xf32>
    %45 = vector.shape_cast %44 : vector<8x6x168xf32> to vector<48x168xf32>
    %cst_12 = arith.constant dense<0.000000e+00> : vector<48x288xf32>
    %46 = tpu.matmul %45, %1, %cst_12 {dimension_numbers = #tpu.dot_dimension_numbers<[1], [0], [0], [1], [0, 0, 1, 1], [], []>} : vector<48x168xf32>, vector<168x288xf32>, vector<48x288xf32> -> vector<48x288xf32>
    %47 = vector.broadcast %2 : vector<1x288xf32> to vector<48x288xf32>
    %48 = arith.addf %46, %47 : vector<48x288xf32>
    %cst_13 = arith.constant 0.000000e+00 : f32
    %49 = vector.broadcast %cst_13 : f32 to vector<48x288xf32>
    %50 = arith.maximumf %48, %49 : vector<48x288xf32>
    %51 = vector.extract_strided_slice %50 {offsets = [0, 0], sizes = [48, 72], strides = [1, 1]} : vector<48x288xf32> to vector<48x72xf32>
    %52 = vector.extract_strided_slice %50 {offsets = [0, 72], sizes = [48, 72], strides = [1, 1]} : vector<48x288xf32> to vector<48x72xf32>
    %53 = arith.maximumf %51, %52 : vector<48x72xf32>
    %54 = vector.extract_strided_slice %50 {offsets = [0, 144], sizes = [48, 72], strides = [1, 1]} : vector<48x288xf32> to vector<48x72xf32>
    %55 = vector.extract_strided_slice %50 {offsets = [0, 216], sizes = [48, 72], strides = [1, 1]} : vector<48x288xf32> to vector<48x72xf32>
    %56 = arith.maximumf %54, %55 : vector<48x72xf32>
    %57 = arith.maximumf %53, %56 : vector<48x72xf32>
    %58 = vector.shape_cast %57 : vector<48x72xf32> to vector<8x6x72xf32>
    %59 = vector.extract_strided_slice %31 {offsets = [0, 0, 0], sizes = [8, 4, 72], strides = [1, 1, 1]} : vector<8x6x72xf32> to vector<8x4x72xf32>
    %60 = vector.extract_strided_slice %58 {offsets = [0, 0, 0], sizes = [8, 4, 72], strides = [1, 1, 1]} : vector<8x6x72xf32> to vector<8x4x72xf32>
    %61 = vector.extract_strided_slice %31 {offsets = [0, 1, 0], sizes = [8, 4, 72], strides = [1, 1, 1]} : vector<8x6x72xf32> to vector<8x4x72xf32>
    %62 = vector.extract_strided_slice %58 {offsets = [0, 1, 0], sizes = [8, 4, 72], strides = [1, 1, 1]} : vector<8x6x72xf32> to vector<8x4x72xf32>
    %63 = vector.extract_strided_slice %31 {offsets = [0, 2, 0], sizes = [8, 4, 72], strides = [1, 1, 1]} : vector<8x6x72xf32> to vector<8x4x72xf32>
    %64 = vector.extract_strided_slice %58 {offsets = [0, 2, 0], sizes = [8, 4, 72], strides = [1, 1, 1]} : vector<8x6x72xf32> to vector<8x4x72xf32>
    %65 = tpu.concatenate %59, %60, %61, %62, %63, %64 in 2 : vector<8x4x72xf32>, vector<8x4x72xf32>, vector<8x4x72xf32>, vector<8x4x72xf32>, vector<8x4x72xf32>, vector<8x4x72xf32> -> vector<8x4x432xf32>
    %66 = vector.shape_cast %65 : vector<8x4x432xf32> to vector<32x432xf32>
    %cst_14 = arith.constant dense<0.000000e+00> : vector<32x256xf32>
    %67 = tpu.matmul %66, %3, %cst_14 {dimension_numbers = #tpu.dot_dimension_numbers<[1], [0], [0], [1], [0, 0, 1, 1], [], []>} : vector<32x432xf32>, vector<432x256xf32>, vector<32x256xf32> -> vector<32x256xf32>
    %68 = vector.broadcast %4 : vector<1x256xf32> to vector<32x256xf32>
    %69 = arith.addf %67, %68 : vector<32x256xf32>
    %cst_15 = arith.constant 0.000000e+00 : f32
    %70 = vector.broadcast %cst_15 : f32 to vector<32x256xf32>
    %71 = arith.maximumf %69, %70 : vector<32x256xf32>
    %72 = vector.extract_strided_slice %71 {offsets = [0, 0], sizes = [32, 64], strides = [1, 1]} : vector<32x256xf32> to vector<32x64xf32>
    %73 = vector.extract_strided_slice %71 {offsets = [0, 64], sizes = [32, 64], strides = [1, 1]} : vector<32x256xf32> to vector<32x64xf32>
    %74 = arith.maximumf %72, %73 : vector<32x64xf32>
    %75 = vector.extract_strided_slice %71 {offsets = [0, 128], sizes = [32, 64], strides = [1, 1]} : vector<32x256xf32> to vector<32x64xf32>
    %76 = vector.extract_strided_slice %71 {offsets = [0, 192], sizes = [32, 64], strides = [1, 1]} : vector<32x256xf32> to vector<32x64xf32>
    %77 = arith.maximumf %75, %76 : vector<32x64xf32>
    %78 = arith.maximumf %74, %77 : vector<32x64xf32>
    %79 = vector.shape_cast %78 : vector<32x64xf32> to vector<8x4x64xf32>
    %c0_16 = arith.constant 0 : index
    %c0_17 = arith.constant 0 : index
    %80 = vector.load %arg6[%c0_16, %c0_17] : memref<256x120xf32, #tpu.memory_space<vmem>>, vector<256x120xf32>
    %c0_18 = arith.constant 0 : index
    %c0_19 = arith.constant 0 : index
    %81 = vector.load %arg7[%c0_18, %c0_19] : memref<1x120xf32, #tpu.memory_space<vmem>>, vector<1x120xf32>
    %82 = vector.extract_strided_slice %79 {offsets = [0, 0, 0], sizes = [8, 1, 64], strides = [1, 1, 1]} : vector<8x4x64xf32> to vector<8x1x64xf32>
    %83 = vector.shape_cast %82 : vector<8x1x64xf32> to vector<8x64xf32>
    %84 = vector.extract_strided_slice %80 {offsets = [0, 0], sizes = [64, 120], strides = [1, 1]} : vector<256x120xf32> to vector<64x120xf32>
    %cst_20 = arith.constant dense<0.000000e+00> : vector<8x120xf32>
    %85 = tpu.matmul %83, %84, %cst_20 {dimension_numbers = #tpu.dot_dimension_numbers<[1], [0], [0], [1], [0, 0, 1, 1], [], []>} : vector<8x64xf32>, vector<64x120xf32>, vector<8x120xf32> -> vector<8x120xf32>
    %86 = vector.broadcast %81 : vector<1x120xf32> to vector<8x120xf32>
    %87 = arith.addf %86, %85 : vector<8x120xf32>
    %88 = vector.extract_strided_slice %79 {offsets = [0, 1, 0], sizes = [8, 1, 64], strides = [1, 1, 1]} : vector<8x4x64xf32> to vector<8x1x64xf32>
    %89 = vector.shape_cast %88 : vector<8x1x64xf32> to vector<8x64xf32>
    %90 = vector.extract_strided_slice %80 {offsets = [64, 0], sizes = [64, 120], strides = [1, 1]} : vector<256x120xf32> to vector<64x120xf32>
    %cst_21 = arith.constant dense<0.000000e+00> : vector<8x120xf32>
    %91 = tpu.matmul %89, %90, %cst_21 {dimension_numbers = #tpu.dot_dimension_numbers<[1], [0], [0], [1], [0, 0, 1, 1], [], []>} : vector<8x64xf32>, vector<64x120xf32>, vector<8x120xf32> -> vector<8x120xf32>
    %92 = arith.addf %87, %91 : vector<8x120xf32>
    %93 = vector.extract_strided_slice %79 {offsets = [0, 2, 0], sizes = [8, 1, 64], strides = [1, 1, 1]} : vector<8x4x64xf32> to vector<8x1x64xf32>
    %94 = vector.shape_cast %93 : vector<8x1x64xf32> to vector<8x64xf32>
    %95 = vector.extract_strided_slice %80 {offsets = [128, 0], sizes = [64, 120], strides = [1, 1]} : vector<256x120xf32> to vector<64x120xf32>
    %cst_22 = arith.constant dense<0.000000e+00> : vector<8x120xf32>
    %96 = tpu.matmul %94, %95, %cst_22 {dimension_numbers = #tpu.dot_dimension_numbers<[1], [0], [0], [1], [0, 0, 1, 1], [], []>} : vector<8x64xf32>, vector<64x120xf32>, vector<8x120xf32> -> vector<8x120xf32>
    %97 = arith.addf %92, %96 : vector<8x120xf32>
    %98 = vector.extract_strided_slice %79 {offsets = [0, 3, 0], sizes = [8, 1, 64], strides = [1, 1, 1]} : vector<8x4x64xf32> to vector<8x1x64xf32>
    %99 = vector.shape_cast %98 : vector<8x1x64xf32> to vector<8x64xf32>
    %100 = vector.extract_strided_slice %80 {offsets = [192, 0], sizes = [64, 120], strides = [1, 1]} : vector<256x120xf32> to vector<64x120xf32>
    %cst_23 = arith.constant dense<0.000000e+00> : vector<8x120xf32>
    %101 = tpu.matmul %99, %100, %cst_23 {dimension_numbers = #tpu.dot_dimension_numbers<[1], [0], [0], [1], [0, 0, 1, 1], [], []>} : vector<8x64xf32>, vector<64x120xf32>, vector<8x120xf32> -> vector<8x120xf32>
    %102 = arith.addf %97, %101 : vector<8x120xf32>
    %c0_24 = arith.constant 0 : index
    %c0_25 = arith.constant 0 : index
    %103 = vector.load %arg8[%c0_24, %c0_25] : memref<120x84xf32, #tpu.memory_space<vmem>>, vector<120x84xf32>
    %cst_26 = arith.constant dense<0.000000e+00> : vector<8x84xf32>
    %104 = tpu.matmul %102, %103, %cst_26 {dimension_numbers = #tpu.dot_dimension_numbers<[1], [0], [0], [1], [0, 0, 1, 1], [], []>} : vector<8x120xf32>, vector<120x84xf32>, vector<8x84xf32> -> vector<8x84xf32>
    %c0_27 = arith.constant 0 : index
    %c0_28 = arith.constant 0 : index
    %105 = vector.load %arg9[%c0_27, %c0_28] : memref<1x84xf32, #tpu.memory_space<vmem>>, vector<1x84xf32>
    %106 = vector.broadcast %105 : vector<1x84xf32> to vector<8x84xf32>
    %107 = arith.addf %104, %106 : vector<8x84xf32>
    %c0_29 = arith.constant 0 : index
    %c0_30 = arith.constant 0 : index
    %108 = vector.load %arg10[%c0_29, %c0_30] : memref<84x10xf32, #tpu.memory_space<vmem>>, vector<84x10xf32>
    %cst_31 = arith.constant dense<0.000000e+00> : vector<8x10xf32>
    %109 = tpu.matmul %107, %108, %cst_31 {dimension_numbers = #tpu.dot_dimension_numbers<[1], [0], [0], [1], [0, 0, 1, 1], [], []>} : vector<8x84xf32>, vector<84x10xf32>, vector<8x10xf32> -> vector<8x10xf32>
    %c0_32 = arith.constant 0 : index
    %c0_33 = arith.constant 0 : index
    %110 = vector.load %arg11[%c0_32, %c0_33] : memref<1x10xf32, #tpu.memory_space<vmem>>, vector<1x10xf32>
    %111 = vector.broadcast %110 : vector<1x10xf32> to vector<8x10xf32>
    %112 = arith.addf %109, %111 : vector<8x10xf32>
    %cst_34 = arith.constant dense<0xFF800000> : vector<8xf32>
    %113 = vector.multi_reduction <maximumf>, %112, %cst_34 [1] : vector<8x10xf32> to vector<8xf32>
    %114 = vector.shape_cast %113 : vector<8xf32> to vector<8x1xf32>
    %115 = vector.broadcast %114 : vector<8x1xf32> to vector<8x10xf32>
    %116 = arith.subf %112, %115 : vector<8x10xf32>
    %117 = math.exp %116 : vector<8x10xf32>
    %cst_35 = arith.constant dense<0.000000e+00> : vector<8xf32>
    %118 = vector.multi_reduction <add>, %117, %cst_35 [1] : vector<8x10xf32> to vector<8xf32>
    %119 = vector.shape_cast %118 : vector<8xf32> to vector<8x1xf32>
    %120 = vector.broadcast %119 : vector<8x1xf32> to vector<8x10xf32>
    %121 = arith.divf %117, %120 : vector<8x10xf32>
    %c0_36 = arith.constant 0 : index
    %c0_37 = arith.constant 0 : index
    %122 = vector.load %arg12[%c0_36, %c0_37] : memref<8x10xf32, #tpu.memory_space<vmem>>, vector<8x10xf32>
    tpu.vector_store %arg12[%c0_36, %c0_37], %121 {strides = array<i32>} : memref<8x10xf32, #tpu.memory_space<vmem>>, vector<8x10xf32>,
    return
  }
  func.func @transform_0(%arg0: i32) -> (i32, i32, i32, i32) {
    %c0_i32 = arith.constant 0 : i32
    %c0_i32_0 = arith.constant 0 : i32
    %c0_i32_1 = arith.constant 0 : i32
    %c0_i32_2 = arith.constant 0 : i32
    return %arg0, %c0_i32, %c0_i32_0, %c0_i32_1 : i32, i32, i32, i32
  }
  func.func @transform_1(%arg0: i32) -> (i32, i32) {
    %c0_i32 = arith.constant 0 : i32
    %c0_i32_0 = arith.constant 0 : i32
    %c0_i32_1 = arith.constant 0 : i32
    return %c0_i32, %c0_i32_0 : i32, i32
  }
  func.func @transform_2(%arg0: i32) -> (i32, i32) {
    %c0_i32 = arith.constant 0 : i32
    %c0_i32_0 = arith.constant 0 : i32
    %c0_i32_1 = arith.constant 0 : i32
    return %c0_i32, %c0_i32_0 : i32, i32
  }
  func.func @transform_3(%arg0: i32) -> (i32, i32) {
    %c0_i32 = arith.constant 0 : i32
    %c0_i32_0 = arith.constant 0 : i32
    %c0_i32_1 = arith.constant 0 : i32
    return %c0_i32, %c0_i32_0 : i32, i32
  }
  func.func @transform_4(%arg0: i32) -> (i32, i32) {
    %c0_i32 = arith.constant 0 : i32
    %c0_i32_0 = arith.constant 0 : i32
    %c0_i32_1 = arith.constant 0 : i32
    return %c0_i32, %c0_i32_0 : i32, i32
  }
  func.func @transform_5(%arg0: i32) -> (i32, i32) {
    %c0_i32 = arith.constant 0 : i32
    %c0_i32_0 = arith.constant 0 : i32
    %c0_i32_1 = arith.constant 0 : i32
    return %c0_i32, %c0_i32_0 : i32, i32
  }
  func.func @transform_6(%arg0: i32) -> (i32, i32) {
    %c0_i32 = arith.constant 0 : i32
    %c0_i32_0 = arith.constant 0 : i32
    %c0_i32_1 = arith.constant 0 : i32
    return %c0_i32, %c0_i32_0 : i32, i32
  }
  func.func @transform_7(%arg0: i32) -> (i32, i32) {
    %c0_i32 = arith.constant 0 : i32
    %c0_i32_0 = arith.constant 0 : i32
    %c0_i32_1 = arith.constant 0 : i32
    return %c0_i32, %c0_i32_0 : i32, i32
  }
  func.func @transform_8(%arg0: i32) -> (i32, i32) {
    %c0_i32 = arith.constant 0 : i32
    %c0_i32_0 = arith.constant 0 : i32
    %c0_i32_1 = arith.constant 0 : i32
    return %c0_i32, %c0_i32_0 : i32, i32
  }
  func.func @transform_9(%arg0: i32) -> (i32, i32) {
    %c0_i32 = arith.constant 0 : i32
    %c0_i32_0 = arith.constant 0 : i32
    %c0_i32_1 = arith.constant 0 : i32
    return %c0_i32, %c0_i32_0 : i32, i32
  }
  func.func @transform_10(%arg0: i32) -> (i32, i32) {
    %c0_i32 = arith.constant 0 : i32
    %c0_i32_0 = arith.constant 0 : i32
    %c0_i32_1 = arith.constant 0 : i32
    return %c0_i32, %c0_i32_0 : i32, i32
  }
  func.func @transform_11(%arg0: i32) -> (i32, i32) {
    %c0_i32 = arith.constant 0 : i32
    %c0_i32_0 = arith.constant 0 : i32
    return %arg0, %c0_i32 : i32, i32
  }
}

</mosaic_0001>

<llo_original>
// kernel: model_forward.1
$region0: #{model_forward.1}
  #allocation0 [shape = 'u32[]', space=smem, size = 0x4, offset = 0x4, fixed_abs, tag = 'smem constant byte address 0x4 - core index']
  #allocation1 [shape = 'u32[144,128]{1,0:T(1,128)}', space=vmem, size = 0x12000, scoped, tag = 'internal scratch']
  %s0 = inlined_call_operand.vmem [shape: f32[16,4,7,28], index: 0, kind: input, shape index: {}]
  %s1 = inlined_call_operand.vmem [shape: f32[168,288], index: 1, kind: input, shape index: {}]
  %s2 = inlined_call_operand.vmem [shape: f32[1,288], index: 2, kind: input, shape index: {}]
  %s3 = inlined_call_operand.vmem [shape: f32[432,256], index: 3, kind: input, shape index: {}]
  %s4 = inlined_call_operand.vmem [shape: f32[1,256], index: 4, kind: input, shape index: {}]
  %s5 = inlined_call_operand.vmem [shape: f32[256,120], index: 5, kind: input, shape index: {}]
  %s6 = inlined_call_operand.vmem [shape: f32[1,120], index: 6, kind: input, shape index: {}]
  %s7 = inlined_call_operand.vmem [shape: f32[120,84], index: 7, kind: input, shape index: {}]
  %s8 = inlined_call_operand.vmem [shape: f32[1,84], index: 8, kind: input, shape index: {}]
  %s9 = inlined_call_operand.vmem [shape: f32[84,10], index: 9, kind: input, shape index: {}]
  %s10 = inlined_call_operand.vmem [shape: f32[1,10], index: 10, kind: input, shape index: {}]
  %s11 = inlined_call_operand.hbm [shape: f32[16,10], index: 11, kind: output, shape index: {}]
  %s12 = sld [smem:[#allocation0]]
  $region77: #{model_forward.1} parent=0
    _
  %s14 = ssub.s32 1, %s12
  %s15 = scalar_select 0, %s14, %s12
  $region1: #{model_forward.1} parent=0
    #allocation2 [shape = 'u8[8192]{0}', space=vmem, size = 0x2000, scoped, tag = 'output window, operand 0']
    #allocation3 [shape = 's32[2]{0}', space=sflag, size = 0x8, scoped, tag = 'scoped memory for model_forward.1']
    %16 = vsyncpa [#allocation3], 0
    %s17 = scalar_lea.sflag [#allocation3], 1
    %18 = vsyncpa %s17, 0
    loop: start=0, step=1, limit=4
    $region2: #{model_forward.1} parent=1 // loop_pre_header
      _
    $region3: #{model_forward.1} parent=1 // loop_header
      %s20 = sphi 0, %s24
      %p21 = scmp.ge.s32.totalorder %s20, 4
      %s30 = sphi 0, %s32
      %s33 = sphi 0, %s30
      %s34 = sphi 0, %s33
      %s50 = sphi 0, %s34
      %s54 = sphi 0, %s54
      %s56 = sphi 0, %s54
      %s57 = sphi 0, %s56
      %s71 = sphi 0, %s57
      %s75 = sphi 0, %s75
      %s77 = sphi 0, %s75
      %s78 = sphi 0, %s77
      %s92 = sphi 0, %s78
      %s96 = sphi 0, %s96
      %s98 = sphi 0, %s96
      %s99 = sphi 0, %s98
      %s113 = sphi 0, %s99
      %s117 = sphi 0, %s117
      %s119 = sphi 0, %s117
      %s120 = sphi 0, %s119
      %s134 = sphi 0, %s120
      %s138 = sphi 0, %s138
      %s140 = sphi 0, %s138
      %s141 = sphi 0, %s140
      %s155 = sphi 0, %s141
      %s159 = sphi 0, %s159
      %s161 = sphi 0, %s159
      %s162 = sphi 0, %s161
      %s176 = sphi 0, %s162
      %s180 = sphi 0, %s180
      %s182 = sphi 0, %s180
      %s183 = sphi 0, %s182
      %s197 = sphi 0, %s183
      %s201 = sphi 0, %s201
      %s203 = sphi 0, %s201
      %s204 = sphi 0, %s203
      %s218 = sphi 0, %s204
      %s222 = sphi 0, %s222
      %s224 = sphi 0, %s222
      %s225 = sphi 0, %s224
      %s239 = sphi 0, %s225
      %s243 = sphi 0, %s243
      %s245 = sphi 0, %s243
      %s246 = sphi 0, %s245
      %s260 = sphi 0, %s246
      %s266 = sphi 0, %s268
      %s269 = sphi 0, %s266
      %s270 = sphi 0, %s269
      %s286 = sphi 0, %s270
    $region4: #{model_forward.1} parent=1 // loop_header_branch
      %23 = sbr.rel (%p21) target = $region8
    $region5: #{model_forward.1} parent=1 // loop_body
      %s25 = ssub.s32 %s20, 1
      %s26 = ssub.s32 %s20, 2
      %s27 = sadd.s32 %s20, 1
      %s28 = ssub.s32 %s20, %s27
      %p29 = scmp.eq.s32.totalorder %s28, 0
      %s31 = sadd.s32 %s30, 1
      %s32 = scalar_select %p29, %s30, %s31
      %p35 = pneg %p29
      %p36 = scmp.eq.s32.totalorder %s20, 1
      %p37 = por %p35, %p36
      %p38 = scmp.ne.s32.totalorder %s30, %s33
      %p39 = scmp.eq.s32.totalorder %s20, 0
      %p40 = por %p38, %p39
      %p41 = scmp.ne.s32.totalorder %s30, %s33
      %p42 = scmp.eq.s32.totalorder %s25, 1
      %p43 = por %p41, %p42
      %p44 = scmp.ne.s32.totalorder %s33, %s34
      %p45 = scmp.eq.s32.totalorder %s25, 0
      %p46 = por %p44, %p45
      %p47 = scmp.ne.s32.totalorder %s33, %s34
      %p48 = scmp.eq.s32.totalorder %s26, 1
      %p49 = por %p47, %p48
      %p51 = scmp.ne.s32.totalorder %s34, %s50
      %p52 = scmp.eq.s32.totalorder %s26, 0
      %p53 = por %p51, %p52
      %s55 = sadd.s32 %s54, 1
      %p58 = scmp.eq.s32.totalorder %s20, 1
      %p59 = scmp.ne.s32.totalorder %s54, %s56
      %p60 = scmp.eq.s32.totalorder %s20, 0
      %p61 = por %p59, %p60
      %p62 = scmp.ne.s32.totalorder %s54, %s56
      %p63 = scmp.eq.s32.totalorder %s25, 1
      %p64 = por %p62, %p63
      %p65 = scmp.ne.s32.totalorder %s56, %s57
      %p66 = scmp.eq.s32.totalorder %s25, 0
      %p67 = por %p65, %p66
      %p68 = scmp.ne.s32.totalorder %s56, %s57
      %p69 = scmp.eq.s32.totalorder %s26, 1
      %p70 = por %p68, %p69
      %p72 = scmp.ne.s32.totalorder %s57, %s71
      %p73 = scmp.eq.s32.totalorder %s26, 0
      %p74 = por %p72, %p73
      %s76 = sadd.s32 %s75, 1
      %p79 = scmp.eq.s32.totalorder %s20, 1
      %p80 = scmp.ne.s32.totalorder %s75, %s77
      %p81 = scmp.eq.s32.totalorder %s20, 0
      %p82 = por %p80, %p81
      %p83 = scmp.ne.s32.totalorder %s75, %s77
      %p84 = scmp.eq.s32.totalorder %s25, 1
      %p85 = por %p83, %p84
      %p86 = scmp.ne.s32.totalorder %s77, %s78
      %p87 = scmp.eq.s32.totalorder %s25, 0
      %p88 = por %p86, %p87
      %p89 = scmp.ne.s32.totalorder %s77, %s78
      %p90 = scmp.eq.s32.totalorder %s26, 1
      %p91 = por %p89, %p90
      %p93 = scmp.ne.s32.totalorder %s78, %s92
      %p94 = scmp.eq.s32.totalorder %s26, 0
      %p95 = por %p93, %p94
      %s97 = sadd.s32 %s96, 1
      %p100 = scmp.eq.s32.totalorder %s20, 1
      %p101 = scmp.ne.s32.totalorder %s96, %s98
      %p102 = scmp.eq.s32.totalorder %s20, 0
      %p103 = por %p101, %p102
      %p104 = scmp.ne.s32.totalorder %s96, %s98
      %p105 = scmp.eq.s32.totalorder %s25, 1
      %p106 = por %p104, %p105
      %p107 = scmp.ne.s32.totalorder %s98, %s99
      %p108 = scmp.eq.s32.totalorder %s25, 0
      %p109 = por %p107, %p108
      %p110 = scmp.ne.s32.totalorder %s98, %s99
      %p111 = scmp.eq.s32.totalorder %s26, 1
      %p112 = por %p110, %p111
      %p114 = scmp.ne.s32.totalorder %s99, %s113
      %p115 = scmp.eq.s32.totalorder %s26, 0
      %p116 = por %p114, %p115
      %s118 = sadd.s32 %s117, 1
      %p121 = scmp.eq.s32.totalorder %s20, 1
      %p122 = scmp.ne.s32.totalorder %s117, %s119
      %p123 = scmp.eq.s32.totalorder %s20, 0
      %p124 = por %p122, %p123
      %p125 = scmp.ne.s32.totalorder %s117, %s119
      %p126 = scmp.eq.s32.totalorder %s25, 1
      %p127 = por %p125, %p126
      %p128 = scmp.ne.s32.totalorder %s119, %s120
      %p129 = scmp.eq.s32.totalorder %s25, 0
      %p130 = por %p128, %p129
      %p131 = scmp.ne.s32.totalorder %s119, %s120
      %p132 = scmp.eq.s32.totalorder %s26, 1
      %p133 = por %p131, %p132
      %p135 = scmp.ne.s32.totalorder %s120, %s134
      %p136 = scmp.eq.s32.totalorder %s26, 0
      %p137 = por %p135, %p136
      %s139 = sadd.s32 %s138, 1
      %p142 = scmp.eq.s32.totalorder %s20, 1
      %p143 = scmp.ne.s32.totalorder %s138, %s140
      %p144 = scmp.eq.s32.totalorder %s20, 0
      %p145 = por %p143, %p144
      %p146 = scmp.ne.s32.totalorder %s138, %s140
      %p147 = scmp.eq.s32.totalorder %s25, 1
      %p148 = por %p146, %p147
      %p149 = scmp.ne.s32.totalorder %s140, %s141
      %p150 = scmp.eq.s32.totalorder %s25, 0
      %p151 = por %p149, %p150
      %p152 = scmp.ne.s32.totalorder %s140, %s141
      %p153 = scmp.eq.s32.totalorder %s26, 1
      %p154 = por %p152, %p153
      %p156 = scmp.ne.s32.totalorder %s141, %s155
      %p157 = scmp.eq.s32.totalorder %s26, 0
      %p158 = por %p156, %p157
      %s160 = sadd.s32 %s159, 1
      %p163 = scmp.eq.s32.totalorder %s20, 1
      %p164 = scmp.ne.s32.totalorder %s159, %s161
      %p165 = scmp.eq.s32.totalorder %s20, 0
      %p166 = por %p164, %p165
      %p167 = scmp.ne.s32.totalorder %s159, %s161
      %p168 = scmp.eq.s32.totalorder %s25, 1
      %p169 = por %p167, %p168
      %p170 = scmp.ne.s32.totalorder %s161, %s162
      %p171 = scmp.eq.s32.totalorder %s25, 0
      %p172 = por %p170, %p171
      %p173 = scmp.ne.s32.totalorder %s161, %s162
      %p174 = scmp.eq.s32.totalorder %s26, 1
      %p175 = por %p173, %p174
      %p177 = scmp.ne.s32.totalorder %s162, %s176
      %p178 = scmp.eq.s32.totalorder %s26, 0
      %p179 = por %p177, %p178
      %s181 = sadd.s32 %s180, 1
      %p184 = scmp.eq.s32.totalorder %s20, 1
      %p185 = scmp.ne.s32.totalorder %s180, %s182
      %p186 = scmp.eq.s32.totalorder %s20, 0
      %p187 = por %p185, %p186
      %p188 = scmp.ne.s32.totalorder %s180, %s182
      %p189 = scmp.eq.s32.totalorder %s25, 1
      %p190 = por %p188, %p189
      %p191 = scmp.ne.s32.totalorder %s182, %s183
      %p192 = scmp.eq.s32.totalorder %s25, 0
      %p193 = por %p191, %p192
      %p194 = scmp.ne.s32.totalorder %s182, %s183
      %p195 = scmp.eq.s32.totalorder %s26, 1
      %p196 = por %p194, %p195
      %p198 = scmp.ne.s32.totalorder %s183, %s197
      %p199 = scmp.eq.s32.totalorder %s26, 0
      %p200 = por %p198, %p199
      %s202 = sadd.s32 %s201, 1
      %p205 = scmp.eq.s32.totalorder %s20, 1
      %p206 = scmp.ne.s32.totalorder %s201, %s203
      %p207 = scmp.eq.s32.totalorder %s20, 0
      %p208 = por %p206, %p207
      %p209 = scmp.ne.s32.totalorder %s201, %s203
      %p210 = scmp.eq.s32.totalorder %s25, 1
      %p211 = por %p209, %p210
      %p212 = scmp.ne.s32.totalorder %s203, %s204
      %p213 = scmp.eq.s32.totalorder %s25, 0
      %p214 = por %p212, %p213
      %p215 = scmp.ne.s32.totalorder %s203, %s204
      %p216 = scmp.eq.s32.totalorder %s26, 1
      %p217 = por %p215, %p216
      %p219 = scmp.ne.s32.totalorder %s204, %s218
      %p220 = scmp.eq.s32.totalorder %s26, 0
      %p221 = por %p219, %p220
      %s223 = sadd.s32 %s222, 1
      %p226 = scmp.eq.s32.totalorder %s20, 1
      %p227 = scmp.ne.s32.totalorder %s222, %s224
      %p228 = scmp.eq.s32.totalorder %s20, 0
      %p229 = por %p227, %p228
      %p230 = scmp.ne.s32.totalorder %s222, %s224
      %p231 = scmp.eq.s32.totalorder %s25, 1
      %p232 = por %p230, %p231
      %p233 = scmp.ne.s32.totalorder %s224, %s225
      %p234 = scmp.eq.s32.totalorder %s25, 0
      %p235 = por %p233, %p234
      %p236 = scmp.ne.s32.totalorder %s224, %s225
      %p237 = scmp.eq.s32.totalorder %s26, 1
      %p238 = por %p236, %p237
      %p240 = scmp.ne.s32.totalorder %s225, %s239
      %p241 = scmp.eq.s32.totalorder %s26, 0
      %p242 = por %p240, %p241
      %s244 = sadd.s32 %s243, 1
      %p247 = scmp.eq.s32.totalorder %s20, 1
      %p248 = scmp.ne.s32.totalorder %s243, %s245
      %p249 = scmp.eq.s32.totalorder %s20, 0
      %p250 = por %p248, %p249
      %p251 = scmp.ne.s32.totalorder %s243, %s245
      %p252 = scmp.eq.s32.totalorder %s25, 1
      %p253 = por %p251, %p252
      %p254 = scmp.ne.s32.totalorder %s245, %s246
      %p255 = scmp.eq.s32.totalorder %s25, 0
      %p256 = por %p254, %p255
      %p257 = scmp.ne.s32.totalorder %s245, %s246
      %p258 = scmp.eq.s32.totalorder %s26, 1
      %p259 = por %p257, %p258
      %p261 = scmp.ne.s32.totalorder %s246, %s260
      %p262 = scmp.eq.s32.totalorder %s26, 0
      %p263 = por %p261, %p262
      %s264 = ssub.s32 %s20, %s27
      %p265 = scmp.eq.s32.totalorder %s264, 0
      %s267 = sadd.s32 %s266, 1
      %s268 = scalar_select %p265, %s266, %s267
      %p271 = pneg %p265
      %p272 = scmp.eq.s32.totalorder %s20, 1
      %p273 = por %p271, %p272
      %p274 = scmp.ne.s32.totalorder %s266, %s269
      %p275 = scmp.eq.s32.totalorder %s20, 0
      %p276 = por %p274, %p275
      %p277 = scmp.ne.s32.totalorder %s266, %s269
      %p278 = scmp.eq.s32.totalorder %s25, 1
      %p279 = por %p277, %p278
      %p280 = scmp.ne.s32.totalorder %s269, %s270
      %p281 = scmp.eq.s32.totalorder %s25, 0
      %p282 = por %p280, %p281
      %p283 = scmp.ne.s32.totalorder %s269, %s270
      %p284 = scmp.eq.s32.totalorder %s26, 1
      %p285 = por %p283, %p284
      %p287 = scmp.ne.s32.totalorder %s270, %s286
      %p288 = scmp.eq.s32.totalorder %s26, 0
      %p289 = por %p287, %p288
      %p290 = scmp.le.s32.totalorder 1, %s20
      %p291 = scmp.lt.s32.totalorder %s20, 3
      %p292 = pnand %p290, %p291
      %p293 = pneg %p292
      // Predicated region
      $region9: #{model_forward.1} parent=5 // pred_check
        _
      $region10: #{model_forward.1} parent=5 // pred_check_branch
        %295 = sbr.rel (%p292) target = $region12
      $region11: #{model_forward.1} parent=5 // pred_region
        %s296 = ssub.s32 %s20, 1
        // Predicated region
        $region13: #{model_forward.1} parent=11 // pred_check
          %p297 = pneg %p67
        $region14: #{model_forward.1} parent=11 // pred_check_branch
          %299 = sbr.rel (%p297) target = $region16
        $region15: #{model_forward.1} parent=11 // pred_region
          _
        $region16: #{model_forward.1} parent=11 // pred_fallthru
          _
        // Predicated region
        $region17: #{model_forward.1} parent=11 // pred_check
          %p300 = pneg %p88
        $region18: #{model_forward.1} parent=11 // pred_check_branch
          %302 = sbr.rel (%p300) target = $region20
        $region19: #{model_forward.1} parent=11 // pred_region
          _
        $region20: #{model_forward.1} parent=11 // pred_fallthru
          _
        // Predicated region
        $region21: #{model_forward.1} parent=11 // pred_check
          %p303 = pneg %p109
        $region22: #{model_forward.1} parent=11 // pred_check_branch
          %305 = sbr.rel (%p303) target = $region24
        $region23: #{model_forward.1} parent=11 // pred_region
          _
        $region24: #{model_forward.1} parent=11 // pred_fallthru
          _
        // Predicated region
        $region25: #{model_forward.1} parent=11 // pred_check
          %p306 = pneg %p130
        $region26: #{model_forward.1} parent=11 // pred_check_branch
          %308 = sbr.rel (%p306) target = $region28
        $region27: #{model_forward.1} parent=11 // pred_region
          _
        $region28: #{model_forward.1} parent=11 // pred_fallthru
          _
        // Predicated region
        $region29: #{model_forward.1} parent=11 // pred_check
          %p309 = pneg %p151
        $region30: #{model_forward.1} parent=11 // pred_check_branch
          %311 = sbr.rel (%p309) target = $region32
        $region31: #{model_forward.1} parent=11 // pred_region
          _
        $region32: #{model_forward.1} parent=11 // pred_fallthru
          _
        // Predicated region
        $region33: #{model_forward.1} parent=11 // pred_check
          %p312 = pneg %p172
        $region34: #{model_forward.1} parent=11 // pred_check_branch
          %314 = sbr.rel (%p312) target = $region36
        $region35: #{model_forward.1} parent=11 // pred_region
          _
        $region36: #{model_forward.1} parent=11 // pred_fallthru
          _
        // Predicated region
        $region37: #{model_forward.1} parent=11 // pred_check
          %p315 = pneg %p193
        $region38: #{model_forward.1} parent=11 // pred_check_branch
          %317 = sbr.rel (%p315) target = $region40
        $region39: #{model_forward.1} parent=11 // pred_region
          _
        $region40: #{model_forward.1} parent=11 // pred_fallthru
          _
        // Predicated region
        $region41: #{model_forward.1} parent=11 // pred_check
          %p318 = pneg %p214
        $region42: #{model_forward.1} parent=11 // pred_check_branch
          %320 = sbr.rel (%p318) target = $region44
        $region43: #{model_forward.1} parent=11 // pred_region
          _
        $region44: #{model_forward.1} parent=11 // pred_fallthru
          _
        // Predicated region
        $region45: #{model_forward.1} parent=11 // pred_check
          %p321 = pneg %p235
        $region46: #{model_forward.1} parent=11 // pred_check_branch
          %323 = sbr.rel (%p321) target = $region48
        $region47: #{model_forward.1} parent=11 // pred_region
          _
        $region48: #{model_forward.1} parent=11 // pred_fallthru
          _
        // Predicated region
        $region49: #{model_forward.1} parent=11 // pred_check
          %p324 = pneg %p256
        $region50: #{model_forward.1} parent=11 // pred_check_branch
          %326 = sbr.rel (%p324) target = $region52
        $region51: #{model_forward.1} parent=11 // pred_region
          _
        $region52: #{model_forward.1} parent=11 // pred_fallthru
          _
      $region12: #{model_forward.1} parent=5 // pred_fallthru
        _
      %p327 = scmp.lt.s32.totalorder %s20, 2
      // Predicated region
      $region53: #{model_forward.1} parent=5 // pred_check
        %p328 = pneg %p327
      $region54: #{model_forward.1} parent=5 // pred_check_branch
        %330 = sbr.rel (%p328) target = $region56
      $region55: #{model_forward.1} parent=5 // pred_region
        // Predicated region
        $region57: #{model_forward.1} parent=55 // pred_check
          %p331 = pneg %p40
        $region58: #{model_forward.1} parent=55 // pred_check_branch
          %333 = sbr.rel (%p331) target = $region60
        $region59: #{model_forward.1} parent=55 // pred_region
          %s334 = smul.u32 8, %s20
          %p335 = scmp.lt.s32.totalorder %s334, 15
          %s336 = scalar_select %p335, %s334, 15
          %s337 = smul.addr %s336, 4
          %s338 = smul.addr %s337, 8
          %s339 = scalar_lea.vmem %s0, %s338
          %s340 = smul.u32 8, %s20
        $region60: #{model_forward.1} parent=55 // pred_fallthru
          _
      $region56: #{model_forward.1} parent=5 // pred_fallthru
        _
      %p341 = scmp.le.s32.totalorder 1, %s20
      %p342 = scmp.lt.s32.totalorder %s20, 3
      %p343 = pnand %p341, %p342
      %p344 = pneg %p343
      // Predicated region
      $region61: #{model_forward.1} parent=5 // pred_check
        _
      $region62: #{model_forward.1} parent=5 // pred_check_branch
        %346 = sbr.rel (%p343) target = $region64
      $region63: #{model_forward.1} parent=5 // pred_region
        %s347 = ssub.s32 %s20, 1
        %s348 = smul.u32 8, %s25
        %p349 = scmp.lt.s32.totalorder %s348, 15
        %s350 = scalar_select %p349, %s348, 15
        %s351 = smul.addr %s350, 4
        %s352 = smul.addr %s351, 8
        %s353 = scalar_lea.vmem %s0, %s352
        %p354 = pneg %p46
        %p355 = pneg %p43
        %p356 = pneg %p67
        %p357 = pneg %p64
        %p358 = pneg %p88
        %p359 = pneg %p85
        %p360 = pneg %p109
        %p361 = pneg %p106
        %p362 = pneg %p130
        %p363 = pneg %p127
        %p364 = pneg %p151
        %p365 = pneg %p148
        %p366 = pneg %p172
        %p367 = pneg %p169
        %p368 = pneg %p193
        %p369 = pneg %p190
        %p370 = pneg %p214
        %p371 = pneg %p211
        %p372 = pneg %p235
        %p373 = pneg %p232
        %p374 = pneg %p256
        %p375 = pneg %p253
        %p376 = pneg %p282
        %p377 = pneg %p279
        %s378 = sand.u32 %s269, 1
        %s379 = scalar_lea.sflag [#allocation3], %s378
        %s380 = sand.u32 %s269, 1
        %s381 = smul.addr %s380, 8
        %s382 = scalar_lea.vmem [#allocation2], %s381
        %s383 = smul.u32 8, %s25
        %p384 = scmp.lt.s32.totalorder %s383, 15
        %s385 = scalar_select %p384, %s383, 15
        %s386 = smul.addr %s385, 4
        %s387 = smul.addr %s386, 8
        %s388 = scalar_lea.vmem %s0, %s387
        %s389 = smul.u32 8, %s25
        %v390 = vld [vmem:[%s388] sm:$0x7f]
        %v391 = vld [vmem:[%s388 + $0x8] sm:$0x7f]
        %v392 = vld [vmem:[%s388 + $0x10] sm:$0x7f]
        %v393 = vld [vmem:[%s388 + $0x18] sm:$0x7f]
        %v394 = vld [vmem:[%s388 + $0x20] sm:$0x7f]
        %v395 = vld [vmem:[%s388 + $0x28] sm:$0x7f]
        %v396 = vld [vmem:[%s388 + $0x30] sm:$0x7f]
        %v397 = vld [vmem:[%s388 + $0x38] sm:$0x7f]
        %v398 = vld [vmem:[%s388 + $0x40] sm:$0x7f]
        %v399 = vld [vmem:[%s388 + $0x48] sm:$0x7f]
        %v400 = vld [vmem:[%s388 + $0x50] sm:$0x7f]
        %v401 = vld [vmem:[%s388 + $0x58] sm:$0x7f]
        %v402 = vld [vmem:[%s388 + $0x60] sm:$0x7f]
        %v403 = vld [vmem:[%s388 + $0x68] sm:$0x7f]
        %v404 = vld [vmem:[%s388 + $0x70] sm:$0x7f]
        %v405 = vld [vmem:[%s388 + $0x78] sm:$0x7f]
        %v406 = vld [vmem:[%s388 + $0x80] sm:$0x7f]
        %v407 = vld [vmem:[%s388 + $0x88] sm:$0x7f]
        %v408 = vld [vmem:[%s388 + $0x90] sm:$0x7f]
        %v409 = vld [vmem:[%s388 + $0x98] sm:$0x7f]
        %v410 = vld [vmem:[%s388 + $0xa0] sm:$0x7f]
        %v411 = vld [vmem:[%s388 + $0xa8] sm:$0x7f]
        %v412 = vld [vmem:[%s388 + $0xb0] sm:$0x7f]
        %v413 = vld [vmem:[%s388 + $0xb8] sm:$0x7f]
        %v414 = vld [vmem:[%s388 + $0xc0] sm:$0x7f]
        %v415 = vld [vmem:[%s388 + $0xc8] sm:$0x7f]
        %v416 = vld [vmem:[%s388 + $0xd0] sm:$0x7f]
        %v417 = vld [vmem:[%s388 + $0xd8] sm:$0x7f]
        %v418 = vld [vmem:[%s388 + $0xe0] sm:$0x7f]
        %v419 = vld [vmem:[%s388 + $0xe8] sm:$0x7f]
        %v420 = vld [vmem:[%s388 + $0xf0] sm:$0x7f]
        %v421 = vld [vmem:[%s388 + $0xf8] sm:$0x7f]
        %v422 = vld [vmem:[%s1] sm:$0xff]
        %v423 = vld [vmem:[%s1 + $0x8] sm:$0xff]
        %v424 = vld [vmem:[%s1 + $0x10] sm:$0xff]
        %v425 = vld [vmem:[%s1 + $0x18] sm:$0xff]
        %v426 = vld [vmem:[%s1 + $0x20] sm:$0xff]
        %v427 = vld [vmem:[%s1 + $0x28] sm:$0xff]
        %v428 = vld [vmem:[%s1 + $0x30] sm:$0xff]
        %v429 = vld [vmem:[%s1 + $0x38] sm:$0xff]
        %v430 = vld [vmem:[%s1 + $0x40] sm:$0xff]
        %v431 = vld [vmem:[%s1 + $0x48] sm:$0xff]
        %v432 = vld [vmem:[%s1 + $0x50] sm:$0xff]
        %v433 = vld [vmem:[%s1 + $0x58] sm:$0xff]
        %v434 = vld [vmem:[%s1 + $0x60] sm:$0xff]
        %v435 = vld [vmem:[%s1 + $0x68] sm:$0xff]
        %v436 = vld [vmem:[%s1 + $0x70] sm:$0xff]
        %v437 = vld [vmem:[%s1 + $0x78] sm:$0xff]
        %v438 = vld [vmem:[%s1 + $0x80] sm:$0xff]
        %v439 = vld [vmem:[%s1 + $0x88] sm:$0xff]
        %v440 = vld [vmem:[%s1 + $0x90] sm:$0xff]
        %v441 = vld [vmem:[%s1 + $0x98] sm:$0xff]
        %v442 = vld [vmem:[%s1 + $0xa0] sm:$0xff]
        %v443 = vld [vmem:[%s1 + $0xa8] sm:$0xff]
        %v444 = vld [vmem:[%s1 + $0xb0] sm:$0xff]
        %v445 = vld [vmem:[%s1 + $0xb8] sm:$0xff]
        %v446 = vld [vmem:[%s1 + $0xc0] sm:$0xff]
        %v447 = vld [vmem:[%s1 + $0xc8] sm:$0xff]
        %v448 = vld [vmem:[%s1 + $0xd0] sm:$0xff]
        %v449 = vld [vmem:[%s1 + $0xd8] sm:$0xff]
        %v450 = vld [vmem:[%s1 + $0xe0] sm:$0xff]
        %v451 = vld [vmem:[%s1 + $0xe8] sm:$0xff]
        %v452 = vld [vmem:[%s1 + $0xf0] sm:$0xff]
        %v453 = vld [vmem:[%s1 + $0xf8] sm:$0xff]
        %v454 = vld [vmem:[%s1 + $0x100] sm:$0xff]
        %v455 = vld [vmem:[%s1 + $0x108] sm:$0xff]
        %v456 = vld [vmem:[%s1 + $0x110] sm:$0xff]
        %v457 = vld [vmem:[%s1 + $0x118] sm:$0xff]
        %v458 = vld [vmem:[%s1 + $0x120] sm:$0xff]
        %v459 = vld [vmem:[%s1 + $0x128] sm:$0xff]
        %v460 = vld [vmem:[%s1 + $0x130] sm:$0xff]
        %v461 = vld [vmem:[%s1 + $0x138] sm:$0xff]
        %v462 = vld [vmem:[%s1 + $0x140] sm:$0xff]
        %v463 = vld [vmem:[%s1 + $0x148] sm:$0xff]
        %v464 = vld [vmem:[%s1 + $0x150] sm:$0xff]
        %v465 = vld [vmem:[%s1 + $0x158] sm:$0xff]
        %v466 = vld [vmem:[%s1 + $0x160] sm:$0xff]
        %v467 = vld [vmem:[%s1 + $0x168] sm:$0xff]
        %v468 = vld [vmem:[%s1 + $0x170] sm:$0xff]
        %v469 = vld [vmem:[%s1 + $0x178] sm:$0xff]
        %v470 = vld [vmem:[%s1 + $0x180] sm:$0xff]
        %v471 = vld [vmem:[%s1 + $0x188] sm:$0xff]
        %v472 = vld [vmem:[%s1 + $0x190] sm:$0xff]
        %v473 = vld [vmem:[%s1 + $0x198] sm:$0xff]
        %v474 = vld [vmem:[%s1 + $0x1a0] sm:$0xff]
        %v475 = vld [vmem:[%s1 + $0x1a8] sm:$0xff]
        %v476 = vld [vmem:[%s1 + $0x1b0] sm:$0xff]
        %v477 = vld [vmem:[%s1 + $0x1b8] sm:$0xff]
        %v478 = vld [vmem:[%s1 + $0x1c0] sm:$0xff]
        %v479 = vld [vmem:[%s1 + $0x1c8] sm:$0xff]
        %v480 = vld [vmem:[%s1 + $0x1d0] sm:$0xff]
        %v481 = vld [vmem:[%s1 + $0x1d8] sm:$0xff]
        %v482 = vld [vmem:[%s1 + $0x1e0] sm:$0xff]
        %v483 = vld [vmem:[%s1 + $0x1e8] sm:$0xff]
        %v484 = vld [vmem:[%s1 + $0x1f0] sm:$0xff]
        %v485 = vld [vmem:[%s2] sm:$0x7]
        %v486 = vld [vmem:[%s3] sm:$0xff]
        %v487 = vld [vmem:[%s3 + $0x8] sm:$0xff]
        %v488 = vld [vmem:[%s3 + $0x10] sm:$0xff]
        %v489 = vld [vmem:[%s3 + $0x18] sm:$0xff]
        %v490 = vld [vmem:[%s3 + $0x20] sm:$0xff]
        %v491 = vld [vmem:[%s3 + $0x28] sm:$0xff]
        %v492 = vld [vmem:[%s3 + $0x30] sm:$0xff]
        %v493 = vld [vmem:[%s3 + $0x38] sm:$0xff]
        %v494 = vld [vmem:[%s3 + $0x40] sm:$0xff]
        %v495 = vld [vmem:[%s3 + $0x48] sm:$0xff]
        %v496 = vld [vmem:[%s3 + $0x50] sm:$0xff]
        %v497 = vld [vmem:[%s3 + $0x58] sm:$0xff]
        %v498 = vld [vmem:[%s3 + $0x60] sm:$0xff]
        %v499 = vld [vmem:[%s3 + $0x68] sm:$0xff]
        %v500 = vld [vmem:[%s3 + $0x70] sm:$0xff]
        %v501 = vld [vmem:[%s3 + $0x78] sm:$0xff]
        %v502 = vld [vmem:[%s3 + $0x80] sm:$0xff]
        %v503 = vld [vmem:[%s3 + $0x88] sm:$0xff]
        %v504 = vld [vmem:[%s3 + $0x90] sm:$0xff]
        %v505 = vld [vmem:[%s3 + $0x98] sm:$0xff]
        %v506 = vld [vmem:[%s3 + $0xa0] sm:$0xff]
        %v507 = vld [vmem:[%s3 + $0xa8] sm:$0xff]
        %v508 = vld [vmem:[%s3 + $0xb0] sm:$0xff]
        %v509 = vld [vmem:[%s3 + $0xb8] sm:$0xff]
        %v510 = vld [vmem:[%s3 + $0xc0] sm:$0xff]
        %v511 = vld [vmem:[%s3 + $0xc8] sm:$0xff]
        %v512 = vld [vmem:[%s3 + $0xd0] sm:$0xff]
        %v513 = vld [vmem:[%s3 + $0xd8] sm:$0xff]
        %v514 = vld [vmem:[%s3 + $0xe0] sm:$0xff]
        %v515 = vld [vmem:[%s3 + $0xe8] sm:$0xff]
        %v516 = vld [vmem:[%s3 + $0xf0] sm:$0xff]
        %v517 = vld [vmem:[%s3 + $0xf8] sm:$0xff]
        %v518 = vld [vmem:[%s3 + $0x100] sm:$0xff]
        %v519 = vld [vmem:[%s3 + $0x108] sm:$0xff]
        %v520 = vld [vmem:[%s3 + $0x110] sm:$0xff]
        %v521 = vld [vmem:[%s3 + $0x118] sm:$0xff]
        %v522 = vld [vmem:[%s3 + $0x120] sm:$0xff]
        %v523 = vld [vmem:[%s3 + $0x128] sm:$0xff]
        %v524 = vld [vmem:[%s3 + $0x130] sm:$0xff]
        %v525 = vld [vmem:[%s3 + $0x138] sm:$0xff]
        %v526 = vld [vmem:[%s3 + $0x140] sm:$0xff]
        %v527 = vld [vmem:[%s3 + $0x148] sm:$0xff]
        %v528 = vld [vmem:[%s3 + $0x150] sm:$0xff]
        %v529 = vld [vmem:[%s3 + $0x158] sm:$0xff]
        %v530 = vld [vmem:[%s3 + $0x160] sm:$0xff]
        %v531 = vld [vmem:[%s3 + $0x168] sm:$0xff]
        %v532 = vld [vmem:[%s3 + $0x170] sm:$0xff]
        %v533 = vld [vmem:[%s3 + $0x178] sm:$0xff]
        %v534 = vld [vmem:[%s3 + $0x180] sm:$0xff]
        %v535 = vld [vmem:[%s3 + $0x188] sm:$0xff]
        %v536 = vld [vmem:[%s3 + $0x190] sm:$0xff]
        %v537 = vld [vmem:[%s3 + $0x198] sm:$0xff]
        %v538 = vld [vmem:[%s3 + $0x1a0] sm:$0xff]
        %v539 = vld [vmem:[%s3 + $0x1a8] sm:$0xff]
        %v540 = vld [vmem:[%s3 + $0x1b0] sm:$0xff]
        %v541 = vld [vmem:[%s3 + $0x1b8] sm:$0xff]
        %v542 = vld [vmem:[%s3 + $0x1c0] sm:$0xff]
        %v543 = vld [vmem:[%s3 + $0x1c8] sm:$0xff]
        %v544 = vld [vmem:[%s3 + $0x1d0] sm:$0xff]
        %v545 = vld [vmem:[%s3 + $0x1d8] sm:$0xff]
        %v546 = vld [vmem:[%s3 + $0x1e0] sm:$0xff]
        %v547 = vld [vmem:[%s3 + $0x1e8] sm:$0xff]
        %v548 = vld [vmem:[%s3 + $0x1f0] sm:$0xff]
        %v549 = vld [vmem:[%s3 + $0x1f8] sm:$0xff]
        %v550 = vld [vmem:[%s3 + $0x200] sm:$0xff]
        %v551 = vld [vmem:[%s3 + $0x208] sm:$0xff]
        %v552 = vld [vmem:[%s3 + $0x210] sm:$0xff]
        %v553 = vld [vmem:[%s3 + $0x218] sm:$0xff]
        %v554 = vld [vmem:[%s3 + $0x220] sm:$0xff]
        %v555 = vld [vmem:[%s3 + $0x228] sm:$0xff]
        %v556 = vld [vmem:[%s3 + $0x230] sm:$0xff]
        %v557 = vld [vmem:[%s3 + $0x238] sm:$0xff]
        %v558 = vld [vmem:[%s3 + $0x240] sm:$0xff]
        %v559 = vld [vmem:[%s3 + $0x248] sm:$0xff]
        %v560 = vld [vmem:[%s3 + $0x250] sm:$0xff]
        %v561 = vld [vmem:[%s3 + $0x258] sm:$0xff]
        %v562 = vld [vmem:[%s3 + $0x260] sm:$0xff]
        %v563 = vld [vmem:[%s3 + $0x268] sm:$0xff]
        %v564 = vld [vmem:[%s3 + $0x270] sm:$0xff]
        %v565 = vld [vmem:[%s3 + $0x278] sm:$0xff]
        %v566 = vld [vmem:[%s3 + $0x280] sm:$0xff]
        %v567 = vld [vmem:[%s3 + $0x288] sm:$0xff]
        %v568 = vld [vmem:[%s3 + $0x290] sm:$0xff]
        %v569 = vld [vmem:[%s3 + $0x298] sm:$0xff]
        %v570 = vld [vmem:[%s3 + $0x2a0] sm:$0xff]
        %v571 = vld [vmem:[%s3 + $0x2a8] sm:$0xff]
        %v572 = vld [vmem:[%s3 + $0x2b0] sm:$0xff]
        %v573 = vld [vmem:[%s3 + $0x2b8] sm:$0xff]
        %v574 = vld [vmem:[%s3 + $0x2c0] sm:$0xff]
        %v575 = vld [vmem:[%s3 + $0x2c8] sm:$0xff]
        %v576 = vld [vmem:[%s3 + $0x2d0] sm:$0xff]
        %v577 = vld [vmem:[%s3 + $0x2d8] sm:$0xff]
        %v578 = vld [vmem:[%s3 + $0x2e0] sm:$0xff]
        %v579 = vld [vmem:[%s3 + $0x2e8] sm:$0xff]
        %v580 = vld [vmem:[%s3 + $0x2f0] sm:$0xff]
        %v581 = vld [vmem:[%s3 + $0x2f8] sm:$0xff]
        %v582 = vld [vmem:[%s3 + $0x300] sm:$0xff]
        %v583 = vld [vmem:[%s3 + $0x308] sm:$0xff]
        %v584 = vld [vmem:[%s3 + $0x310] sm:$0xff]
        %v585 = vld [vmem:[%s3 + $0x318] sm:$0xff]
        %v586 = vld [vmem:[%s3 + $0x320] sm:$0xff]
        %v587 = vld [vmem:[%s3 + $0x328] sm:$0xff]
        %v588 = vld [vmem:[%s3 + $0x330] sm:$0xff]
        %v589 = vld [vmem:[%s3 + $0x338] sm:$0xff]
        %v590 = vld [vmem:[%s3 + $0x340] sm:$0xff]
        %v591 = vld [vmem:[%s3 + $0x348] sm:$0xff]
        %v592 = vld [vmem:[%s3 + $0x350] sm:$0xff]
        %v593 = vld [vmem:[%s3 + $0x358] sm:$0xff]
        %v594 = vld [vmem:[%s4] sm:$0x3]
        %603 = vrot.lane.b32.xlu0 %v391, 28
        %v604 = vpop.permute.xlu0 %603
        %605 = vrot.lane.b32.xlu0 %v395, 28
        %v606 = vpop.permute.xlu0 %605
        %607 = vrot.lane.b32.xlu0 %v399, 28
        %v608 = vpop.permute.xlu0 %607
        %609 = vrot.lane.b32.xlu0 %v403, 28
        %v610 = vpop.permute.xlu0 %609
        %611 = vrot.lane.b32.xlu0 %v407, 28
        %v612 = vpop.permute.xlu0 %611
        %613 = vrot.lane.b32.xlu0 %v411, 28
        %v614 = vpop.permute.xlu0 %613
        %615 = vrot.lane.b32.xlu0 %v415, 28
        %v616 = vpop.permute.xlu0 %615
        %617 = vrot.lane.b32.xlu0 %v419, 28
        %v618 = vpop.permute.xlu0 %617
        %635 = vrot.lane.b32.xlu0 %v392, 56
        %v636 = vpop.permute.xlu0 %635
        %637 = vrot.lane.b32.xlu0 %v396, 56
        %v638 = vpop.permute.xlu0 %637
        %639 = vrot.lane.b32.xlu0 %v400, 56
        %v640 = vpop.permute.xlu0 %639
        %641 = vrot.lane.b32.xlu0 %v404, 56
        %v642 = vpop.permute.xlu0 %641
        %643 = vrot.lane.b32.xlu0 %v408, 56
        %v644 = vpop.permute.xlu0 %643
        %645 = vrot.lane.b32.xlu0 %v412, 56
        %v646 = vpop.permute.xlu0 %645
        %647 = vrot.lane.b32.xlu0 %v416, 56
        %v648 = vpop.permute.xlu0 %647
        %649 = vrot.lane.b32.xlu0 %v420, 56
        %v650 = vpop.permute.xlu0 %649
        %667 = vrot.lane.b32.xlu0 %v393, 84
        %v668 = vpop.permute.xlu0 %667
        %669 = vrot.lane.b32.xlu0 %v397, 84
        %v670 = vpop.permute.xlu0 %669
        %671 = vrot.lane.b32.xlu0 %v401, 84
        %v672 = vpop.permute.xlu0 %671
        %673 = vrot.lane.b32.xlu0 %v405, 84
        %v674 = vpop.permute.xlu0 %673
        %675 = vrot.lane.b32.xlu0 %v409, 84
        %v676 = vpop.permute.xlu0 %675
        %677 = vrot.lane.b32.xlu0 %v413, 84
        %v678 = vpop.permute.xlu0 %677
        %679 = vrot.lane.b32.xlu0 %v417, 84
        %v680 = vpop.permute.xlu0 %679
        %681 = vrot.lane.b32.xlu0 %v421, 84
        %v682 = vpop.permute.xlu0 %681
        %v699 = vrot.slane %v390, 1
        %v700 = vrot.slane %v394, 1
        %v701 = vrot.slane %v398, 1
        %v702 = vrot.slane %v402, 1
        %v703 = vrot.slane %v406, 1
        %v704 = vrot.slane %v410, 1
        %v705 = vrot.slane %v414, 1
        %v706 = vrot.slane %v418, 1
        %707 = vrot.lane.b32.xlu0 %v699, 112
        %v708 = vpop.permute.xlu0 %707
        %709 = vrot.lane.b32.xlu0 %v700, 112
        %v710 = vpop.permute.xlu0 %709
        %711 = vrot.lane.b32.xlu0 %v701, 112
        %v712 = vpop.permute.xlu0 %711
        %713 = vrot.lane.b32.xlu0 %v702, 112
        %v714 = vpop.permute.xlu0 %713
        %715 = vrot.lane.b32.xlu0 %v703, 112
        %v716 = vpop.permute.xlu0 %715
        %717 = vrot.lane.b32.xlu0 %v704, 112
        %v718 = vpop.permute.xlu0 %717
        %719 = vrot.lane.b32.xlu0 %v705, 112
        %v720 = vpop.permute.xlu0 %719
        %721 = vrot.lane.b32.xlu0 %v706, 112
        %v722 = vpop.permute.xlu0 %721
        %v731 = vrot.slane %v391, 1
        %v732 = vrot.slane %v395, 1
        %v733 = vrot.slane %v399, 1
        %v734 = vrot.slane %v403, 1
        %v735 = vrot.slane %v407, 1
        %v736 = vrot.slane %v411, 1
        %v737 = vrot.slane %v415, 1
        %v738 = vrot.slane %v419, 1
        %739 = vrot.lane.b32.xlu0 %v731, 12
        %v740 = vpop.permute.xlu0 %739
        %741 = vrot.lane.b32.xlu0 %v732, 12
        %v742 = vpop.permute.xlu0 %741
        %743 = vrot.lane.b32.xlu0 %v733, 12
        %v744 = vpop.permute.xlu0 %743
        %745 = vrot.lane.b32.xlu0 %v734, 12
        %v746 = vpop.permute.xlu0 %745
        %747 = vrot.lane.b32.xlu0 %v735, 12
        %v748 = vpop.permute.xlu0 %747
        %749 = vrot.lane.b32.xlu0 %v736, 12
        %v750 = vpop.permute.xlu0 %749
        %751 = vrot.lane.b32.xlu0 %v737, 12
        %v752 = vpop.permute.xlu0 %751
        %753 = vrot.lane.b32.xlu0 %v738, 12
        %v754 = vpop.permute.xlu0 %753
        %vm763 = vcmask 228352
        %v764 = vsel %vm763, %v390, %v604
        %v765 = vsel %vm763, %v394, %v606
        %v766 = vsel %vm763, %v398, %v608
        %v767 = vsel %vm763, %v402, %v610
        %v768 = vsel %vm763, %v406, %v612
        %v769 = vsel %vm763, %v410, %v614
        %v770 = vsel %vm763, %v414, %v616
        %v771 = vsel %vm763, %v418, %v618
        %vm772 = vcmask 457728
        %v773 = vsel %vm772, %v764, %v636
        %v774 = vsel %vm772, %v765, %v638
        %v775 = vsel %vm772, %v766, %v640
        %v776 = vsel %vm772, %v767, %v642
        %v777 = vsel %vm772, %v768, %v644
        %v778 = vsel %vm772, %v769, %v646
        %v779 = vsel %vm772, %v770, %v648
        %v780 = vsel %vm772, %v771, %v650
        %vm781 = vcmask 687104
        %v782 = vsel %vm781, %v773, %v668
        %v783 = vsel %vm781, %v774, %v670
        %v784 = vsel %vm781, %v775, %v672
        %v785 = vsel %vm781, %v776, %v674
        %v786 = vsel %vm781, %v777, %v676
        %v787 = vsel %vm781, %v778, %v678
        %v788 = vsel %vm781, %v779, %v680
        %v789 = vsel %vm781, %v780, %v682
        %vm790 = vcmask 916480
        %v791 = vsel %vm790, %v782, %v708
        %v792 = vsel %vm790, %v783, %v710
        %v793 = vsel %vm790, %v784, %v712
        %v794 = vsel %vm790, %v785, %v714
        %v795 = vsel %vm790, %v786, %v716
        %v796 = vsel %vm790, %v787, %v718
        %v797 = vsel %vm790, %v788, %v720
        %v798 = vsel %vm790, %v789, %v722
        %vm799 = vcmask 97280
        %v800 = vsel %vm799, %v708, %v740
        %v801 = vsel %vm799, %v710, %v742
        %v802 = vsel %vm799, %v712, %v744
        %v803 = vsel %vm799, %v714, %v746
        %v804 = vsel %vm799, %v716, %v748
        %v805 = vsel %vm799, %v718, %v750
        %v806 = vsel %vm799, %v720, %v752
        %v807 = vsel %vm799, %v722, %v754
        %v824 = vcombine.low %v791, %v800
        %v825 = vcombine.high %v791, %v800
        %v827 = vunpack.c.l.s4 1983009808
        %v828 = vunpack.c.0.s8 %v827
        %v829 = vlaneseq
        %v830 = vshrl.u32 %v829, 7
        %v831 = vsub.s32 %v828, %v830
        %v832 = vrot.slane %v824, %v831
        %v834 = vunpack.c.l.s4 1983009808
        %v835 = vunpack.c.0.s8 %v834
        %v836 = vlaneseq
        %v837 = vshrl.u32 %v836, 7
        %v838 = vsub.s32 %v835, %v837
        %v839 = vrot.slane %v825, %v838
        %v840 = vcombine.high %v832, %v832
        %v841 = vcombine.low %v792, %v801
        %v842 = vcombine.high %v792, %v801
        %v844 = vunpack.c.l.s4 1983009808
        %v845 = vunpack.c.0.s8 %v844
        %v846 = vlaneseq
        %v847 = vshrl.u32 %v846, 7
        %v848 = vsub.s32 %v845, %v847
        %v849 = vrot.slane %v841, %v848
        %v851 = vunpack.c.l.s4 1983009808
        %v852 = vunpack.c.0.s8 %v851
        %v853 = vlaneseq
        %v854 = vshrl.u32 %v853, 7
        %v855 = vsub.s32 %v852, %v854
        %v856 = vrot.slane %v842, %v855
        %v857 = vcombine.high %v849, %v849
        %v858 = vcombine.low %v793, %v802
        %v859 = vcombine.high %v793, %v802
        %v861 = vunpack.c.l.s4 1983009808
        %v862 = vunpack.c.0.s8 %v861
        %v863 = vlaneseq
        %v864 = vshrl.u32 %v863, 7
        %v865 = vsub.s32 %v862, %v864
        %v866 = vrot.slane %v858, %v865
        %v868 = vunpack.c.l.s4 1983009808
        %v869 = vunpack.c.0.s8 %v868
        %v870 = vlaneseq
        %v871 = vshrl.u32 %v870, 7
        %v872 = vsub.s32 %v869, %v871
        %v873 = vrot.slane %v859, %v872
        %v874 = vcombine.high %v866, %v866
        %v875 = vcombine.low %v794, %v803
        %v876 = vcombine.high %v794, %v803
        %v878 = vunpack.c.l.s4 1983009808
        %v879 = vunpack.c.0.s8 %v878
        %v880 = vlaneseq
        %v881 = vshrl.u32 %v880, 7
        %v882 = vsub.s32 %v879, %v881
        %v883 = vrot.slane %v875, %v882
        %v885 = vunpack.c.l.s4 1983009808
        %v886 = vunpack.c.0.s8 %v885
        %v887 = vlaneseq
        %v888 = vshrl.u32 %v887, 7
        %v889 = vsub.s32 %v886, %v888
        %v890 = vrot.slane %v876, %v889
        %v891 = vcombine.high %v883, %v883
        %v892 = vcombine.low %v795, %v804
        %v893 = vcombine.high %v795, %v804
        %v895 = vunpack.c.l.s4 1983009808
        %v896 = vunpack.c.0.s8 %v895
        %v897 = vlaneseq
        %v898 = vshrl.u32 %v897, 7
        %v899 = vsub.s32 %v896, %v898
        %v900 = vrot.slane %v892, %v899
        %v902 = vunpack.c.l.s4 1983009808
        %v903 = vunpack.c.0.s8 %v902
        %v904 = vlaneseq
        %v905 = vshrl.u32 %v904, 7
        %v906 = vsub.s32 %v903, %v905
        %v907 = vrot.slane %v893, %v906
        %v908 = vcombine.high %v900, %v900
        %v909 = vcombine.low %v796, %v805
        %v910 = vcombine.high %v796, %v805
        %v912 = vunpack.c.l.s4 1983009808
        %v913 = vunpack.c.0.s8 %v912
        %v914 = vlaneseq
        %v915 = vshrl.u32 %v914, 7
        %v916 = vsub.s32 %v913, %v915
        %v917 = vrot.slane %v909, %v916
        %v919 = vunpack.c.l.s4 1983009808
        %v920 = vunpack.c.0.s8 %v919
        %v921 = vlaneseq
        %v922 = vshrl.u32 %v921, 7
        %v923 = vsub.s32 %v920, %v922
        %v924 = vrot.slane %v910, %v923
        %v925 = vcombine.high %v917, %v917
        %v926 = vcombine.low %v797, %v806
        %v927 = vcombine.high %v797, %v806
        %v929 = vunpack.c.l.s4 1983009808
        %v930 = vunpack.c.0.s8 %v929
        %v931 = vlaneseq
        %v932 = vshrl.u32 %v931, 7
        %v933 = vsub.s32 %v930, %v932
        %v934 = vrot.slane %v926, %v933
        %v936 = vunpack.c.l.s4 1983009808
        %v937 = vunpack.c.0.s8 %v936
        %v938 = vlaneseq
        %v939 = vshrl.u32 %v938, 7
        %v940 = vsub.s32 %v937, %v939
        %v941 = vrot.slane %v927, %v940
        %v942 = vcombine.high %v934, %v934
        %v943 = vcombine.low %v798, %v807
        %v944 = vcombine.high %v798, %v807
        %v946 = vunpack.c.l.s4 1983009808
        %v947 = vunpack.c.0.s8 %v946
        %v948 = vlaneseq
        %v949 = vshrl.u32 %v948, 7
        %v950 = vsub.s32 %v947, %v949
        %v951 = vrot.slane %v943, %v950
        %v953 = vunpack.c.l.s4 1983009808
        %v954 = vunpack.c.0.s8 %v953
        %v955 = vlaneseq
        %v956 = vshrl.u32 %v955, 7
        %v957 = vsub.s32 %v954, %v956
        %v958 = vrot.slane %v944, %v957
        %v959 = vcombine.high %v951, %v951
        %v961 = vlaneseq
        %v962 = vshrl.u32 %v961, 7
        %v963 = vsub.s32 0, %v962
        %v964 = vrot.slane %v485, %v963
        %v965 = vlaneseq
        %v966 = vshrl.u32 %v965, 7
        %v967 = vsub.s32 1, %v966
        %v968 = vrot.slane %v485, %v967
        %v969 = vlaneseq
        %v970 = vshrl.u32 %v969, 7
        %v971 = vsub.s32 2, %v970
        %v972 = vrot.slane %v485, %v971
        %v976 = vcombine.low %v832, %v840
        %v977 = vcombine.low %v839, %v849
        %v979 = vunpack.c.l.s4 1983009808
        %v980 = vunpack.c.0.s8 %v979
        %v981 = vlaneseq
        %v982 = vshrl.u32 %v981, 7
        %v983 = vsub.s32 %v980, %v982
        %v984 = vrot.slane %v976, %v983
        %v986 = vunpack.c.l.s4 1983009808
        %v987 = vunpack.c.0.s8 %v986
        %v988 = vlaneseq
        %v989 = vshrl.u32 %v988, 7
        %v990 = vsub.s32 %v987, %v989
        %v991 = vrot.slane %v977, %v990
        %v992 = vcombine.low %v984, %v991
        %v993 = vcombine.high %v984, %v991
        %v994 = vcombine.low %v857, %v856
        %v995 = vcombine.low %v866, %v874
        %v997 = vunpack.c.l.s4 1983009808
        %v998 = vunpack.c.0.s8 %v997
        %v999 = vlaneseq
        %v1000 = vshrl.u32 %v999, 7
        %v1001 = vsub.s32 %v998, %v1000
        %v1002 = vrot.slane %v994, %v1001
        %v1004 = vunpack.c.l.s4 1983009808
        %v1005 = vunpack.c.0.s8 %v1004
        %v1006 = vlaneseq
        %v1007 = vshrl.u32 %v1006, 7
        %v1008 = vsub.s32 %v1005, %v1007
        %v1009 = vrot.slane %v995, %v1008
        %v1010 = vcombine.low %v1002, %v1009
        %v1011 = vcombine.high %v1002, %v1009
        %v1012 = vcombine.low %v873, %v883
        %v1013 = vcombine.low %v891, %v890
        %v1015 = vunpack.c.l.s4 1983009808
        %v1016 = vunpack.c.0.s8 %v1015
        %v1017 = vlaneseq
        %v1018 = vshrl.u32 %v1017, 7
        %v1019 = vsub.s32 %v1016, %v1018
        %v1020 = vrot.slane %v1012, %v1019
        %v1022 = vunpack.c.l.s4 1983009808
        %v1023 = vunpack.c.0.s8 %v1022
        %v1024 = vlaneseq
        %v1025 = vshrl.u32 %v1024, 7
        %v1026 = vsub.s32 %v1023, %v1025
        %v1027 = vrot.slane %v1013, %v1026
        %v1028 = vcombine.low %v1020, %v1027
        %v1029 = vcombine.high %v1020, %v1027
        %v1030 = vcombine.low %v900, %v908
        %v1031 = vcombine.low %v907, %v917
        %v1033 = vunpack.c.l.s4 1983009808
        %v1034 = vunpack.c.0.s8 %v1033
        %v1035 = vlaneseq
        %v1036 = vshrl.u32 %v1035, 7
        %v1037 = vsub.s32 %v1034, %v1036
        %v1038 = vrot.slane %v1030, %v1037
        %v1040 = vunpack.c.l.s4 1983009808
        %v1041 = vunpack.c.0.s8 %v1040
        %v1042 = vlaneseq
        %v1043 = vshrl.u32 %v1042, 7
        %v1044 = vsub.s32 %v1041, %v1043
        %v1045 = vrot.slane %v1031, %v1044
        %v1046 = vcombine.low %v1038, %v1045
        %v1047 = vcombine.high %v1038, %v1045
        %v1048 = vcombine.low %v925, %v924
        %v1049 = vcombine.low %v934, %v942
        %v1051 = vunpack.c.l.s4 1983009808
        %v1052 = vunpack.c.0.s8 %v1051
        %v1053 = vlaneseq
        %v1054 = vshrl.u32 %v1053, 7
        %v1055 = vsub.s32 %v1052, %v1054
        %v1056 = vrot.slane %v1048, %v1055
        %v1058 = vunpack.c.l.s4 1983009808
        %v1059 = vunpack.c.0.s8 %v1058
        %v1060 = vlaneseq
        %v1061 = vshrl.u32 %v1060, 7
        %v1062 = vsub.s32 %v1059, %v1061
        %v1063 = vrot.slane %v1049, %v1062
        %v1064 = vcombine.low %v1056, %v1063
        %v1065 = vcombine.high %v1056, %v1063
        %v1066 = vcombine.low %v941, %v951
        %v1067 = vcombine.low %v959, %v958
        %v1069 = vunpack.c.l.s4 1983009808
        %v1070 = vunpack.c.0.s8 %v1069
        %v1071 = vlaneseq
        %v1072 = vshrl.u32 %v1071, 7
        %v1073 = vsub.s32 %v1070, %v1072
        %v1074 = vrot.slane %v1066, %v1073
        %v1076 = vunpack.c.l.s4 1983009808
        %v1077 = vunpack.c.0.s8 %v1076
        %v1078 = vlaneseq
        %v1079 = vshrl.u32 %v1078, 7
        %v1080 = vsub.s32 %v1077, %v1079
        %v1081 = vrot.slane %v1067, %v1080
        %v1082 = vcombine.low %v1074, %v1081
        %v1083 = vcombine.high %v1074, %v1081
        %vm1090 = vcmask 326656
        %v1091 = vsel %vm1090, %v993, 0
        %v1093 = vsel %vm1090, %v1011, 0
        %v1095 = vsel %vm1090, %v1029, 0
        %v1097 = vsel %vm1090, %v1047, 0
        %v1099 = vsel %vm1090, %v1065, 0
        %v1101 = vsel %vm1090, %v1083, 0
        %1103 = vmatprep.subr.mxu0 %v468
        %1104 = vmatpush1.msra.mxu0 %v467
        %1105 = vmatprep.subr.mxu0 %v465
        %1106 = vmatpush1.msra.mxu0 %v464
        %1107 = vmatprep.subr.mxu0 %v462
        %1108 = vmatpush1.msra.mxu0 %v461
        %1109 = vmatprep.subr.mxu0 %v459
        %1110 = vmatpush1.msra.mxu0 %v458
        %1111 = vmatprep.subr.mxu0 %v456
        %1112 = vmatpush1.msra.mxu0 %v455
        %1113 = vmatprep.subr.mxu0 %v453
        %1114 = vmatpush1.msra.mxu0 %v452
        %1115 = vmatprep.subr.mxu0 %v450
        %1116 = vmatpush1.msra.mxu0 %v449
        %1117 = vmatprep.subr.mxu0 %v447
        %1118 = vmatpush1.msra.mxu0 %v446
        %1119 = vmatprep.subr.mxu0 %v444
        %1120 = vmatpush1.msra.mxu0 %v443
        %1121 = vmatprep.subr.mxu0 %v441
        %1122 = vmatpush1.msra.mxu0 %v440
        %1123 = vmatprep.subr.mxu0 %v438
        %1124 = vmatpush1.msra.mxu0 %v437
        %1125 = vmatprep.subr.mxu0 %v435
        %1126 = vmatpush1.msra.mxu0 %v434
        %1127 = vmatprep.subr.mxu0 %v432
        %1128 = vmatpush1.msra.mxu0 %v431
        %1129 = vmatprep.subr.mxu0 %v429
        %1130 = vmatpush1.msra.mxu0 %v428
        %1131 = vmatprep.subr.mxu0 %v426
        %1132 = vmatpush1.msra.mxu0 %v425
        %1133 = vmatprep.subr.mxu0 %v423
        %1134 = vmatpush1.msra.mxu0 %v422
        %1135 = vmatprep.subr.mxu0 0.0
        %1136 = vmatpush2.msra.mxu0 0.0
        %1137 = vmatprep.subr.mxu0 0.0
        %1138 = vmatpush2.msra.mxu0 0.0
        %1139 = vmatprep.subr.mxu0 0.0
        %1140 = vmatpush2.msra.mxu0 0.0
        %1141 = vmatprep.subr.mxu0 0.0
        %1142 = vmatpush2.msra.mxu0 0.0
        %1143 = vmatprep.subr.mxu0 0.0
        %1144 = vmatpush2.msra.mxu0 0.0
        %1145 = vmatprep.subr.mxu0 0.0
        %1146 = vmatpush2.msra.mxu0 0.0
        %1147 = vmatprep.subr.mxu0 0.0
        %1148 = vmatpush2.msra.mxu0 0.0
        %1149 = vmatprep.subr.mxu0 0.0
        %1150 = vmatpush2.msra.mxu0 0.0
        %1151 = vmatprep.subr.mxu0 0.0
        %1152 = vmatpush2.msra.mxu0 0.0
        %1153 = vmatprep.subr.mxu0 0.0
        %1154 = vmatpush2.msra.mxu0 0.0
        %1155 = vmatprep.subr.mxu0 0.0
        %1156 = vmatpush2.msra.mxu0 0.0
        %1157 = vmatprep.subr.mxu0 %v483
        %1158 = vmatpush2.msra.mxu0 %v482
        %1159 = vmatprep.subr.mxu0 %v480
        %1160 = vmatpush2.msra.mxu0 %v479
        %1161 = vmatprep.subr.mxu0 %v477
        %1162 = vmatpush2.msra.mxu0 %v476
        %1163 = vmatprep.subr.mxu0 %v474
        %1164 = vmatpush2.msra.mxu0 %v473
        %1165 = vmatprep.subr.mxu0 %v471
        %1166 = vmatpush2.msra.mxu0 %v470
        %1167 = vmatprep.mubr.f32.mxu0 %v1091
        %1168 = vmatmul.mubr.f32.gmra.mxu0 %v992
        %v1169 = vpop.f32.mrf.mxu0
        %v1170 = vadd.f32 %v964, %v1169
        %v1171 = vpop.f32.mrf.mxu0
        %v1172 = vadd.f32 %v968, %v1171
        %1173 = vmatprep.mubr.f32.mxu0 %v1093
        %1174 = vmatmul.mubr.f32.gmra.mxu0 %v1010
        %v1175 = vpop.f32.mrf.mxu0
        %v1176 = vadd.f32 %v964, %v1175
        %v1177 = vpop.f32.mrf.mxu0
        %v1178 = vadd.f32 %v968, %v1177
        %1179 = vmatprep.mubr.f32.mxu0 %v1095
        %1180 = vmatmul.mubr.f32.gmra.mxu0 %v1028
        %v1181 = vpop.f32.mrf.mxu0
        %v1182 = vadd.f32 %v964, %v1181
        %v1183 = vpop.f32.mrf.mxu0
        %v1184 = vadd.f32 %v968, %v1183
        %1185 = vmatprep.mubr.f32.mxu0 %v1097
        %1186 = vmatmul.mubr.f32.gmra.mxu0 %v1046
        %v1187 = vpop.f32.mrf.mxu0
        %v1188 = vadd.f32 %v964, %v1187
        %v1189 = vpop.f32.mrf.mxu0
        %v1190 = vadd.f32 %v968, %v1189
        %1191 = vmatprep.mubr.f32.mxu0 %v1099
        %1192 = vmatmul.mubr.f32.gmra.mxu0 %v1064
        %v1193 = vpop.f32.mrf.mxu0
        %v1194 = vadd.f32 %v964, %v1193
        %v1195 = vpop.f32.mrf.mxu0
        %v1196 = vadd.f32 %v968, %v1195
        %1197 = vmatprep.mubr.f32.mxu0 %v1101
        %1198 = vmatmul.mubr.f32.gmra.mxu0 %v1082
        %v1199 = vpop.f32.mrf.mxu0
        %v1200 = vadd.f32 %v964, %v1199
        %v1201 = vpop.f32.mrf.mxu0
        %v1202 = vadd.f32 %v968, %v1201
        %1203 = vdwg.mxu0
        %1204 = vmatprep.subr.mxu0 0.0
        %1205 = vmatpush1.msra.mxu0 %v469
        %1206 = vmatprep.subr.mxu0 0.0
        %1207 = vmatpush1.msra.mxu0 %v466
        %1208 = vmatprep.subr.mxu0 0.0
        %1209 = vmatpush1.msra.mxu0 %v463
        %1210 = vmatprep.subr.mxu0 0.0
        %1211 = vmatpush1.msra.mxu0 %v460
        %1212 = vmatprep.subr.mxu0 0.0
        %1213 = vmatpush1.msra.mxu0 %v457
        %1214 = vmatprep.subr.mxu0 0.0
        %1215 = vmatpush1.msra.mxu0 %v454
        %1216 = vmatprep.subr.mxu0 0.0
        %1217 = vmatpush1.msra.mxu0 %v451
        %1218 = vmatprep.subr.mxu0 0.0
        %1219 = vmatpush1.msra.mxu0 %v448
        %1220 = vmatprep.subr.mxu0 0.0
        %1221 = vmatpush1.msra.mxu0 %v445
        %1222 = vmatprep.subr.mxu0 0.0
        %1223 = vmatpush1.msra.mxu0 %v442
        %1224 = vmatprep.subr.mxu0 0.0
        %1225 = vmatpush1.msra.mxu0 %v439
        %1226 = vmatprep.subr.mxu0 0.0
        %1227 = vmatpush1.msra.mxu0 %v436
        %1228 = vmatprep.subr.mxu0 0.0
        %1229 = vmatpush1.msra.mxu0 %v433
        %1230 = vmatprep.subr.mxu0 0.0
        %1231 = vmatpush1.msra.mxu0 %v430
        %1232 = vmatprep.subr.mxu0 0.0
        %1233 = vmatpush1.msra.mxu0 %v427
        %1234 = vmatprep.subr.mxu0 0.0
        %1235 = vmatpush1.msra.mxu0 %v424
        %1236 = vmatprep.subr.mxu0 0.0
        %1237 = vmatpush2.msra.mxu0 0.0
        %1238 = vmatprep.subr.mxu0 0.0
        %1239 = vmatpush2.msra.mxu0 0.0
        %1240 = vmatprep.subr.mxu0 0.0
        %1241 = vmatpush2.msra.mxu0 0.0
        %1242 = vmatprep.subr.mxu0 0.0
        %1243 = vmatpush2.msra.mxu0 0.0
        %1244 = vmatprep.subr.mxu0 0.0
        %1245 = vmatpush2.msra.mxu0 0.0
        %1246 = vmatprep.subr.mxu0 0.0
        %1247 = vmatpush2.msra.mxu0 0.0
        %1248 = vmatprep.subr.mxu0 0.0
        %1249 = vmatpush2.msra.mxu0 0.0
        %1250 = vmatprep.subr.mxu0 0.0
        %1251 = vmatpush2.msra.mxu0 0.0
        %1252 = vmatprep.subr.mxu0 0.0
        %1253 = vmatpush2.msra.mxu0 0.0
        %1254 = vmatprep.subr.mxu0 0.0
        %1255 = vmatpush2.msra.mxu0 0.0
        %1256 = vmatprep.subr.mxu0 0.0
        %1257 = vmatpush2.msra.mxu0 0.0
        %1258 = vmatprep.subr.mxu0 0.0
        %1259 = vmatpush2.msra.mxu0 %v484
        %1260 = vmatprep.subr.mxu0 0.0
        %1261 = vmatpush2.msra.mxu0 %v481
        %1262 = vmatprep.subr.mxu0 0.0
        %1263 = vmatpush2.msra.mxu0 %v478
        %1264 = vmatprep.subr.mxu0 0.0
        %1265 = vmatpush2.msra.mxu0 %v475
        %1266 = vmatprep.subr.mxu0 0.0
        %1267 = vmatpush2.msra.mxu0 %v472
        %1268 = vmatprep.mubr.f32.mxu0 %v1091
        %1269 = vmatmul.mubr.f32.gmra.mxu0 %v992
        %v1270 = vpop.f32.mrf.mxu0
        %v1271 = vadd.f32 %v972, %v1270
        %v1272 = vpop.f32.mrf.mxu0
        %1273 = vmatprep.mubr.f32.mxu0 %v1093
        %1274 = vmatmul.mubr.f32.gmra.mxu0 %v1010
        %v1275 = vpop.f32.mrf.mxu0
        %v1276 = vadd.f32 %v972, %v1275
        %v1277 = vpop.f32.mrf.mxu0
        %1278 = vmatprep.mubr.f32.mxu0 %v1095
        %1279 = vmatmul.mubr.f32.gmra.mxu0 %v1028
        %v1280 = vpop.f32.mrf.mxu0
        %v1281 = vadd.f32 %v972, %v1280
        %v1282 = vpop.f32.mrf.mxu0
        %1283 = vmatprep.mubr.f32.mxu0 %v1097
        %1284 = vmatmul.mubr.f32.gmra.mxu0 %v1046
        %v1285 = vpop.f32.mrf.mxu0
        %v1286 = vadd.f32 %v972, %v1285
        %v1287 = vpop.f32.mrf.mxu0
        %1288 = vmatprep.mubr.f32.mxu0 %v1099
        %1289 = vmatmul.mubr.f32.gmra.mxu0 %v1064
        %v1290 = vpop.f32.mrf.mxu0
        %v1291 = vadd.f32 %v972, %v1290
        %v1292 = vpop.f32.mrf.mxu0
        %1293 = vmatprep.mubr.f32.mxu0 %v1101
        %1294 = vmatmul.mubr.f32.gmra.mxu0 %v1082
        %v1295 = vpop.f32.mrf.mxu0
        %v1296 = vadd.f32 %v972, %v1295
        %v1297 = vpop.f32.mrf.mxu0
        %1298 = vdwg.mxu0
        %v1299 = vmax.f32 %v1170, 0.0
        %v1300 = vmax.f32 %v1172, 0.0
        %v1301 = vmax.f32 %v1271, 0.0
        %v1302 = vmax.f32 %v1176, 0.0
        %v1303 = vmax.f32 %v1178, 0.0
        %v1304 = vmax.f32 %v1276, 0.0
        %v1305 = vmax.f32 %v1182, 0.0
        %v1306 = vmax.f32 %v1184, 0.0
        %v1307 = vmax.f32 %v1281, 0.0
        %v1308 = vmax.f32 %v1188, 0.0
        %v1309 = vmax.f32 %v1190, 0.0
        %v1310 = vmax.f32 %v1286, 0.0
        %v1311 = vmax.f32 %v1194, 0.0
        %v1312 = vmax.f32 %v1196, 0.0
        %v1313 = vmax.f32 %v1291, 0.0
        %v1314 = vmax.f32 %v1200, 0.0
        %v1315 = vmax.f32 %v1202, 0.0
        %v1316 = vmax.f32 %v1296, 0.0
        %1329 = vrot.lane.b32.xlu0 %v1299, 56
        %v1330 = vpop.permute.xlu0 %1329
        %1331 = vrot.lane.b32.xlu0 %v1300, 56
        %v1332 = vpop.permute.xlu0 %1331
        %1333 = vrot.lane.b32.xlu0 %v1302, 56
        %v1334 = vpop.permute.xlu0 %1333
        %1335 = vrot.lane.b32.xlu0 %v1303, 56
        %v1336 = vpop.permute.xlu0 %1335
        %1337 = vrot.lane.b32.xlu0 %v1305, 56
        %v1338 = vpop.permute.xlu0 %1337
        %1339 = vrot.lane.b32.xlu0 %v1306, 56
        %v1340 = vpop.permute.xlu0 %1339
        %1341 = vrot.lane.b32.xlu0 %v1308, 56
        %v1342 = vpop.permute.xlu0 %1341
        %1343 = vrot.lane.b32.xlu0 %v1309, 56
        %v1344 = vpop.permute.xlu0 %1343
        %1345 = vrot.lane.b32.xlu0 %v1311, 56
        %v1346 = vpop.permute.xlu0 %1345
        %1347 = vrot.lane.b32.xlu0 %v1312, 56
        %v1348 = vpop.permute.xlu0 %1347
        %1349 = vrot.lane.b32.xlu0 %v1314, 56
        %v1350 = vpop.permute.xlu0 %1349
        %1351 = vrot.lane.b32.xlu0 %v1315, 56
        %v1352 = vpop.permute.xlu0 %1351
        %v1353 = vsel %vm772, %v1330, %v1332
        %v1354 = vsel %vm772, %v1334, %v1336
        %v1355 = vsel %vm772, %v1338, %v1340
        %v1356 = vsel %vm772, %v1342, %v1344
        %v1357 = vsel %vm772, %v1346, %v1348
        %v1358 = vsel %vm772, %v1350, %v1352
        %v1365 = vmax.f32 %v1299, %v1353
        %v1366 = vmax.f32 %v1302, %v1354
        %v1367 = vmax.f32 %v1305, %v1355
        %v1368 = vmax.f32 %v1308, %v1356
        %v1369 = vmax.f32 %v1311, %v1357
        %v1370 = vmax.f32 %v1314, %v1358
        %1377 = vrot.lane.b32.xlu0 %v1301, 56
        %v1378 = vpop.permute.xlu0 %1377
        %1379 = vrot.lane.b32.xlu0 %v1304, 56
        %v1380 = vpop.permute.xlu0 %1379
        %1381 = vrot.lane.b32.xlu0 %v1307, 56
        %v1382 = vpop.permute.xlu0 %1381
        %1383 = vrot.lane.b32.xlu0 %v1310, 56
        %v1384 = vpop.permute.xlu0 %1383
        %1385 = vrot.lane.b32.xlu0 %v1313, 56
        %v1386 = vpop.permute.xlu0 %1385
        %1387 = vrot.lane.b32.xlu0 %v1316, 56
        %v1388 = vpop.permute.xlu0 %1387
        %v1389 = vsel %vm772, %v1332, %v1378
        %v1390 = vsel %vm772, %v1336, %v1380
        %v1391 = vsel %vm772, %v1340, %v1382
        %v1392 = vsel %vm772, %v1344, %v1384
        %v1393 = vsel %vm772, %v1348, %v1386
        %v1394 = vsel %vm772, %v1352, %v1388
        %v1401 = vmax.f32 %v1300, %v1389
        %v1402 = vmax.f32 %v1303, %v1390
        %v1403 = vmax.f32 %v1306, %v1391
        %v1404 = vmax.f32 %v1309, %v1392
        %v1405 = vmax.f32 %v1312, %v1393
        %v1406 = vmax.f32 %v1315, %v1394
        %1413 = vrot.lane.b32.xlu0 %v1401, 112
        %v1414 = vpop.permute.xlu0 %1413
        %1415 = vrot.lane.b32.xlu0 %v1402, 112
        %v1416 = vpop.permute.xlu0 %1415
        %1417 = vrot.lane.b32.xlu0 %v1403, 112
        %v1418 = vpop.permute.xlu0 %1417
        %1419 = vrot.lane.b32.xlu0 %v1404, 112
        %v1420 = vpop.permute.xlu0 %1419
        %1421 = vrot.lane.b32.xlu0 %v1405, 112
        %v1422 = vpop.permute.xlu0 %1421
        %1423 = vrot.lane.b32.xlu0 %v1406, 112
        %v1424 = vpop.permute.xlu0 %1423
        %v1431 = vmax.f32 %v1365, %v1414
        %v1432 = vmax.f32 %v1366, %v1416
        %v1433 = vmax.f32 %v1367, %v1418
        %v1434 = vmax.f32 %v1368, %v1420
        %v1435 = vmax.f32 %v1369, %v1422
        %v1436 = vmax.f32 %v1370, %v1424
        %v1443 = vcombine.high %v1431, %v1431
        %v1445 = vunpack.c.l.s4 1983009808
        %v1446 = vunpack.c.0.s8 %v1445
        %v1447 = vlaneseq
        %v1448 = vshrl.u32 %v1447, 7
        %v1449 = vsub.s32 %v1446, %v1448
        %v1450 = vrot.slane %v1431, %v1449
        %v1452 = vunpack.c.l.s4 1983009808
        %v1453 = vunpack.c.0.s8 %v1452
        %v1454 = vlaneseq
        %v1455 = vshrl.u32 %v1454, 7
        %v1456 = vsub.s32 %v1453, %v1455
        %v1457 = vrot.slane %v1443, %v1456
        %v1458 = vcombine.high %v1450, %v1450
        %v1459 = vcombine.high %v1457, %v1457
        %v1460 = vcombine.high %v1432, %v1432
        %v1462 = vunpack.c.l.s4 1983009808
        %v1463 = vunpack.c.0.s8 %v1462
        %v1464 = vlaneseq
        %v1465 = vshrl.u32 %v1464, 7
        %v1466 = vsub.s32 %v1463, %v1465
        %v1467 = vrot.slane %v1432, %v1466
        %v1469 = vunpack.c.l.s4 1983009808
        %v1470 = vunpack.c.0.s8 %v1469
        %v1471 = vlaneseq
        %v1472 = vshrl.u32 %v1471, 7
        %v1473 = vsub.s32 %v1470, %v1472
        %v1474 = vrot.slane %v1460, %v1473
        %v1475 = vcombine.high %v1467, %v1467
        %v1476 = vcombine.high %v1474, %v1474
        %v1477 = vcombine.high %v1433, %v1433
        %v1479 = vunpack.c.l.s4 1983009808
        %v1480 = vunpack.c.0.s8 %v1479
        %v1481 = vlaneseq
        %v1482 = vshrl.u32 %v1481, 7
        %v1483 = vsub.s32 %v1480, %v1482
        %v1484 = vrot.slane %v1433, %v1483
        %v1486 = vunpack.c.l.s4 1983009808
        %v1487 = vunpack.c.0.s8 %v1486
        %v1488 = vlaneseq
        %v1489 = vshrl.u32 %v1488, 7
        %v1490 = vsub.s32 %v1487, %v1489
        %v1491 = vrot.slane %v1477, %v1490
        %v1492 = vcombine.high %v1484, %v1484
        %v1493 = vcombine.high %v1491, %v1491
        %v1494 = vcombine.high %v1434, %v1434
        %v1496 = vunpack.c.l.s4 1983009808
        %v1497 = vunpack.c.0.s8 %v1496
        %v1498 = vlaneseq
        %v1499 = vshrl.u32 %v1498, 7
        %v1500 = vsub.s32 %v1497, %v1499
        %v1501 = vrot.slane %v1434, %v1500
        %v1503 = vunpack.c.l.s4 1983009808
        %v1504 = vunpack.c.0.s8 %v1503
        %v1505 = vlaneseq
        %v1506 = vshrl.u32 %v1505, 7
        %v1507 = vsub.s32 %v1504, %v1506
        %v1508 = vrot.slane %v1494, %v1507
        %v1509 = vcombine.high %v1501, %v1501
        %v1510 = vcombine.high %v1508, %v1508
        %v1511 = vcombine.high %v1435, %v1435
        %v1513 = vunpack.c.l.s4 1983009808
        %v1514 = vunpack.c.0.s8 %v1513
        %v1515 = vlaneseq
        %v1516 = vshrl.u32 %v1515, 7
        %v1517 = vsub.s32 %v1514, %v1516
        %v1518 = vrot.slane %v1435, %v1517
        %v1520 = vunpack.c.l.s4 1983009808
        %v1521 = vunpack.c.0.s8 %v1520
        %v1522 = vlaneseq
        %v1523 = vshrl.u32 %v1522, 7
        %v1524 = vsub.s32 %v1521, %v1523
        %v1525 = vrot.slane %v1511, %v1524
        %v1526 = vcombine.high %v1518, %v1518
        %v1527 = vcombine.high %v1525, %v1525
        %v1528 = vcombine.high %v1436, %v1436
        %v1530 = vunpack.c.l.s4 1983009808
        %v1531 = vunpack.c.0.s8 %v1530
        %v1532 = vlaneseq
        %v1533 = vshrl.u32 %v1532, 7
        %v1534 = vsub.s32 %v1531, %v1533
        %v1535 = vrot.slane %v1436, %v1534
        %v1537 = vunpack.c.l.s4 1983009808
        %v1538 = vunpack.c.0.s8 %v1537
        %v1539 = vlaneseq
        %v1540 = vshrl.u32 %v1539, 7
        %v1541 = vsub.s32 %v1538, %v1540
        %v1542 = vrot.slane %v1528, %v1541
        %v1543 = vcombine.high %v1535, %v1535
        %v1544 = vcombine.high %v1542, %v1542
        %1545 = vrot.lane.b32.xlu0 %v393, 28
        %v1546 = vpop.permute.xlu0 %1545
        %1547 = vrot.lane.b32.xlu0 %v397, 28
        %v1548 = vpop.permute.xlu0 %1547
        %1549 = vrot.lane.b32.xlu0 %v401, 28
        %v1550 = vpop.permute.xlu0 %1549
        %1551 = vrot.lane.b32.xlu0 %v405, 28
        %v1552 = vpop.permute.xlu0 %1551
        %1553 = vrot.lane.b32.xlu0 %v409, 28
        %v1554 = vpop.permute.xlu0 %1553
        %1555 = vrot.lane.b32.xlu0 %v413, 28
        %v1556 = vpop.permute.xlu0 %1555
        %1557 = vrot.lane.b32.xlu0 %v417, 28
        %v1558 = vpop.permute.xlu0 %1557
        %1559 = vrot.lane.b32.xlu0 %v421, 28
        %v1560 = vpop.permute.xlu0 %1559
        %1569 = vrot.lane.b32.xlu0 %v699, 56
        %v1570 = vpop.permute.xlu0 %1569
        %1571 = vrot.lane.b32.xlu0 %v700, 56
        %v1572 = vpop.permute.xlu0 %1571
        %1573 = vrot.lane.b32.xlu0 %v701, 56
        %v1574 = vpop.permute.xlu0 %1573
        %1575 = vrot.lane.b32.xlu0 %v702, 56
        %v1576 = vpop.permute.xlu0 %1575
        %1577 = vrot.lane.b32.xlu0 %v703, 56
        %v1578 = vpop.permute.xlu0 %1577
        %1579 = vrot.lane.b32.xlu0 %v704, 56
        %v1580 = vpop.permute.xlu0 %1579
        %1581 = vrot.lane.b32.xlu0 %v705, 56
        %v1582 = vpop.permute.xlu0 %1581
        %1583 = vrot.lane.b32.xlu0 %v706, 56
        %v1584 = vpop.permute.xlu0 %1583
        %1593 = vrot.lane.b32.xlu0 %v731, 84
        %v1594 = vpop.permute.xlu0 %1593
        %1595 = vrot.lane.b32.xlu0 %v732, 84
        %v1596 = vpop.permute.xlu0 %1595
        %1597 = vrot.lane.b32.xlu0 %v733, 84
        %v1598 = vpop.permute.xlu0 %1597
        %1599 = vrot.lane.b32.xlu0 %v734, 84
        %v1600 = vpop.permute.xlu0 %1599
        %1601 = vrot.lane.b32.xlu0 %v735, 84
        %v1602 = vpop.permute.xlu0 %1601
        %1603 = vrot.lane.b32.xlu0 %v736, 84
        %v1604 = vpop.permute.xlu0 %1603
        %1605 = vrot.lane.b32.xlu0 %v737, 84
        %v1606 = vpop.permute.xlu0 %1605
        %1607 = vrot.lane.b32.xlu0 %v738, 84
        %v1608 = vpop.permute.xlu0 %1607
        %v1617 = vrot.slane %v392, 1
        %v1618 = vrot.slane %v396, 1
        %v1619 = vrot.slane %v400, 1
        %v1620 = vrot.slane %v404, 1
        %v1621 = vrot.slane %v408, 1
        %v1622 = vrot.slane %v412, 1
        %v1623 = vrot.slane %v416, 1
        %v1624 = vrot.slane %v420, 1
        %1625 = vrot.lane.b32.xlu0 %v1617, 112
        %v1626 = vpop.permute.xlu0 %1625
        %1627 = vrot.lane.b32.xlu0 %v1618, 112
        %v1628 = vpop.permute.xlu0 %1627
        %1629 = vrot.lane.b32.xlu0 %v1619, 112
        %v1630 = vpop.permute.xlu0 %1629
        %1631 = vrot.lane.b32.xlu0 %v1620, 112
        %v1632 = vpop.permute.xlu0 %1631
        %1633 = vrot.lane.b32.xlu0 %v1621, 112
        %v1634 = vpop.permute.xlu0 %1633
        %1635 = vrot.lane.b32.xlu0 %v1622, 112
        %v1636 = vpop.permute.xlu0 %1635
        %1637 = vrot.lane.b32.xlu0 %v1623, 112
        %v1638 = vpop.permute.xlu0 %1637
        %1639 = vrot.lane.b32.xlu0 %v1624, 112
        %v1640 = vpop.permute.xlu0 %1639
        %v1649 = vrot.slane %v393, 1
        %v1650 = vrot.slane %v397, 1
        %v1651 = vrot.slane %v401, 1
        %v1652 = vrot.slane %v405, 1
        %v1653 = vrot.slane %v409, 1
        %v1654 = vrot.slane %v413, 1
        %v1655 = vrot.slane %v417, 1
        %v1656 = vrot.slane %v421, 1
        %1657 = vrot.lane.b32.xlu0 %v1649, 12
        %v1658 = vpop.permute.xlu0 %1657
        %1659 = vrot.lane.b32.xlu0 %v1650, 12
        %v1660 = vpop.permute.xlu0 %1659
        %1661 = vrot.lane.b32.xlu0 %v1651, 12
        %v1662 = vpop.permute.xlu0 %1661
        %1663 = vrot.lane.b32.xlu0 %v1652, 12
        %v1664 = vpop.permute.xlu0 %1663
        %1665 = vrot.lane.b32.xlu0 %v1653, 12
        %v1666 = vpop.permute.xlu0 %1665
        %1667 = vrot.lane.b32.xlu0 %v1654, 12
        %v1668 = vpop.permute.xlu0 %1667
        %1669 = vrot.lane.b32.xlu0 %v1655, 12
        %v1670 = vpop.permute.xlu0 %1669
        %1671 = vrot.lane.b32.xlu0 %v1656, 12
        %v1672 = vpop.permute.xlu0 %1671
        %v1681 = vsel %vm763, %v392, %v1546
        %v1682 = vsel %vm763, %v396, %v1548
        %v1683 = vsel %vm763, %v400, %v1550
        %v1684 = vsel %vm763, %v404, %v1552
        %v1685 = vsel %vm763, %v408, %v1554
        %v1686 = vsel %vm763, %v412, %v1556
        %v1687 = vsel %vm763, %v416, %v1558
        %v1688 = vsel %vm763, %v420, %v1560
        %v1689 = vsel %vm772, %v1681, %v1570
        %v1690 = vsel %vm772, %v1682, %v1572
        %v1691 = vsel %vm772, %v1683, %v1574
        %v1692 = vsel %vm772, %v1684, %v1576
        %v1693 = vsel %vm772, %v1685, %v1578
        %v1694 = vsel %vm772, %v1686, %v1580
        %v1695 = vsel %vm772, %v1687, %v1582
        %v1696 = vsel %vm772, %v1688, %v1584
        %v1697 = vsel %vm781, %v1689, %v1594
        %v1698 = vsel %vm781, %v1690, %v1596
        %v1699 = vsel %vm781, %v1691, %v1598
        %v1700 = vsel %vm781, %v1692, %v1600
        %v1701 = vsel %vm781, %v1693, %v1602
        %v1702 = vsel %vm781, %v1694, %v1604
        %v1703 = vsel %vm781, %v1695, %v1606
        %v1704 = vsel %vm781, %v1696, %v1608
        %v1705 = vsel %vm790, %v1697, %v1626
        %v1706 = vsel %vm790, %v1698, %v1628
        %v1707 = vsel %vm790, %v1699, %v1630
        %v1708 = vsel %vm790, %v1700, %v1632
        %v1709 = vsel %vm790, %v1701, %v1634
        %v1710 = vsel %vm790, %v1702, %v1636
        %v1711 = vsel %vm790, %v1703, %v1638
        %v1712 = vsel %vm790, %v1704, %v1640
        %v1713 = vsel %vm799, %v1626, %v1658
        %v1714 = vsel %vm799, %v1628, %v1660
        %v1715 = vsel %vm799, %v1630, %v1662
        %v1716 = vsel %vm799, %v1632, %v1664
        %v1717 = vsel %vm799, %v1634, %v1666
        %v1718 = vsel %vm799, %v1636, %v1668
        %v1719 = vsel %vm799, %v1638, %v1670
        %v1720 = vsel %vm799, %v1640, %v1672
        %v1737 = vcombine.low %v1705, %v1713
        %v1738 = vcombine.high %v1705, %v1713
        %v1740 = vunpack.c.l.s4 1983009808
        %v1741 = vunpack.c.0.s8 %v1740
        %v1742 = vlaneseq
        %v1743 = vshrl.u32 %v1742, 7
        %v1744 = vsub.s32 %v1741, %v1743
        %v1745 = vrot.slane %v1737, %v1744
        %v1747 = vunpack.c.l.s4 1983009808
        %v1748 = vunpack.c.0.s8 %v1747
        %v1749 = vlaneseq
        %v1750 = vshrl.u32 %v1749, 7
        %v1751 = vsub.s32 %v1748, %v1750
        %v1752 = vrot.slane %v1738, %v1751
        %v1753 = vcombine.high %v1745, %v1745
        %v1754 = vcombine.low %v1706, %v1714
        %v1755 = vcombine.high %v1706, %v1714
        %v1757 = vunpack.c.l.s4 1983009808
        %v1758 = vunpack.c.0.s8 %v1757
        %v1759 = vlaneseq
        %v1760 = vshrl.u32 %v1759, 7
        %v1761 = vsub.s32 %v1758, %v1760
        %v1762 = vrot.slane %v1754, %v1761
        %v1764 = vunpack.c.l.s4 1983009808
        %v1765 = vunpack.c.0.s8 %v1764
        %v1766 = vlaneseq
        %v1767 = vshrl.u32 %v1766, 7
        %v1768 = vsub.s32 %v1765, %v1767
        %v1769 = vrot.slane %v1755, %v1768
        %v1770 = vcombine.high %v1762, %v1762
        %v1771 = vcombine.low %v1707, %v1715
        %v1772 = vcombine.high %v1707, %v1715
        %v1774 = vunpack.c.l.s4 1983009808
        %v1775 = vunpack.c.0.s8 %v1774
        %v1776 = vlaneseq
        %v1777 = vshrl.u32 %v1776, 7
        %v1778 = vsub.s32 %v1775, %v1777
        %v1779 = vrot.slane %v1771, %v1778
        %v1781 = vunpack.c.l.s4 1983009808
        %v1782 = vunpack.c.0.s8 %v1781
        %v1783 = vlaneseq
        %v1784 = vshrl.u32 %v1783, 7
        %v1785 = vsub.s32 %v1782, %v1784
        %v1786 = vrot.slane %v1772, %v1785
        %v1787 = vcombine.high %v1779, %v1779
        %v1788 = vcombine.low %v1708, %v1716
        %v1789 = vcombine.high %v1708, %v1716
        %v1791 = vunpack.c.l.s4 1983009808
        %v1792 = vunpack.c.0.s8 %v1791
        %v1793 = vlaneseq
        %v1794 = vshrl.u32 %v1793, 7
        %v1795 = vsub.s32 %v1792, %v1794
        %v1796 = vrot.slane %v1788, %v1795
        %v1798 = vunpack.c.l.s4 1983009808
        %v1799 = vunpack.c.0.s8 %v1798
        %v1800 = vlaneseq
        %v1801 = vshrl.u32 %v1800, 7
        %v1802 = vsub.s32 %v1799, %v1801
        %v1803 = vrot.slane %v1789, %v1802
        %v1804 = vcombine.high %v1796, %v1796
        %v1805 = vcombine.low %v1709, %v1717
        %v1806 = vcombine.high %v1709, %v1717
        %v1808 = vunpack.c.l.s4 1983009808
        %v1809 = vunpack.c.0.s8 %v1808
        %v1810 = vlaneseq
        %v1811 = vshrl.u32 %v1810, 7
        %v1812 = vsub.s32 %v1809, %v1811
        %v1813 = vrot.slane %v1805, %v1812
        %v1815 = vunpack.c.l.s4 1983009808
        %v1816 = vunpack.c.0.s8 %v1815
        %v1817 = vlaneseq
        %v1818 = vshrl.u32 %v1817, 7
        %v1819 = vsub.s32 %v1816, %v1818
        %v1820 = vrot.slane %v1806, %v1819
        %v1821 = vcombine.high %v1813, %v1813
        %v1822 = vcombine.low %v1710, %v1718
        %v1823 = vcombine.high %v1710, %v1718
        %v1825 = vunpack.c.l.s4 1983009808
        %v1826 = vunpack.c.0.s8 %v1825
        %v1827 = vlaneseq
        %v1828 = vshrl.u32 %v1827, 7
        %v1829 = vsub.s32 %v1826, %v1828
        %v1830 = vrot.slane %v1822, %v1829
        %v1832 = vunpack.c.l.s4 1983009808
        %v1833 = vunpack.c.0.s8 %v1832
        %v1834 = vlaneseq
        %v1835 = vshrl.u32 %v1834, 7
        %v1836 = vsub.s32 %v1833, %v1835
        %v1837 = vrot.slane %v1823, %v1836
        %v1838 = vcombine.high %v1830, %v1830
        %v1839 = vcombine.low %v1711, %v1719
        %v1840 = vcombine.high %v1711, %v1719
        %v1842 = vunpack.c.l.s4 1983009808
        %v1843 = vunpack.c.0.s8 %v1842
        %v1844 = vlaneseq
        %v1845 = vshrl.u32 %v1844, 7
        %v1846 = vsub.s32 %v1843, %v1845
        %v1847 = vrot.slane %v1839, %v1846
        %v1849 = vunpack.c.l.s4 1983009808
        %v1850 = vunpack.c.0.s8 %v1849
        %v1851 = vlaneseq
        %v1852 = vshrl.u32 %v1851, 7
        %v1853 = vsub.s32 %v1850, %v1852
        %v1854 = vrot.slane %v1840, %v1853
        %v1855 = vcombine.high %v1847, %v1847
        %v1856 = vcombine.low %v1712, %v1720
        %v1857 = vcombine.high %v1712, %v1720
        %v1859 = vunpack.c.l.s4 1983009808
        %v1860 = vunpack.c.0.s8 %v1859
        %v1861 = vlaneseq
        %v1862 = vshrl.u32 %v1861, 7
        %v1863 = vsub.s32 %v1860, %v1862
        %v1864 = vrot.slane %v1856, %v1863
        %v1866 = vunpack.c.l.s4 1983009808
        %v1867 = vunpack.c.0.s8 %v1866
        %v1868 = vlaneseq
        %v1869 = vshrl.u32 %v1868, 7
        %v1870 = vsub.s32 %v1867, %v1869
        %v1871 = vrot.slane %v1857, %v1870
        %v1872 = vcombine.high %v1864, %v1864
        %v1873 = vcombine.low %v1745, %v1753
        %v1874 = vcombine.low %v1752, %v1762
        %v1876 = vunpack.c.l.s4 1983009808
        %v1877 = vunpack.c.0.s8 %v1876
        %v1878 = vlaneseq
        %v1879 = vshrl.u32 %v1878, 7
        %v1880 = vsub.s32 %v1877, %v1879
        %v1881 = vrot.slane %v1873, %v1880
        %v1883 = vunpack.c.l.s4 1983009808
        %v1884 = vunpack.c.0.s8 %v1883
        %v1885 = vlaneseq
        %v1886 = vshrl.u32 %v1885, 7
        %v1887 = vsub.s32 %v1884, %v1886
        %v1888 = vrot.slane %v1874, %v1887
        %v1889 = vcombine.low %v1881, %v1888
        %v1890 = vcombine.high %v1881, %v1888
        %v1891 = vcombine.low %v1770, %v1769
        %v1892 = vcombine.low %v1779, %v1787
        %v1894 = vunpack.c.l.s4 1983009808
        %v1895 = vunpack.c.0.s8 %v1894
        %v1896 = vlaneseq
        %v1897 = vshrl.u32 %v1896, 7
        %v1898 = vsub.s32 %v1895, %v1897
        %v1899 = vrot.slane %v1891, %v1898
        %v1901 = vunpack.c.l.s4 1983009808
        %v1902 = vunpack.c.0.s8 %v1901
        %v1903 = vlaneseq
        %v1904 = vshrl.u32 %v1903, 7
        %v1905 = vsub.s32 %v1902, %v1904
        %v1906 = vrot.slane %v1892, %v1905
        %v1907 = vcombine.low %v1899, %v1906
        %v1908 = vcombine.high %v1899, %v1906
        %v1909 = vcombine.low %v1786, %v1796
        %v1910 = vcombine.low %v1804, %v1803
        %v1912 = vunpack.c.l.s4 1983009808
        %v1913 = vunpack.c.0.s8 %v1912
        %v1914 = vlaneseq
        %v1915 = vshrl.u32 %v1914, 7
        %v1916 = vsub.s32 %v1913, %v1915
        %v1917 = vrot.slane %v1909, %v1916
        %v1919 = vunpack.c.l.s4 1983009808
        %v1920 = vunpack.c.0.s8 %v1919
        %v1921 = vlaneseq
        %v1922 = vshrl.u32 %v1921, 7
        %v1923 = vsub.s32 %v1920, %v1922
        %v1924 = vrot.slane %v1910, %v1923
        %v1925 = vcombine.low %v1917, %v1924
        %v1926 = vcombine.high %v1917, %v1924
        %v1927 = vcombine.low %v1813, %v1821
        %v1928 = vcombine.low %v1820, %v1830
        %v1930 = vunpack.c.l.s4 1983009808
        %v1931 = vunpack.c.0.s8 %v1930
        %v1932 = vlaneseq
        %v1933 = vshrl.u32 %v1932, 7
        %v1934 = vsub.s32 %v1931, %v1933
        %v1935 = vrot.slane %v1927, %v1934
        %v1937 = vunpack.c.l.s4 1983009808
        %v1938 = vunpack.c.0.s8 %v1937
        %v1939 = vlaneseq
        %v1940 = vshrl.u32 %v1939, 7
        %v1941 = vsub.s32 %v1938, %v1940
        %v1942 = vrot.slane %v1928, %v1941
        %v1943 = vcombine.low %v1935, %v1942
        %v1944 = vcombine.high %v1935, %v1942
        %v1945 = vcombine.low %v1838, %v1837
        %v1946 = vcombine.low %v1847, %v1855
        %v1948 = vunpack.c.l.s4 1983009808
        %v1949 = vunpack.c.0.s8 %v1948
        %v1950 = vlaneseq
        %v1951 = vshrl.u32 %v1950, 7
        %v1952 = vsub.s32 %v1949, %v1951
        %v1953 = vrot.slane %v1945, %v1952
        %v1955 = vunpack.c.l.s4 1983009808
        %v1956 = vunpack.c.0.s8 %v1955
        %v1957 = vlaneseq
        %v1958 = vshrl.u32 %v1957, 7
        %v1959 = vsub.s32 %v1956, %v1958
        %v1960 = vrot.slane %v1946, %v1959
        %v1961 = vcombine.low %v1953, %v1960
        %v1962 = vcombine.high %v1953, %v1960
        %v1963 = vcombine.low %v1854, %v1864
        %v1964 = vcombine.low %v1872, %v1871
        %v1966 = vunpack.c.l.s4 1983009808
        %v1967 = vunpack.c.0.s8 %v1966
        %v1968 = vlaneseq
        %v1969 = vshrl.u32 %v1968, 7
        %v1970 = vsub.s32 %v1967, %v1969
        %v1971 = vrot.slane %v1963, %v1970
        %v1973 = vunpack.c.l.s4 1983009808
        %v1974 = vunpack.c.0.s8 %v1973
        %v1975 = vlaneseq
        %v1976 = vshrl.u32 %v1975, 7
        %v1977 = vsub.s32 %v1974, %v1976
        %v1978 = vrot.slane %v1964, %v1977
        %v1979 = vcombine.low %v1971, %v1978
        %v1980 = vcombine.high %v1971, %v1978
        %v1987 = vsel %vm1090, %v1890, 0
        %v1989 = vsel %vm1090, %v1908, 0
        %v1991 = vsel %vm1090, %v1926, 0
        %v1993 = vsel %vm1090, %v1944, 0
        %v1995 = vsel %vm1090, %v1962, 0
        %v1997 = vsel %vm1090, %v1980, 0
        %1999 = vmatprep.subr.mxu0 %v468
        %2000 = vmatpush1.msra.mxu0 %v467
        %2001 = vmatprep.subr.mxu0 %v465
        %2002 = vmatpush1.msra.mxu0 %v464
        %2003 = vmatprep.subr.mxu0 %v462
        %2004 = vmatpush1.msra.mxu0 %v461
        %2005 = vmatprep.subr.mxu0 %v459
        %2006 = vmatpush1.msra.mxu0 %v458
        %2007 = vmatprep.subr.mxu0 %v456
        %2008 = vmatpush1.msra.mxu0 %v455
        %2009 = vmatprep.subr.mxu0 %v453
        %2010 = vmatpush1.msra.mxu0 %v452
        %2011 = vmatprep.subr.mxu0 %v450
        %2012 = vmatpush1.msra.mxu0 %v449
        %2013 = vmatprep.subr.mxu0 %v447
        %2014 = vmatpush1.msra.mxu0 %v446
        %2015 = vmatprep.subr.mxu0 %v444
        %2016 = vmatpush1.msra.mxu0 %v443
        %2017 = vmatprep.subr.mxu0 %v441
        %2018 = vmatpush1.msra.mxu0 %v440
        %2019 = vmatprep.subr.mxu0 %v438
        %2020 = vmatpush1.msra.mxu0 %v437
        %2021 = vmatprep.subr.mxu0 %v435
        %2022 = vmatpush1.msra.mxu0 %v434
        %2023 = vmatprep.subr.mxu0 %v432
        %2024 = vmatpush1.msra.mxu0 %v431
        %2025 = vmatprep.subr.mxu0 %v429
        %2026 = vmatpush1.msra.mxu0 %v428
        %2027 = vmatprep.subr.mxu0 %v426
        %2028 = vmatpush1.msra.mxu0 %v425
        %2029 = vmatprep.subr.mxu0 %v423
        %2030 = vmatpush1.msra.mxu0 %v422
        %2031 = vmatprep.subr.mxu0 0.0
        %2032 = vmatpush2.msra.mxu0 0.0
        %2033 = vmatprep.subr.mxu0 0.0
        %2034 = vmatpush2.msra.mxu0 0.0
        %2035 = vmatprep.subr.mxu0 0.0
        %2036 = vmatpush2.msra.mxu0 0.0
        %2037 = vmatprep.subr.mxu0 0.0
        %2038 = vmatpush2.msra.mxu0 0.0
        %2039 = vmatprep.subr.mxu0 0.0
        %2040 = vmatpush2.msra.mxu0 0.0
        %2041 = vmatprep.subr.mxu0 0.0
        %2042 = vmatpush2.msra.mxu0 0.0
        %2043 = vmatprep.subr.mxu0 0.0
        %2044 = vmatpush2.msra.mxu0 0.0
        %2045 = vmatprep.subr.mxu0 0.0
        %2046 = vmatpush2.msra.mxu0 0.0
        %2047 = vmatprep.subr.mxu0 0.0
        %2048 = vmatpush2.msra.mxu0 0.0
        %2049 = vmatprep.subr.mxu0 0.0
        %2050 = vmatpush2.msra.mxu0 0.0
        %2051 = vmatprep.subr.mxu0 0.0
        %2052 = vmatpush2.msra.mxu0 0.0
        %2053 = vmatprep.subr.mxu0 %v483
        %2054 = vmatpush2.msra.mxu0 %v482
        %2055 = vmatprep.subr.mxu0 %v480
        %2056 = vmatpush2.msra.mxu0 %v479
        %2057 = vmatprep.subr.mxu0 %v477
        %2058 = vmatpush2.msra.mxu0 %v476
        %2059 = vmatprep.subr.mxu0 %v474
        %2060 = vmatpush2.msra.mxu0 %v473
        %2061 = vmatprep.subr.mxu0 %v471
        %2062 = vmatpush2.msra.mxu0 %v470
        %2063 = vmatprep.mubr.f32.mxu0 %v1987
        %2064 = vmatmul.mubr.f32.gmra.mxu0 %v1889
        %v2065 = vpop.f32.mrf.mxu0
        %v2066 = vadd.f32 %v964, %v2065
        %v2067 = vpop.f32.mrf.mxu0
        %v2068 = vadd.f32 %v968, %v2067
        %2069 = vmatprep.mubr.f32.mxu0 %v1989
        %2070 = vmatmul.mubr.f32.gmra.mxu0 %v1907
        %v2071 = vpop.f32.mrf.mxu0
        %v2072 = vadd.f32 %v964, %v2071
        %v2073 = vpop.f32.mrf.mxu0
        %v2074 = vadd.f32 %v968, %v2073
        %2075 = vmatprep.mubr.f32.mxu0 %v1991
        %2076 = vmatmul.mubr.f32.gmra.mxu0 %v1925
        %v2077 = vpop.f32.mrf.mxu0
        %v2078 = vadd.f32 %v964, %v2077
        %v2079 = vpop.f32.mrf.mxu0
        %v2080 = vadd.f32 %v968, %v2079
        %2081 = vmatprep.mubr.f32.mxu0 %v1993
        %2082 = vmatmul.mubr.f32.gmra.mxu0 %v1943
        %v2083 = vpop.f32.mrf.mxu0
        %v2084 = vadd.f32 %v964, %v2083
        %v2085 = vpop.f32.mrf.mxu0
        %v2086 = vadd.f32 %v968, %v2085
        %2087 = vmatprep.mubr.f32.mxu0 %v1995
        %2088 = vmatmul.mubr.f32.gmra.mxu0 %v1961
        %v2089 = vpop.f32.mrf.mxu0
        %v2090 = vadd.f32 %v964, %v2089
        %v2091 = vpop.f32.mrf.mxu0
        %v2092 = vadd.f32 %v968, %v2091
        %2093 = vmatprep.mubr.f32.mxu0 %v1997
        %2094 = vmatmul.mubr.f32.gmra.mxu0 %v1979
        %v2095 = vpop.f32.mrf.mxu0
        %v2096 = vadd.f32 %v964, %v2095
        %v2097 = vpop.f32.mrf.mxu0
        %v2098 = vadd.f32 %v968, %v2097
        %2099 = vdwg.mxu0
        %2100 = vmatprep.subr.mxu0 0.0
        %2101 = vmatpush1.msra.mxu0 %v469
        %2102 = vmatprep.subr.mxu0 0.0
        %2103 = vmatpush1.msra.mxu0 %v466
        %2104 = vmatprep.subr.mxu0 0.0
        %2105 = vmatpush1.msra.mxu0 %v463
        %2106 = vmatprep.subr.mxu0 0.0
        %2107 = vmatpush1.msra.mxu0 %v460
        %2108 = vmatprep.subr.mxu0 0.0
        %2109 = vmatpush1.msra.mxu0 %v457
        %2110 = vmatprep.subr.mxu0 0.0
        %2111 = vmatpush1.msra.mxu0 %v454
        %2112 = vmatprep.subr.mxu0 0.0
        %2113 = vmatpush1.msra.mxu0 %v451
        %2114 = vmatprep.subr.mxu0 0.0
        %2115 = vmatpush1.msra.mxu0 %v448
        %2116 = vmatprep.subr.mxu0 0.0
        %2117 = vmatpush1.msra.mxu0 %v445
        %2118 = vmatprep.subr.mxu0 0.0
        %2119 = vmatpush1.msra.mxu0 %v442
        %2120 = vmatprep.subr.mxu0 0.0
        %2121 = vmatpush1.msra.mxu0 %v439
        %2122 = vmatprep.subr.mxu0 0.0
        %2123 = vmatpush1.msra.mxu0 %v436
        %2124 = vmatprep.subr.mxu0 0.0
        %2125 = vmatpush1.msra.mxu0 %v433
        %2126 = vmatprep.subr.mxu0 0.0
        %2127 = vmatpush1.msra.mxu0 %v430
        %2128 = vmatprep.subr.mxu0 0.0
        %2129 = vmatpush1.msra.mxu0 %v427
        %2130 = vmatprep.subr.mxu0 0.0
        %2131 = vmatpush1.msra.mxu0 %v424
        %2132 = vmatprep.subr.mxu0 0.0
        %2133 = vmatpush2.msra.mxu0 0.0
        %2134 = vmatprep.subr.mxu0 0.0
        %2135 = vmatpush2.msra.mxu0 0.0
        %2136 = vmatprep.subr.mxu0 0.0
        %2137 = vmatpush2.msra.mxu0 0.0
        %2138 = vmatprep.subr.mxu0 0.0
        %2139 = vmatpush2.msra.mxu0 0.0
        %2140 = vmatprep.subr.mxu0 0.0
        %2141 = vmatpush2.msra.mxu0 0.0
        %2142 = vmatprep.subr.mxu0 0.0
        %2143 = vmatpush2.msra.mxu0 0.0
        %2144 = vmatprep.subr.mxu0 0.0
        %2145 = vmatpush2.msra.mxu0 0.0
        %2146 = vmatprep.subr.mxu0 0.0
        %2147 = vmatpush2.msra.mxu0 0.0
        %2148 = vmatprep.subr.mxu0 0.0
        %2149 = vmatpush2.msra.mxu0 0.0
        %2150 = vmatprep.subr.mxu0 0.0
        %2151 = vmatpush2.msra.mxu0 0.0
        %2152 = vmatprep.subr.mxu0 0.0
        %2153 = vmatpush2.msra.mxu0 0.0
        %2154 = vmatprep.subr.mxu0 0.0
        %2155 = vmatpush2.msra.mxu0 %v484
        %2156 = vmatprep.subr.mxu0 0.0
        %2157 = vmatpush2.msra.mxu0 %v481
        %2158 = vmatprep.subr.mxu0 0.0
        %2159 = vmatpush2.msra.mxu0 %v478
        %2160 = vmatprep.subr.mxu0 0.0
        %2161 = vmatpush2.msra.mxu0 %v475
        %2162 = vmatprep.subr.mxu0 0.0
        %2163 = vmatpush2.msra.mxu0 %v472
        %2164 = vmatprep.mubr.f32.mxu0 %v1987
        %2165 = vmatmul.mubr.f32.gmra.mxu0 %v1889
        %v2166 = vpop.f32.mrf.mxu0
        %v2167 = vadd.f32 %v972, %v2166
        %v2168 = vpop.f32.mrf.mxu0
        %2169 = vmatprep.mubr.f32.mxu0 %v1989
        %2170 = vmatmul.mubr.f32.gmra.mxu0 %v1907
        %v2171 = vpop.f32.mrf.mxu0
        %v2172 = vadd.f32 %v972, %v2171
        %v2173 = vpop.f32.mrf.mxu0
        %2174 = vmatprep.mubr.f32.mxu0 %v1991
        %2175 = vmatmul.mubr.f32.gmra.mxu0 %v1925
        %v2176 = vpop.f32.mrf.mxu0
        %v2177 = vadd.f32 %v972, %v2176
        %v2178 = vpop.f32.mrf.mxu0
        %2179 = vmatprep.mubr.f32.mxu0 %v1993
        %2180 = vmatmul.mubr.f32.gmra.mxu0 %v1943
        %v2181 = vpop.f32.mrf.mxu0
        %v2182 = vadd.f32 %v972, %v2181
        %v2183 = vpop.f32.mrf.mxu0
        %2184 = vmatprep.mubr.f32.mxu0 %v1995
        %2185 = vmatmul.mubr.f32.gmra.mxu0 %v1961
        %v2186 = vpop.f32.mrf.mxu0
        %v2187 = vadd.f32 %v972, %v2186
        %v2188 = vpop.f32.mrf.mxu0
        %2189 = vmatprep.mubr.f32.mxu0 %v1997
        %2190 = vmatmul.mubr.f32.gmra.mxu0 %v1979
        %v2191 = vpop.f32.mrf.mxu0
        %v2192 = vadd.f32 %v972, %v2191
        %v2193 = vpop.f32.mrf.mxu0
        %2194 = vdwg.mxu0
        %v2195 = vmax.f32 %v2066, 0.0
        %v2196 = vmax.f32 %v2068, 0.0
        %v2197 = vmax.f32 %v2167, 0.0
        %v2198 = vmax.f32 %v2072, 0.0
        %v2199 = vmax.f32 %v2074, 0.0
        %v2200 = vmax.f32 %v2172, 0.0
        %v2201 = vmax.f32 %v2078, 0.0
        %v2202 = vmax.f32 %v2080, 0.0
        %v2203 = vmax.f32 %v2177, 0.0
        %v2204 = vmax.f32 %v2084, 0.0
        %v2205 = vmax.f32 %v2086, 0.0
        %v2206 = vmax.f32 %v2182, 0.0
        %v2207 = vmax.f32 %v2090, 0.0
        %v2208 = vmax.f32 %v2092, 0.0
        %v2209 = vmax.f32 %v2187, 0.0
        %v2210 = vmax.f32 %v2096, 0.0
        %v2211 = vmax.f32 %v2098, 0.0
        %v2212 = vmax.f32 %v2192, 0.0
        %2225 = vrot.lane.b32.xlu0 %v2195, 56
        %v2226 = vpop.permute.xlu0 %2225
        %2227 = vrot.lane.b32.xlu0 %v2196, 56
        %v2228 = vpop.permute.xlu0 %2227
        %2229 = vrot.lane.b32.xlu0 %v2198, 56
        %v2230 = vpop.permute.xlu0 %2229
        %2231 = vrot.lane.b32.xlu0 %v2199, 56
        %v2232 = vpop.permute.xlu0 %2231
        %2233 = vrot.lane.b32.xlu0 %v2201, 56
        %v2234 = vpop.permute.xlu0 %2233
        %2235 = vrot.lane.b32.xlu0 %v2202, 56
        %v2236 = vpop.permute.xlu0 %2235
        %2237 = vrot.lane.b32.xlu0 %v2204, 56
        %v2238 = vpop.permute.xlu0 %2237
        %2239 = vrot.lane.b32.xlu0 %v2205, 56
        %v2240 = vpop.permute.xlu0 %2239
        %2241 = vrot.lane.b32.xlu0 %v2207, 56
        %v2242 = vpop.permute.xlu0 %2241
        %2243 = vrot.lane.b32.xlu0 %v2208, 56
        %v2244 = vpop.permute.xlu0 %2243
        %2245 = vrot.lane.b32.xlu0 %v2210, 56
        %v2246 = vpop.permute.xlu0 %2245
        %2247 = vrot.lane.b32.xlu0 %v2211, 56
        %v2248 = vpop.permute.xlu0 %2247
        %v2249 = vsel %vm772, %v2226, %v2228
        %v2250 = vsel %vm772, %v2230, %v2232
        %v2251 = vsel %vm772, %v2234, %v2236
        %v2252 = vsel %vm772, %v2238, %v2240
        %v2253 = vsel %vm772, %v2242, %v2244
        %v2254 = vsel %vm772, %v2246, %v2248
        %v2261 = vmax.f32 %v2195, %v2249
        %v2262 = vmax.f32 %v2198, %v2250
        %v2263 = vmax.f32 %v2201, %v2251
        %v2264 = vmax.f32 %v2204, %v2252
        %v2265 = vmax.f32 %v2207, %v2253
        %v2266 = vmax.f32 %v2210, %v2254
        %2273 = vrot.lane.b32.xlu0 %v2197, 56
        %v2274 = vpop.permute.xlu0 %2273
        %2275 = vrot.lane.b32.xlu0 %v2200, 56
        %v2276 = vpop.permute.xlu0 %2275
        %2277 = vrot.lane.b32.xlu0 %v2203, 56
        %v2278 = vpop.permute.xlu0 %2277
        %2279 = vrot.lane.b32.xlu0 %v2206, 56
        %v2280 = vpop.permute.xlu0 %2279
        %2281 = vrot.lane.b32.xlu0 %v2209, 56
        %v2282 = vpop.permute.xlu0 %2281
        %2283 = vrot.lane.b32.xlu0 %v2212, 56
        %v2284 = vpop.permute.xlu0 %2283
        %v2285 = vsel %vm772, %v2228, %v2274
        %v2286 = vsel %vm772, %v2232, %v2276
        %v2287 = vsel %vm772, %v2236, %v2278
        %v2288 = vsel %vm772, %v2240, %v2280
        %v2289 = vsel %vm772, %v2244, %v2282
        %v2290 = vsel %vm772, %v2248, %v2284
        %v2297 = vmax.f32 %v2196, %v2285
        %v2298 = vmax.f32 %v2199, %v2286
        %v2299 = vmax.f32 %v2202, %v2287
        %v2300 = vmax.f32 %v2205, %v2288
        %v2301 = vmax.f32 %v2208, %v2289
        %v2302 = vmax.f32 %v2211, %v2290
        %2309 = vrot.lane.b32.xlu0 %v2297, 112
        %v2310 = vpop.permute.xlu0 %2309
        %2311 = vrot.lane.b32.xlu0 %v2298, 112
        %v2312 = vpop.permute.xlu0 %2311
        %2313 = vrot.lane.b32.xlu0 %v2299, 112
        %v2314 = vpop.permute.xlu0 %2313
        %2315 = vrot.lane.b32.xlu0 %v2300, 112
        %v2316 = vpop.permute.xlu0 %2315
        %2317 = vrot.lane.b32.xlu0 %v2301, 112
        %v2318 = vpop.permute.xlu0 %2317
        %2319 = vrot.lane.b32.xlu0 %v2302, 112
        %v2320 = vpop.permute.xlu0 %2319
        %v2327 = vmax.f32 %v2261, %v2310
        %v2328 = vmax.f32 %v2262, %v2312
        %v2329 = vmax.f32 %v2263, %v2314
        %v2330 = vmax.f32 %v2264, %v2316
        %v2331 = vmax.f32 %v2265, %v2318
        %v2332 = vmax.f32 %v2266, %v2320
        %v2339 = vcombine.high %v2327, %v2327
        %v2341 = vunpack.c.l.s4 1983009808
        %v2342 = vunpack.c.0.s8 %v2341
        %v2343 = vlaneseq
        %v2344 = vshrl.u32 %v2343, 7
        %v2345 = vsub.s32 %v2342, %v2344
        %v2346 = vrot.slane %v2327, %v2345
        %v2348 = vunpack.c.l.s4 1983009808
        %v2349 = vunpack.c.0.s8 %v2348
        %v2350 = vlaneseq
        %v2351 = vshrl.u32 %v2350, 7
        %v2352 = vsub.s32 %v2349, %v2351
        %v2353 = vrot.slane %v2339, %v2352
        %v2354 = vcombine.high %v2346, %v2346
        %v2355 = vcombine.high %v2353, %v2353
        %v2356 = vcombine.high %v2328, %v2328
        %v2358 = vunpack.c.l.s4 1983009808
        %v2359 = vunpack.c.0.s8 %v2358
        %v2360 = vlaneseq
        %v2361 = vshrl.u32 %v2360, 7
        %v2362 = vsub.s32 %v2359, %v2361
        %v2363 = vrot.slane %v2328, %v2362
        %v2365 = vunpack.c.l.s4 1983009808
        %v2366 = vunpack.c.0.s8 %v2365
        %v2367 = vlaneseq
        %v2368 = vshrl.u32 %v2367, 7
        %v2369 = vsub.s32 %v2366, %v2368
        %v2370 = vrot.slane %v2356, %v2369
        %v2371 = vcombine.high %v2363, %v2363
        %v2372 = vcombine.high %v2370, %v2370
        %v2373 = vcombine.high %v2329, %v2329
        %v2375 = vunpack.c.l.s4 1983009808
        %v2376 = vunpack.c.0.s8 %v2375
        %v2377 = vlaneseq
        %v2378 = vshrl.u32 %v2377, 7
        %v2379 = vsub.s32 %v2376, %v2378
        %v2380 = vrot.slane %v2329, %v2379
        %v2382 = vunpack.c.l.s4 1983009808
        %v2383 = vunpack.c.0.s8 %v2382
        %v2384 = vlaneseq
        %v2385 = vshrl.u32 %v2384, 7
        %v2386 = vsub.s32 %v2383, %v2385
        %v2387 = vrot.slane %v2373, %v2386
        %v2388 = vcombine.high %v2380, %v2380
        %v2389 = vcombine.high %v2387, %v2387
        %v2390 = vcombine.high %v2330, %v2330
        %v2392 = vunpack.c.l.s4 1983009808
        %v2393 = vunpack.c.0.s8 %v2392
        %v2394 = vlaneseq
        %v2395 = vshrl.u32 %v2394, 7
        %v2396 = vsub.s32 %v2393, %v2395
        %v2397 = vrot.slane %v2330, %v2396
        %v2399 = vunpack.c.l.s4 1983009808
        %v2400 = vunpack.c.0.s8 %v2399
        %v2401 = vlaneseq
        %v2402 = vshrl.u32 %v2401, 7
        %v2403 = vsub.s32 %v2400, %v2402
        %v2404 = vrot.slane %v2390, %v2403
        %v2405 = vcombine.high %v2397, %v2397
        %v2406 = vcombine.high %v2404, %v2404
        %v2407 = vcombine.high %v2331, %v2331
        %v2409 = vunpack.c.l.s4 1983009808
        %v2410 = vunpack.c.0.s8 %v2409
        %v2411 = vlaneseq
        %v2412 = vshrl.u32 %v2411, 7
        %v2413 = vsub.s32 %v2410, %v2412
        %v2414 = vrot.slane %v2331, %v2413
        %v2416 = vunpack.c.l.s4 1983009808
        %v2417 = vunpack.c.0.s8 %v2416
        %v2418 = vlaneseq
        %v2419 = vshrl.u32 %v2418, 7
        %v2420 = vsub.s32 %v2417, %v2419
        %v2421 = vrot.slane %v2407, %v2420
        %v2422 = vcombine.high %v2414, %v2414
        %v2423 = vcombine.high %v2421, %v2421
        %v2424 = vcombine.high %v2332, %v2332
        %v2426 = vunpack.c.l.s4 1983009808
        %v2427 = vunpack.c.0.s8 %v2426
        %v2428 = vlaneseq
        %v2429 = vshrl.u32 %v2428, 7
        %v2430 = vsub.s32 %v2427, %v2429
        %v2431 = vrot.slane %v2332, %v2430
        %v2433 = vunpack.c.l.s4 1983009808
        %v2434 = vunpack.c.0.s8 %v2433
        %v2435 = vlaneseq
        %v2436 = vshrl.u32 %v2435, 7
        %v2437 = vsub.s32 %v2434, %v2436
        %v2438 = vrot.slane %v2424, %v2437
        %v2439 = vcombine.high %v2431, %v2431
        %v2440 = vcombine.high %v2438, %v2438
        %v2441 = vcombine.low %v1450, %v1458
        %v2443 = vunpack.c.l.s4 1983009808
        %v2444 = vunpack.c.0.s8 %v2443
        %v2445 = vlaneseq
        %v2446 = vshrl.u32 %v2445, 7
        %v2447 = vsub.s32 %v2444, %v2446
        %v2448 = vrot.slane %v2441, %v2447
        %v2449 = vcombine.low %v1459, %v1467
        %v2451 = vunpack.c.l.s4 1983009808
        %v2452 = vunpack.c.0.s8 %v2451
        %v2453 = vlaneseq
        %v2454 = vshrl.u32 %v2453, 7
        %v2455 = vsub.s32 %v2452, %v2454
        %v2456 = vrot.slane %v2449, %v2455
        %v2457 = vcombine.low %v1474, %v1476
        %v2459 = vunpack.c.l.s4 1983009808
        %v2460 = vunpack.c.0.s8 %v2459
        %v2461 = vlaneseq
        %v2462 = vshrl.u32 %v2461, 7
        %v2463 = vsub.s32 %v2460, %v2462
        %v2464 = vrot.slane %v2457, %v2463
        %v2465 = vcombine.low %v1492, %v1491
        %v2467 = vunpack.c.l.s4 1983009808
        %v2468 = vunpack.c.0.s8 %v2467
        %v2469 = vlaneseq
        %v2470 = vshrl.u32 %v2469, 7
        %v2471 = vsub.s32 %v2468, %v2470
        %v2472 = vrot.slane %v2465, %v2471
        %v2473 = vcombine.low %v1501, %v1509
        %v2475 = vunpack.c.l.s4 1983009808
        %v2476 = vunpack.c.0.s8 %v2475
        %v2477 = vlaneseq
        %v2478 = vshrl.u32 %v2477, 7
        %v2479 = vsub.s32 %v2476, %v2478
        %v2480 = vrot.slane %v2473, %v2479
        %v2481 = vcombine.low %v1510, %v1518
        %v2483 = vunpack.c.l.s4 1983009808
        %v2484 = vunpack.c.0.s8 %v2483
        %v2485 = vlaneseq
        %v2486 = vshrl.u32 %v2485, 7
        %v2487 = vsub.s32 %v2484, %v2486
        %v2488 = vrot.slane %v2481, %v2487
        %v2489 = vcombine.low %v1525, %v1527
        %v2491 = vunpack.c.l.s4 1983009808
        %v2492 = vunpack.c.0.s8 %v2491
        %v2493 = vlaneseq
        %v2494 = vshrl.u32 %v2493, 7
        %v2495 = vsub.s32 %v2492, %v2494
        %v2496 = vrot.slane %v2489, %v2495
        %v2497 = vcombine.low %v1543, %v1542
        %v2499 = vunpack.c.l.s4 1983009808
        %v2500 = vunpack.c.0.s8 %v2499
        %v2501 = vlaneseq
        %v2502 = vshrl.u32 %v2501, 7
        %v2503 = vsub.s32 %v2500, %v2502
        %v2504 = vrot.slane %v2497, %v2503
        %v2513 = vcombine.low %v2346, %v2354
        %v2515 = vunpack.c.l.s4 1983009808
        %v2516 = vunpack.c.0.s8 %v2515
        %v2517 = vlaneseq
        %v2518 = vshrl.u32 %v2517, 7
        %v2519 = vsub.s32 %v2516, %v2518
        %v2520 = vrot.slane %v2513, %v2519
        %v2521 = vcombine.low %v2355, %v2363
        %v2523 = vunpack.c.l.s4 1983009808
        %v2524 = vunpack.c.0.s8 %v2523
        %v2525 = vlaneseq
        %v2526 = vshrl.u32 %v2525, 7
        %v2527 = vsub.s32 %v2524, %v2526
        %v2528 = vrot.slane %v2521, %v2527
        %v2529 = vcombine.low %v2370, %v2372
        %v2531 = vunpack.c.l.s4 1983009808
        %v2532 = vunpack.c.0.s8 %v2531
        %v2533 = vlaneseq
        %v2534 = vshrl.u32 %v2533, 7
        %v2535 = vsub.s32 %v2532, %v2534
        %v2536 = vrot.slane %v2529, %v2535
        %v2537 = vcombine.low %v2388, %v2387
        %v2539 = vunpack.c.l.s4 1983009808
        %v2540 = vunpack.c.0.s8 %v2539
        %v2541 = vlaneseq
        %v2542 = vshrl.u32 %v2541, 7
        %v2543 = vsub.s32 %v2540, %v2542
        %v2544 = vrot.slane %v2537, %v2543
        %v2545 = vcombine.low %v2397, %v2405
        %v2547 = vunpack.c.l.s4 1983009808
        %v2548 = vunpack.c.0.s8 %v2547
        %v2549 = vlaneseq
        %v2550 = vshrl.u32 %v2549, 7
        %v2551 = vsub.s32 %v2548, %v2550
        %v2552 = vrot.slane %v2545, %v2551
        %v2553 = vcombine.low %v2406, %v2414
        %v2555 = vunpack.c.l.s4 1983009808
        %v2556 = vunpack.c.0.s8 %v2555
        %v2557 = vlaneseq
        %v2558 = vshrl.u32 %v2557, 7
        %v2559 = vsub.s32 %v2556, %v2558
        %v2560 = vrot.slane %v2553, %v2559
        %v2561 = vcombine.low %v2421, %v2423
        %v2563 = vunpack.c.l.s4 1983009808
        %v2564 = vunpack.c.0.s8 %v2563
        %v2565 = vlaneseq
        %v2566 = vshrl.u32 %v2565, 7
        %v2567 = vsub.s32 %v2564, %v2566
        %v2568 = vrot.slane %v2561, %v2567
        %v2569 = vcombine.low %v2439, %v2438
        %v2571 = vunpack.c.l.s4 1983009808
        %v2572 = vunpack.c.0.s8 %v2571
        %v2573 = vlaneseq
        %v2574 = vshrl.u32 %v2573, 7
        %v2575 = vsub.s32 %v2572, %v2574
        %v2576 = vrot.slane %v2569, %v2575
        %2577 = vrot.lane.b32.xlu0 %v2520, 72
        %v2578 = vpop.permute.xlu0 %2577
        %2579 = vrot.lane.b32.xlu0 %v2528, 72
        %v2580 = vpop.permute.xlu0 %2579
        %2581 = vrot.lane.b32.xlu0 %v2536, 72
        %v2582 = vpop.permute.xlu0 %2581
        %2583 = vrot.lane.b32.xlu0 %v2544, 72
        %v2584 = vpop.permute.xlu0 %2583
        %2585 = vrot.lane.b32.xlu0 %v2552, 72
        %v2586 = vpop.permute.xlu0 %2585
        %2587 = vrot.lane.b32.xlu0 %v2560, 72
        %v2588 = vpop.permute.xlu0 %2587
        %2589 = vrot.lane.b32.xlu0 %v2568, 72
        %v2590 = vpop.permute.xlu0 %2589
        %2591 = vrot.lane.b32.xlu0 %v2576, 72
        %v2592 = vpop.permute.xlu0 %2591
        %v2602 = vunpack.c.l.s4 1983009808
        %v2603 = vunpack.c.0.s8 %v2602
        %v2604 = vlaneseq
        %v2605 = vshrl.u32 %v2604, 7
        %v2606 = vsub.s32 %v2603, %v2605
        %v2607 = vrot.slane %v1457, %v2606
        %v2608 = vcombine.low %v2448, %v2607
        %v2610 = vunpack.c.l.s4 1983009808
        %v2611 = vunpack.c.0.s8 %v2610
        %v2612 = vlaneseq
        %v2613 = vshrl.u32 %v2612, 7
        %v2614 = vsub.s32 %v2611, %v2613
        %v2615 = vrot.slane %v1475, %v2614
        %v2616 = vcombine.low %v2456, %v2615
        %v2618 = vunpack.c.l.s4 1983009808
        %v2619 = vunpack.c.0.s8 %v2618
        %v2620 = vlaneseq
        %v2621 = vshrl.u32 %v2620, 7
        %v2622 = vsub.s32 %v2619, %v2621
        %v2623 = vrot.slane %v1484, %v2622
        %v2624 = vcombine.low %v2464, %v2623
        %v2626 = vunpack.c.l.s4 1983009808
        %v2627 = vunpack.c.0.s8 %v2626
        %v2628 = vlaneseq
        %v2629 = vshrl.u32 %v2628, 7
        %v2630 = vsub.s32 %v2627, %v2629
        %v2631 = vrot.slane %v1493, %v2630
        %v2632 = vcombine.low %v2472, %v2631
        %v2634 = vunpack.c.l.s4 1983009808
        %v2635 = vunpack.c.0.s8 %v2634
        %v2636 = vlaneseq
        %v2637 = vshrl.u32 %v2636, 7
        %v2638 = vsub.s32 %v2635, %v2637
        %v2639 = vrot.slane %v1508, %v2638
        %v2640 = vcombine.low %v2480, %v2639
        %v2642 = vunpack.c.l.s4 1983009808
        %v2643 = vunpack.c.0.s8 %v2642
        %v2644 = vlaneseq
        %v2645 = vshrl.u32 %v2644, 7
        %v2646 = vsub.s32 %v2643, %v2645
        %v2647 = vrot.slane %v1526, %v2646
        %v2648 = vcombine.low %v2488, %v2647
        %v2650 = vunpack.c.l.s4 1983009808
        %v2651 = vunpack.c.0.s8 %v2650
        %v2652 = vlaneseq
        %v2653 = vshrl.u32 %v2652, 7
        %v2654 = vsub.s32 %v2651, %v2653
        %v2655 = vrot.slane %v1535, %v2654
        %v2656 = vcombine.low %v2496, %v2655
        %v2658 = vunpack.c.l.s4 1983009808
        %v2659 = vunpack.c.0.s8 %v2658
        %v2660 = vlaneseq
        %v2661 = vshrl.u32 %v2660, 7
        %v2662 = vsub.s32 %v2659, %v2661
        %v2663 = vrot.slane %v1544, %v2662
        %v2664 = vcombine.low %v2504, %v2663
        %v2665 = vrot.slane %v2608, 1
        %v2666 = vrot.slane %v2616, 1
        %v2667 = vrot.slane %v2624, 1
        %v2668 = vrot.slane %v2632, 1
        %v2669 = vrot.slane %v2640, 1
        %v2670 = vrot.slane %v2648, 1
        %v2671 = vrot.slane %v2656, 1
        %v2672 = vrot.slane %v2664, 1
        %2673 = vrot.lane.b32.xlu0 %v2665, 16
        %v2674 = vpop.permute.xlu0 %2673
        %2675 = vrot.lane.b32.xlu0 %v2666, 16
        %v2676 = vpop.permute.xlu0 %2675
        %2677 = vrot.lane.b32.xlu0 %v2667, 16
        %v2678 = vpop.permute.xlu0 %2677
        %2679 = vrot.lane.b32.xlu0 %v2668, 16
        %v2680 = vpop.permute.xlu0 %2679
        %2681 = vrot.lane.b32.xlu0 %v2669, 16
        %v2682 = vpop.permute.xlu0 %2681
        %2683 = vrot.lane.b32.xlu0 %v2670, 16
        %v2684 = vpop.permute.xlu0 %2683
        %2685 = vrot.lane.b32.xlu0 %v2671, 16
        %v2686 = vpop.permute.xlu0 %2685
        %2687 = vrot.lane.b32.xlu0 %v2672, 16
        %v2688 = vpop.permute.xlu0 %2687
        %v2698 = vunpack.c.l.s4 1983009808
        %v2699 = vunpack.c.0.s8 %v2698
        %v2700 = vlaneseq
        %v2701 = vshrl.u32 %v2700, 7
        %v2702 = vsub.s32 %v2699, %v2701
        %v2703 = vrot.slane %v2353, %v2702
        %v2704 = vcombine.low %v2520, %v2703
        %v2706 = vunpack.c.l.s4 1983009808
        %v2707 = vunpack.c.0.s8 %v2706
        %v2708 = vlaneseq
        %v2709 = vshrl.u32 %v2708, 7
        %v2710 = vsub.s32 %v2707, %v2709
        %v2711 = vrot.slane %v2371, %v2710
        %v2712 = vcombine.low %v2528, %v2711
        %v2714 = vunpack.c.l.s4 1983009808
        %v2715 = vunpack.c.0.s8 %v2714
        %v2716 = vlaneseq
        %v2717 = vshrl.u32 %v2716, 7
        %v2718 = vsub.s32 %v2715, %v2717
        %v2719 = vrot.slane %v2380, %v2718
        %v2720 = vcombine.low %v2536, %v2719
        %v2722 = vunpack.c.l.s4 1983009808
        %v2723 = vunpack.c.0.s8 %v2722
        %v2724 = vlaneseq
        %v2725 = vshrl.u32 %v2724, 7
        %v2726 = vsub.s32 %v2723, %v2725
        %v2727 = vrot.slane %v2389, %v2726
        %v2728 = vcombine.low %v2544, %v2727
        %v2730 = vunpack.c.l.s4 1983009808
        %v2731 = vunpack.c.0.s8 %v2730
        %v2732 = vlaneseq
        %v2733 = vshrl.u32 %v2732, 7
        %v2734 = vsub.s32 %v2731, %v2733
        %v2735 = vrot.slane %v2404, %v2734
        %v2736 = vcombine.low %v2552, %v2735
        %v2738 = vunpack.c.l.s4 1983009808
        %v2739 = vunpack.c.0.s8 %v2738
        %v2740 = vlaneseq
        %v2741 = vshrl.u32 %v2740, 7
        %v2742 = vsub.s32 %v2739, %v2741
        %v2743 = vrot.slane %v2422, %v2742
        %v2744 = vcombine.low %v2560, %v2743
        %v2746 = vunpack.c.l.s4 1983009808
        %v2747 = vunpack.c.0.s8 %v2746
        %v2748 = vlaneseq
        %v2749 = vshrl.u32 %v2748, 7
        %v2750 = vsub.s32 %v2747, %v2749
        %v2751 = vrot.slane %v2431, %v2750
        %v2752 = vcombine.low %v2568, %v2751
        %v2754 = vunpack.c.l.s4 1983009808
        %v2755 = vunpack.c.0.s8 %v2754
        %v2756 = vlaneseq
        %v2757 = vshrl.u32 %v2756, 7
        %v2758 = vsub.s32 %v2755, %v2757
        %v2759 = vrot.slane %v2440, %v2758
        %v2760 = vcombine.low %v2576, %v2759
        %v2761 = vrot.slane %v2704, 1
        %v2762 = vrot.slane %v2712, 1
        %v2763 = vrot.slane %v2720, 1
        %v2764 = vrot.slane %v2728, 1
        %v2765 = vrot.slane %v2736, 1
        %v2766 = vrot.slane %v2744, 1
        %v2767 = vrot.slane %v2752, 1
        %v2768 = vrot.slane %v2760, 1
        %2769 = vrot.lane.b32.xlu0 %v2761, 88
        %v2770 = vpop.permute.xlu0 %2769
        %2771 = vrot.lane.b32.xlu0 %v2762, 88
        %v2772 = vpop.permute.xlu0 %2771
        %2773 = vrot.lane.b32.xlu0 %v2763, 88
        %v2774 = vpop.permute.xlu0 %2773
        %2775 = vrot.lane.b32.xlu0 %v2764, 88
        %v2776 = vpop.permute.xlu0 %2775
        %2777 = vrot.lane.b32.xlu0 %v2765, 88
        %v2778 = vpop.permute.xlu0 %2777
        %2779 = vrot.lane.b32.xlu0 %v2766, 88
        %v2780 = vpop.permute.xlu0 %2779
        %2781 = vrot.lane.b32.xlu0 %v2767, 88
        %v2782 = vpop.permute.xlu0 %2781
        %2783 = vrot.lane.b32.xlu0 %v2768, 88
        %v2784 = vpop.permute.xlu0 %2783
        %v2793 = vcombine.low %v1458, %v1457
        %v2795 = vunpack.c.l.s4 1983009808
        %v2796 = vunpack.c.0.s8 %v2795
        %v2797 = vlaneseq
        %v2798 = vshrl.u32 %v2797, 7
        %v2799 = vsub.s32 %v2796, %v2798
        %v2800 = vrot.slane %v2793, %v2799
        %v2801 = vcombine.low %v1467, %v1475
        %v2803 = vunpack.c.l.s4 1983009808
        %v2804 = vunpack.c.0.s8 %v2803
        %v2805 = vlaneseq
        %v2806 = vshrl.u32 %v2805, 7
        %v2807 = vsub.s32 %v2804, %v2806
        %v2808 = vrot.slane %v2801, %v2807
        %v2809 = vcombine.low %v1476, %v1484
        %v2811 = vunpack.c.l.s4 1983009808
        %v2812 = vunpack.c.0.s8 %v2811
        %v2813 = vlaneseq
        %v2814 = vshrl.u32 %v2813, 7
        %v2815 = vsub.s32 %v2812, %v2814
        %v2816 = vrot.slane %v2809, %v2815
        %v2817 = vcombine.low %v1491, %v1493
        %v2819 = vunpack.c.l.s4 1983009808
        %v2820 = vunpack.c.0.s8 %v2819
        %v2821 = vlaneseq
        %v2822 = vshrl.u32 %v2821, 7
        %v2823 = vsub.s32 %v2820, %v2822
        %v2824 = vrot.slane %v2817, %v2823
        %v2825 = vcombine.low %v1509, %v1508
        %v2827 = vunpack.c.l.s4 1983009808
        %v2828 = vunpack.c.0.s8 %v2827
        %v2829 = vlaneseq
        %v2830 = vshrl.u32 %v2829, 7
        %v2831 = vsub.s32 %v2828, %v2830
        %v2832 = vrot.slane %v2825, %v2831
        %v2833 = vcombine.low %v1518, %v1526
        %v2835 = vunpack.c.l.s4 1983009808
        %v2836 = vunpack.c.0.s8 %v2835
        %v2837 = vlaneseq
        %v2838 = vshrl.u32 %v2837, 7
        %v2839 = vsub.s32 %v2836, %v2838
        %v2840 = vrot.slane %v2833, %v2839
        %v2841 = vcombine.low %v1527, %v1535
        %v2843 = vunpack.c.l.s4 1983009808
        %v2844 = vunpack.c.0.s8 %v2843
        %v2845 = vlaneseq
        %v2846 = vshrl.u32 %v2845, 7
        %v2847 = vsub.s32 %v2844, %v2846
        %v2848 = vrot.slane %v2841, %v2847
        %v2849 = vcombine.low %v1542, %v1544
        %v2851 = vunpack.c.l.s4 1983009808
        %v2852 = vunpack.c.0.s8 %v2851
        %v2853 = vlaneseq
        %v2854 = vshrl.u32 %v2853, 7
        %v2855 = vsub.s32 %v2852, %v2854
        %v2856 = vrot.slane %v2849, %v2855
        %2857 = vrot.lane.b32.xlu0 %v2800, 32
        %v2858 = vpop.permute.xlu0 %2857
        %2859 = vrot.lane.b32.xlu0 %v2808, 32
        %v2860 = vpop.permute.xlu0 %2859
        %2861 = vrot.lane.b32.xlu0 %v2816, 32
        %v2862 = vpop.permute.xlu0 %2861
        %2863 = vrot.lane.b32.xlu0 %v2824, 32
        %v2864 = vpop.permute.xlu0 %2863
        %2865 = vrot.lane.b32.xlu0 %v2832, 32
        %v2866 = vpop.permute.xlu0 %2865
        %2867 = vrot.lane.b32.xlu0 %v2840, 32
        %v2868 = vpop.permute.xlu0 %2867
        %2869 = vrot.lane.b32.xlu0 %v2848, 32
        %v2870 = vpop.permute.xlu0 %2869
        %2871 = vrot.lane.b32.xlu0 %v2856, 32
        %v2872 = vpop.permute.xlu0 %2871
        %v2881 = vcombine.low %v2354, %v2353
        %v2883 = vunpack.c.l.s4 1983009808
        %v2884 = vunpack.c.0.s8 %v2883
        %v2885 = vlaneseq
        %v2886 = vshrl.u32 %v2885, 7
        %v2887 = vsub.s32 %v2884, %v2886
        %v2888 = vrot.slane %v2881, %v2887
        %v2889 = vcombine.low %v2363, %v2371
        %v2891 = vunpack.c.l.s4 1983009808
        %v2892 = vunpack.c.0.s8 %v2891
        %v2893 = vlaneseq
        %v2894 = vshrl.u32 %v2893, 7
        %v2895 = vsub.s32 %v2892, %v2894
        %v2896 = vrot.slane %v2889, %v2895
        %v2897 = vcombine.low %v2372, %v2380
        %v2899 = vunpack.c.l.s4 1983009808
        %v2900 = vunpack.c.0.s8 %v2899
        %v2901 = vlaneseq
        %v2902 = vshrl.u32 %v2901, 7
        %v2903 = vsub.s32 %v2900, %v2902
        %v2904 = vrot.slane %v2897, %v2903
        %v2905 = vcombine.low %v2387, %v2389
        %v2907 = vunpack.c.l.s4 1983009808
        %v2908 = vunpack.c.0.s8 %v2907
        %v2909 = vlaneseq
        %v2910 = vshrl.u32 %v2909, 7
        %v2911 = vsub.s32 %v2908, %v2910
        %v2912 = vrot.slane %v2905, %v2911
        %v2913 = vcombine.low %v2405, %v2404
        %v2915 = vunpack.c.l.s4 1983009808
        %v2916 = vunpack.c.0.s8 %v2915
        %v2917 = vlaneseq
        %v2918 = vshrl.u32 %v2917, 7
        %v2919 = vsub.s32 %v2916, %v2918
        %v2920 = vrot.slane %v2913, %v2919
        %v2921 = vcombine.low %v2414, %v2422
        %v2923 = vunpack.c.l.s4 1983009808
        %v2924 = vunpack.c.0.s8 %v2923
        %v2925 = vlaneseq
        %v2926 = vshrl.u32 %v2925, 7
        %v2927 = vsub.s32 %v2924, %v2926
        %v2928 = vrot.slane %v2921, %v2927
        %v2929 = vcombine.low %v2423, %v2431
        %v2931 = vunpack.c.l.s4 1983009808
        %v2932 = vunpack.c.0.s8 %v2931
        %v2933 = vlaneseq
        %v2934 = vshrl.u32 %v2933, 7
        %v2935 = vsub.s32 %v2932, %v2934
        %v2936 = vrot.slane %v2929, %v2935
        %v2937 = vcombine.low %v2438, %v2440
        %v2939 = vunpack.c.l.s4 1983009808
        %v2940 = vunpack.c.0.s8 %v2939
        %v2941 = vlaneseq
        %v2942 = vshrl.u32 %v2941, 7
        %v2943 = vsub.s32 %v2940, %v2942
        %v2944 = vrot.slane %v2937, %v2943
        %2945 = vrot.lane.b32.xlu0 %v2888, 104
        %v2946 = vpop.permute.xlu0 %2945
        %2947 = vrot.lane.b32.xlu0 %v2896, 104
        %v2948 = vpop.permute.xlu0 %2947
        %2949 = vrot.lane.b32.xlu0 %v2904, 104
        %v2950 = vpop.permute.xlu0 %2949
        %2951 = vrot.lane.b32.xlu0 %v2912, 104
        %v2952 = vpop.permute.xlu0 %2951
        %2953 = vrot.lane.b32.xlu0 %v2920, 104
        %v2954 = vpop.permute.xlu0 %2953
        %2955 = vrot.lane.b32.xlu0 %v2928, 104
        %v2956 = vpop.permute.xlu0 %2955
        %2957 = vrot.lane.b32.xlu0 %v2936, 104
        %v2958 = vpop.permute.xlu0 %2957
        %2959 = vrot.lane.b32.xlu0 %v2944, 104
        %v2960 = vpop.permute.xlu0 %2959
        %vm2969 = vcmask 588800
        %v2970 = vsel %vm2969, %v2448, %v2578
        %v2971 = vsel %vm2969, %v2456, %v2580
        %v2972 = vsel %vm2969, %v2464, %v2582
        %v2973 = vsel %vm2969, %v2472, %v2584
        %v2974 = vsel %vm2969, %v2480, %v2586
        %v2975 = vsel %vm2969, %v2488, %v2588
        %v2976 = vsel %vm2969, %v2496, %v2590
        %v2977 = vsel %vm2969, %v2504, %v2592
        %vm2978 = vcmask 130048
        %v2979 = vsel %vm2978, %v2578, %v2674
        %v2980 = vsel %vm2978, %v2580, %v2676
        %v2981 = vsel %vm2978, %v2582, %v2678
        %v2982 = vsel %vm2978, %v2584, %v2680
        %v2983 = vsel %vm2978, %v2586, %v2682
        %v2984 = vsel %vm2978, %v2588, %v2684
        %v2985 = vsel %vm2978, %v2590, %v2686
        %v2986 = vsel %vm2978, %v2592, %v2688
        %vm2987 = vcmask 719872
        %v2988 = vsel %vm2987, %v2979, %v2770
        %v2989 = vsel %vm2987, %v2980, %v2772
        %v2990 = vsel %vm2987, %v2981, %v2774
        %v2991 = vsel %vm2987, %v2982, %v2776
        %v2992 = vsel %vm2987, %v2983, %v2778
        %v2993 = vsel %vm2987, %v2984, %v2780
        %v2994 = vsel %vm2987, %v2985, %v2782
        %v2995 = vsel %vm2987, %v2986, %v2784
        %vm2996 = vcmask 261120
        %v2997 = vsel %vm2996, %v2770, %v2858
        %v2998 = vsel %vm2996, %v2772, %v2860
        %v2999 = vsel %vm2996, %v2774, %v2862
        %v3000 = vsel %vm2996, %v2776, %v2864
        %v3001 = vsel %vm2996, %v2778, %v2866
        %v3002 = vsel %vm2996, %v2780, %v2868
        %v3003 = vsel %vm2996, %v2782, %v2870
        %v3004 = vsel %vm2996, %v2784, %v2872
        %vm3005 = vcmask 850944
        %v3006 = vsel %vm3005, %v2997, %v2946
        %v3007 = vsel %vm3005, %v2998, %v2948
        %v3008 = vsel %vm3005, %v2999, %v2950
        %v3009 = vsel %vm3005, %v3000, %v2952
        %v3010 = vsel %vm3005, %v3001, %v2954
        %v3011 = vsel %vm3005, %v3002, %v2956
        %v3012 = vsel %vm3005, %v3003, %v2958
        %v3013 = vsel %vm3005, %v3004, %v2960
        %v3038 = vcombine.low %v2970, %v2988
        %v3039 = vcombine.low %v3006, %v2946
        %v3040 = vcombine.low %v2971, %v2989
        %v3041 = vcombine.low %v3007, %v2948
        %v3042 = vcombine.low %v2972, %v2990
        %v3043 = vcombine.low %v3008, %v2950
        %v3044 = vcombine.low %v2973, %v2991
        %v3045 = vcombine.low %v3009, %v2952
        %v3046 = vcombine.low %v2974, %v2992
        %v3047 = vcombine.low %v3010, %v2954
        %v3048 = vcombine.low %v2975, %v2993
        %v3049 = vcombine.low %v3011, %v2956
        %v3050 = vcombine.low %v2976, %v2994
        %v3051 = vcombine.low %v3012, %v2958
        %v3052 = vcombine.low %v2977, %v2995
        %v3053 = vcombine.low %v3013, %v2960
        %v3055 = vlaneseq
        %v3056 = vshrl.u32 %v3055, 7
        %v3057 = vsub.s32 0, %v3056
        %v3058 = vrot.slane %v594, %v3057
        %v3059 = vlaneseq
        %v3060 = vshrl.u32 %v3059, 7
        %v3061 = vsub.s32 1, %v3060
        %v3062 = vrot.slane %v594, %v3061
        %v3065 = vcombine.low %v3038, %v3040
        %v3066 = vcombine.high %v3038, %v3040
        %v3067 = vcombine.low %v3039, %v3041
        %v3068 = vcombine.high %v3039, %v3041
        %v3069 = vcombine.low %v3042, %v3044
        %v3070 = vcombine.high %v3042, %v3044
        %v3071 = vcombine.low %v3043, %v3045
        %v3072 = vcombine.high %v3043, %v3045
        %v3073 = vcombine.low %v3046, %v3048
        %v3074 = vcombine.high %v3046, %v3048
        %v3075 = vcombine.low %v3047, %v3049
        %v3076 = vcombine.high %v3047, %v3049
        %v3077 = vcombine.low %v3050, %v3052
        %v3078 = vcombine.high %v3050, %v3052
        %v3079 = vcombine.low %v3051, %v3053
        %v3080 = vcombine.high %v3051, %v3053
        %vm3093 = vcmask 392192
        %v3094 = vsel %vm3093, %v3068, 0
        %v3096 = vsel %vm3093, %v3072, 0
        %v3098 = vsel %vm3093, %v3076, 0
        %v3100 = vsel %vm3093, %v3080, 0
        %3102 = vmatprep.subr.mxu0 %v517
        %3103 = vmatpush1.msra.mxu0 %v516
        %3104 = vmatprep.subr.mxu0 %v515
        %3105 = vmatpush1.msra.mxu0 %v514
        %3106 = vmatprep.subr.mxu0 %v513
        %3107 = vmatpush1.msra.mxu0 %v512
        %3108 = vmatprep.subr.mxu0 %v511
        %3109 = vmatpush1.msra.mxu0 %v510
        %3110 = vmatprep.subr.mxu0 %v509
        %3111 = vmatpush1.msra.mxu0 %v508
        %3112 = vmatprep.subr.mxu0 %v507
        %3113 = vmatpush1.msra.mxu0 %v506
        %3114 = vmatprep.subr.mxu0 %v505
        %3115 = vmatpush1.msra.mxu0 %v504
        %3116 = vmatprep.subr.mxu0 %v503
        %3117 = vmatpush1.msra.mxu0 %v502
        %3118 = vmatprep.subr.mxu0 %v501
        %3119 = vmatpush1.msra.mxu0 %v500
        %3120 = vmatprep.subr.mxu0 %v499
        %3121 = vmatpush1.msra.mxu0 %v498
        %3122 = vmatprep.subr.mxu0 %v497
        %3123 = vmatpush1.msra.mxu0 %v496
        %3124 = vmatprep.subr.mxu0 %v495
        %3125 = vmatpush1.msra.mxu0 %v494
        %3126 = vmatprep.subr.mxu0 %v493
        %3127 = vmatpush1.msra.mxu0 %v492
        %3128 = vmatprep.subr.mxu0 %v491
        %3129 = vmatpush1.msra.mxu0 %v490
        %3130 = vmatprep.subr.mxu0 %v489
        %3131 = vmatpush1.msra.mxu0 %v488
        %3132 = vmatprep.subr.mxu0 %v487
        %3133 = vmatpush1.msra.mxu0 %v486
        %3134 = vmatprep.subr.mxu0 %v549
        %3135 = vmatpush2.msra.mxu0 %v548
        %3136 = vmatprep.subr.mxu0 %v547
        %3137 = vmatpush2.msra.mxu0 %v546
        %3138 = vmatprep.subr.mxu0 %v545
        %3139 = vmatpush2.msra.mxu0 %v544
        %3140 = vmatprep.subr.mxu0 %v543
        %3141 = vmatpush2.msra.mxu0 %v542
        %3142 = vmatprep.subr.mxu0 %v541
        %3143 = vmatpush2.msra.mxu0 %v540
        %3144 = vmatprep.subr.mxu0 %v539
        %3145 = vmatpush2.msra.mxu0 %v538
        %3146 = vmatprep.subr.mxu0 %v537
        %3147 = vmatpush2.msra.mxu0 %v536
        %3148 = vmatprep.subr.mxu0 %v535
        %3149 = vmatpush2.msra.mxu0 %v534
        %3150 = vmatprep.subr.mxu0 %v533
        %3151 = vmatpush2.msra.mxu0 %v532
        %3152 = vmatprep.subr.mxu0 %v531
        %3153 = vmatpush2.msra.mxu0 %v530
        %3154 = vmatprep.subr.mxu0 %v529
        %3155 = vmatpush2.msra.mxu0 %v528
        %3156 = vmatprep.subr.mxu0 %v527
        %3157 = vmatpush2.msra.mxu0 %v526
        %3158 = vmatprep.subr.mxu0 %v525
        %3159 = vmatpush2.msra.mxu0 %v524
        %3160 = vmatprep.subr.mxu0 %v523
        %3161 = vmatpush2.msra.mxu0 %v522
        %3162 = vmatprep.subr.mxu0 %v521
        %3163 = vmatpush2.msra.mxu0 %v520
        %3164 = vmatprep.subr.mxu0 %v519
        %3165 = vmatpush2.msra.mxu0 %v518
        %3166 = vmatprep.mubr.f32.mxu0 %v3066
        %3167 = vmatmul.mubr.f32.gmra.mxu0 %v3065
        %v3168 = vpop.f32.mrf.mxu0
        %v3169 = vadd.f32 %v3058, %v3168
        %v3170 = vpop.f32.mrf.mxu0
        %v3171 = vadd.f32 %v3062, %v3170
        %3172 = vmatprep.mubr.f32.mxu0 %v3070
        %3173 = vmatmul.mubr.f32.gmra.mxu0 %v3069
        %v3174 = vpop.f32.mrf.mxu0
        %v3175 = vadd.f32 %v3058, %v3174
        %v3176 = vpop.f32.mrf.mxu0
        %v3177 = vadd.f32 %v3062, %v3176
        %3178 = vmatprep.mubr.f32.mxu0 %v3074
        %3179 = vmatmul.mubr.f32.gmra.mxu0 %v3073
        %v3180 = vpop.f32.mrf.mxu0
        %v3181 = vadd.f32 %v3058, %v3180
        %v3182 = vpop.f32.mrf.mxu0
        %v3183 = vadd.f32 %v3062, %v3182
        %3184 = vmatprep.mubr.f32.mxu0 %v3078
        %3185 = vmatmul.mubr.f32.gmra.mxu0 %v3077
        %v3186 = vpop.f32.mrf.mxu0
        %v3187 = vadd.f32 %v3058, %v3186
        %v3188 = vpop.f32.mrf.mxu0
        %v3189 = vadd.f32 %v3062, %v3188
        %3190 = vdwg.mxu0
        %3191 = vmatprep.subr.mxu0 %v581
        %3192 = vmatpush1.msra.mxu0 %v580
        %3193 = vmatprep.subr.mxu0 %v579
        %3194 = vmatpush1.msra.mxu0 %v578
        %3195 = vmatprep.subr.mxu0 %v577
        %3196 = vmatpush1.msra.mxu0 %v576
        %3197 = vmatprep.subr.mxu0 %v575
        %3198 = vmatpush1.msra.mxu0 %v574
        %3199 = vmatprep.subr.mxu0 %v573
        %3200 = vmatpush1.msra.mxu0 %v572
        %3201 = vmatprep.subr.mxu0 %v571
        %3202 = vmatpush1.msra.mxu0 %v570
        %3203 = vmatprep.subr.mxu0 %v569
        %3204 = vmatpush1.msra.mxu0 %v568
        %3205 = vmatprep.subr.mxu0 %v567
        %3206 = vmatpush1.msra.mxu0 %v566
        %3207 = vmatprep.subr.mxu0 %v565
        %3208 = vmatpush1.msra.mxu0 %v564
        %3209 = vmatprep.subr.mxu0 %v563
        %3210 = vmatpush1.msra.mxu0 %v562
        %3211 = vmatprep.subr.mxu0 %v561
        %3212 = vmatpush1.msra.mxu0 %v560
        %3213 = vmatprep.subr.mxu0 %v559
        %3214 = vmatpush1.msra.mxu0 %v558
        %3215 = vmatprep.subr.mxu0 %v557
        %3216 = vmatpush1.msra.mxu0 %v556
        %3217 = vmatprep.subr.mxu0 %v555
        %3218 = vmatpush1.msra.mxu0 %v554
        %3219 = vmatprep.subr.mxu0 %v553
        %3220 = vmatpush1.msra.mxu0 %v552
        %3221 = vmatprep.subr.mxu0 %v551
        %3222 = vmatpush1.msra.mxu0 %v550
        %3223 = vmatprep.subr.mxu0 0.0
        %3224 = vmatpush2.msra.mxu0 0.0
        %3225 = vmatprep.subr.mxu0 0.0
        %3226 = vmatpush2.msra.mxu0 0.0
        %3227 = vmatprep.subr.mxu0 0.0
        %3228 = vmatpush2.msra.mxu0 0.0
        %3229 = vmatprep.subr.mxu0 0.0
        %3230 = vmatpush2.msra.mxu0 0.0
        %3231 = vmatprep.subr.mxu0 0.0
        %3232 = vmatpush2.msra.mxu0 0.0
        %3233 = vmatprep.subr.mxu0 0.0
        %3234 = vmatpush2.msra.mxu0 0.0
        %3235 = vmatprep.subr.mxu0 0.0
        %3236 = vmatpush2.msra.mxu0 0.0
        %3237 = vmatprep.subr.mxu0 0.0
        %3238 = vmatpush2.msra.mxu0 0.0
        %3239 = vmatprep.subr.mxu0 0.0
        %3240 = vmatpush2.msra.mxu0 0.0
        %3241 = vmatprep.subr.mxu0 0.0
        %3242 = vmatpush2.msra.mxu0 0.0
        %3243 = vmatprep.subr.mxu0 %v593
        %3244 = vmatpush2.msra.mxu0 %v592
        %3245 = vmatprep.subr.mxu0 %v591
        %3246 = vmatpush2.msra.mxu0 %v590
        %3247 = vmatprep.subr.mxu0 %v589
        %3248 = vmatpush2.msra.mxu0 %v588
        %3249 = vmatprep.subr.mxu0 %v587
        %3250 = vmatpush2.msra.mxu0 %v586
        %3251 = vmatprep.subr.mxu0 %v585
        %3252 = vmatpush2.msra.mxu0 %v584
        %3253 = vmatprep.subr.mxu0 %v583
        %3254 = vmatpush2.msra.mxu0 %v582
        %3255 = vmatprep.mubr.f32.mxu0 %v3094
        %3256 = vmatmul.mubr.f32.gmra.mxu0 %v3067
        %v3257 = vpop.f32.mrf.mxu0
        %v3258 = vadd.f32 %v3169, %v3257
        %v3259 = vpop.f32.mrf.mxu0
        %v3260 = vadd.f32 %v3171, %v3259
        %3261 = vmatprep.mubr.f32.mxu0 %v3096
        %3262 = vmatmul.mubr.f32.gmra.mxu0 %v3071
        %v3263 = vpop.f32.mrf.mxu0
        %v3264 = vadd.f32 %v3175, %v3263
        %v3265 = vpop.f32.mrf.mxu0
        %v3266 = vadd.f32 %v3177, %v3265
        %3267 = vmatprep.mubr.f32.mxu0 %v3098
        %3268 = vmatmul.mubr.f32.gmra.mxu0 %v3075
        %v3269 = vpop.f32.mrf.mxu0
        %v3270 = vadd.f32 %v3181, %v3269
        %v3271 = vpop.f32.mrf.mxu0
        %v3272 = vadd.f32 %v3183, %v3271
        %3273 = vmatprep.mubr.f32.mxu0 %v3100
        %3274 = vmatmul.mubr.f32.gmra.mxu0 %v3079
        %v3275 = vpop.f32.mrf.mxu0
        %v3276 = vadd.f32 %v3187, %v3275
        %v3277 = vpop.f32.mrf.mxu0
        %v3278 = vadd.f32 %v3189, %v3277
        %3279 = vdwg.mxu0
        %v3280 = vmax.f32 %v3258, 0.0
        %v3281 = vmax.f32 %v3260, 0.0
        %v3282 = vmax.f32 %v3264, 0.0
        %v3283 = vmax.f32 %v3266, 0.0
        %v3284 = vmax.f32 %v3270, 0.0
        %v3285 = vmax.f32 %v3272, 0.0
        %v3286 = vmax.f32 %v3276, 0.0
        %v3287 = vmax.f32 %v3278, 0.0
        %3292 = vrot.lane.b32.xlu0 %v3280, 64
        %v3293 = vpop.permute.xlu0 %3292
        %3294 = vrot.lane.b32.xlu0 %v3282, 64
        %v3295 = vpop.permute.xlu0 %3294
        %3296 = vrot.lane.b32.xlu0 %v3284, 64
        %v3297 = vpop.permute.xlu0 %3296
        %3298 = vrot.lane.b32.xlu0 %v3286, 64
        %v3299 = vpop.permute.xlu0 %3298
        %v3304 = vmax.f32 %v3280, %v3293
        %v3305 = vmax.f32 %v3282, %v3295
        %v3306 = vmax.f32 %v3284, %v3297
        %v3307 = vmax.f32 %v3286, %v3299
        %3312 = vrot.lane.b32.xlu0 %v3281, 64
        %v3313 = vpop.permute.xlu0 %3312
        %3314 = vrot.lane.b32.xlu0 %v3283, 64
        %v3315 = vpop.permute.xlu0 %3314
        %3316 = vrot.lane.b32.xlu0 %v3285, 64
        %v3317 = vpop.permute.xlu0 %3316
        %3318 = vrot.lane.b32.xlu0 %v3287, 64
        %v3319 = vpop.permute.xlu0 %3318
        %v3324 = vmax.f32 %v3281, %v3313
        %v3325 = vmax.f32 %v3283, %v3315
        %v3326 = vmax.f32 %v3285, %v3317
        %v3327 = vmax.f32 %v3287, %v3319
        %v3328 = vmax.f32 %v3304, %v3324
        %v3329 = vmax.f32 %v3305, %v3325
        %v3330 = vmax.f32 %v3306, %v3326
        %v3331 = vmax.f32 %v3307, %v3327
        %v3336 = vcombine.high %v3328, %v3328
        %v3337 = vcombine.high %v3329, %v3329
        %v3338 = vcombine.high %v3330, %v3330
        %v3339 = vcombine.high %v3331, %v3331
        %v3340 = vld [vmem:[%s5] sm:$0xff]
        %v3341 = vld [vmem:[%s5 + $0x8] sm:$0xff]
        %v3342 = vld [vmem:[%s5 + $0x10] sm:$0xff]
        %v3343 = vld [vmem:[%s5 + $0x18] sm:$0xff]
        %v3344 = vld [vmem:[%s5 + $0x20] sm:$0xff]
        %v3345 = vld [vmem:[%s5 + $0x28] sm:$0xff]
        %v3346 = vld [vmem:[%s5 + $0x30] sm:$0xff]
        %v3347 = vld [vmem:[%s5 + $0x38] sm:$0xff]
        %v3348 = vld [vmem:[%s5 + $0x40] sm:$0xff]
        %v3349 = vld [vmem:[%s5 + $0x48] sm:$0xff]
        %v3350 = vld [vmem:[%s5 + $0x50] sm:$0xff]
        %v3351 = vld [vmem:[%s5 + $0x58] sm:$0xff]
        %v3352 = vld [vmem:[%s5 + $0x60] sm:$0xff]
        %v3353 = vld [vmem:[%s5 + $0x68] sm:$0xff]
        %v3354 = vld [vmem:[%s5 + $0x70] sm:$0xff]
        %v3355 = vld [vmem:[%s5 + $0x78] sm:$0xff]
        %v3356 = vld [vmem:[%s5 + $0x80] sm:$0xff]
        %v3357 = vld [vmem:[%s5 + $0x88] sm:$0xff]
        %v3358 = vld [vmem:[%s5 + $0x90] sm:$0xff]
        %v3359 = vld [vmem:[%s5 + $0x98] sm:$0xff]
        %v3360 = vld [vmem:[%s5 + $0xa0] sm:$0xff]
        %v3361 = vld [vmem:[%s5 + $0xa8] sm:$0xff]
        %v3362 = vld [vmem:[%s5 + $0xb0] sm:$0xff]
        %v3363 = vld [vmem:[%s5 + $0xb8] sm:$0xff]
        %v3364 = vld [vmem:[%s5 + $0xc0] sm:$0xff]
        %v3365 = vld [vmem:[%s5 + $0xc8] sm:$0xff]
        %v3366 = vld [vmem:[%s5 + $0xd0] sm:$0xff]
        %v3367 = vld [vmem:[%s5 + $0xd8] sm:$0xff]
        %v3368 = vld [vmem:[%s5 + $0xe0] sm:$0xff]
        %v3369 = vld [vmem:[%s5 + $0xe8] sm:$0xff]
        %v3370 = vld [vmem:[%s5 + $0xf0] sm:$0xff]
        %v3371 = vld [vmem:[%s5 + $0xf8] sm:$0xff]
        %v3372 = vld [vmem:[%s6] sm:$0x1]
        %v3373 = vlaneseq
        %v3374 = vshrl.u32 %v3373, 7
        %v3375 = vsub.s32 0, %v3374
        %v3376 = vrot.slane %v3328, %v3375
        %v3377 = vlaneseq
        %v3378 = vshrl.u32 %v3377, 7
        %v3379 = vsub.s32 0, %v3378
        %v3380 = vrot.slane %v3336, %v3379
        %v3381 = vlaneseq
        %v3382 = vshrl.u32 %v3381, 7
        %v3383 = vsub.s32 0, %v3382
        %v3384 = vrot.slane %v3329, %v3383
        %v3385 = vlaneseq
        %v3386 = vshrl.u32 %v3385, 7
        %v3387 = vsub.s32 0, %v3386
        %v3388 = vrot.slane %v3337, %v3387
        %v3389 = vlaneseq
        %v3390 = vshrl.u32 %v3389, 7
        %v3391 = vsub.s32 0, %v3390
        %v3392 = vrot.slane %v3330, %v3391
        %v3393 = vlaneseq
        %v3394 = vshrl.u32 %v3393, 7
        %v3395 = vsub.s32 0, %v3394
        %v3396 = vrot.slane %v3338, %v3395
        %v3397 = vlaneseq
        %v3398 = vshrl.u32 %v3397, 7
        %v3399 = vsub.s32 0, %v3398
        %v3400 = vrot.slane %v3331, %v3399
        %v3401 = vlaneseq
        %v3402 = vshrl.u32 %v3401, 7
        %v3403 = vsub.s32 0, %v3402
        %v3404 = vrot.slane %v3339, %v3403
        %vm3405 = vcmask 1041409
        %v3406 = vsel %vm3405, %v3380, %v3376
        %vm3407 = vcmask 1042434
        %v3408 = vsel %vm3407, %v3384, %v3406
        %vm3409 = vcmask 1043459
        %v3410 = vsel %vm3409, %v3388, %v3408
        %vm3411 = vcmask 1044484
        %v3412 = vsel %vm3411, %v3392, %v3410
        %vm3413 = vcmask 1045509
        %v3414 = vsel %vm3413, %v3396, %v3412
        %vm3415 = vcmask 1046534
        %v3416 = vsel %vm3415, %v3400, %v3414
        %vm3417 = vcmask 1047559
        %v3418 = vsel %vm3417, %v3404, %v3416
        %vm3419 = vcmask 523264
        %v3420 = vsel %vm3419, %v3418, 0
        %3422 = vmatprep.subr.mxu0 0.0
        %3423 = vmatpush1.msra.mxu0 0.0
        %3424 = vmatprep.subr.mxu0 0.0
        %3425 = vmatpush1.msra.mxu0 0.0
        %3426 = vmatprep.subr.mxu0 0.0
        %3427 = vmatpush1.msra.mxu0 0.0
        %3428 = vmatprep.subr.mxu0 0.0
        %3429 = vmatpush1.msra.mxu0 0.0
        %3430 = vmatprep.subr.mxu0 0.0
        %3431 = vmatpush1.msra.mxu0 0.0
        %3432 = vmatprep.subr.mxu0 0.0
        %3433 = vmatpush1.msra.mxu0 0.0
        %3434 = vmatprep.subr.mxu0 0.0
        %3435 = vmatpush1.msra.mxu0 0.0
        %3436 = vmatprep.subr.mxu0 0.0
        %3437 = vmatpush1.msra.mxu0 0.0
        %3438 = vmatprep.subr.mxu0 0.0
        %3439 = vmatpush1.msra.mxu0 %v3347
        %3440 = vmatprep.subr.mxu0 0.0
        %3441 = vmatpush1.msra.mxu0 %v3346
        %3442 = vmatprep.subr.mxu0 0.0
        %3443 = vmatpush1.msra.mxu0 %v3345
        %3444 = vmatprep.subr.mxu0 0.0
        %3445 = vmatpush1.msra.mxu0 %v3344
        %3446 = vmatprep.subr.mxu0 0.0
        %3447 = vmatpush1.msra.mxu0 %v3343
        %3448 = vmatprep.subr.mxu0 0.0
        %3449 = vmatpush1.msra.mxu0 %v3342
        %3450 = vmatprep.subr.mxu0 0.0
        %3451 = vmatpush1.msra.mxu0 %v3341
        %3452 = vmatprep.subr.mxu0 0.0
        %3453 = vmatpush1.msra.mxu0 %v3340
        %3454 = vmatprep.subr.mxu0 0.0
        %3455 = vmatpush2.msra.mxu0 0.0
        %3456 = vmatprep.subr.mxu0 0.0
        %3457 = vmatpush2.msra.mxu0 0.0
        %3458 = vmatprep.subr.mxu0 0.0
        %3459 = vmatpush2.msra.mxu0 0.0
        %3460 = vmatprep.subr.mxu0 0.0
        %3461 = vmatpush2.msra.mxu0 0.0
        %3462 = vmatprep.subr.mxu0 0.0
        %3463 = vmatpush2.msra.mxu0 0.0
        %3464 = vmatprep.subr.mxu0 0.0
        %3465 = vmatpush2.msra.mxu0 0.0
        %3466 = vmatprep.subr.mxu0 0.0
        %3467 = vmatpush2.msra.mxu0 0.0
        %3468 = vmatprep.subr.mxu0 0.0
        %3469 = vmatpush2.msra.mxu0 0.0
        %3470 = vmatprep.subr.mxu0 0.0
        %3471 = vmatpush2.msra.mxu0 0.0
        %3472 = vmatprep.subr.mxu0 0.0
        %3473 = vmatpush2.msra.mxu0 0.0
        %3474 = vmatprep.subr.mxu0 0.0
        %3475 = vmatpush2.msra.mxu0 0.0
        %3476 = vmatprep.subr.mxu0 0.0
        %3477 = vmatpush2.msra.mxu0 0.0
        %3478 = vmatprep.subr.mxu0 0.0
        %3479 = vmatpush2.msra.mxu0 0.0
        %3480 = vmatprep.subr.mxu0 0.0
        %3481 = vmatpush2.msra.mxu0 0.0
        %3482 = vmatprep.subr.mxu0 0.0
        %3483 = vmatpush2.msra.mxu0 0.0
        %3484 = vmatprep.subr.mxu0 0.0
        %3485 = vmatpush2.msra.mxu0 0.0
        %3486 = vmatprep.mubr.f32.mxu0 0.0
        %3487 = vmatmul.mubr.f32.gmra.mxu0 %v3420
        %v3488 = vpop.f32.mrf.mxu0
        %v3489 = vadd.f32 0.0, %v3488
        %v3490 = vpop.f32.mrf.mxu0
        %3491 = vdwg.mxu0
        %v3493 = vlaneseq
        %v3494 = vshrl.u32 %v3493, 7
        %v3495 = vsub.s32 0, %v3494
        %v3496 = vrot.slane %v3372, %v3495
        %v3498 = vadd.f32 %v3496, %v3489
        %v3499 = vlaneseq
        %v3500 = vshrl.u32 %v3499, 7
        %v3501 = vsub.s32 1, %v3500
        %v3502 = vrot.slane %v3328, %v3501
        %v3503 = vlaneseq
        %v3504 = vshrl.u32 %v3503, 7
        %v3505 = vsub.s32 1, %v3504
        %v3506 = vrot.slane %v3336, %v3505
        %v3507 = vlaneseq
        %v3508 = vshrl.u32 %v3507, 7
        %v3509 = vsub.s32 1, %v3508
        %v3510 = vrot.slane %v3329, %v3509
        %v3511 = vlaneseq
        %v3512 = vshrl.u32 %v3511, 7
        %v3513 = vsub.s32 1, %v3512
        %v3514 = vrot.slane %v3337, %v3513
        %v3515 = vlaneseq
        %v3516 = vshrl.u32 %v3515, 7
        %v3517 = vsub.s32 1, %v3516
        %v3518 = vrot.slane %v3330, %v3517
        %v3519 = vlaneseq
        %v3520 = vshrl.u32 %v3519, 7
        %v3521 = vsub.s32 1, %v3520
        %v3522 = vrot.slane %v3338, %v3521
        %v3523 = vlaneseq
        %v3524 = vshrl.u32 %v3523, 7
        %v3525 = vsub.s32 1, %v3524
        %v3526 = vrot.slane %v3331, %v3525
        %v3527 = vlaneseq
        %v3528 = vshrl.u32 %v3527, 7
        %v3529 = vsub.s32 1, %v3528
        %v3530 = vrot.slane %v3339, %v3529
        %v3531 = vsel %vm3405, %v3506, %v3502
        %v3532 = vsel %vm3407, %v3510, %v3531
        %v3533 = vsel %vm3409, %v3514, %v3532
        %v3534 = vsel %vm3411, %v3518, %v3533
        %v3535 = vsel %vm3413, %v3522, %v3534
        %v3536 = vsel %vm3415, %v3526, %v3535
        %v3537 = vsel %vm3417, %v3530, %v3536
        %v3538 = vsel %vm3419, %v3537, 0
        %3540 = vmatprep.subr.mxu0 0.0
        %3541 = vmatpush1.msra.mxu0 0.0
        %3542 = vmatprep.subr.mxu0 0.0
        %3543 = vmatpush1.msra.mxu0 0.0
        %3544 = vmatprep.subr.mxu0 0.0
        %3545 = vmatpush1.msra.mxu0 0.0
        %3546 = vmatprep.subr.mxu0 0.0
        %3547 = vmatpush1.msra.mxu0 0.0
        %3548 = vmatprep.subr.mxu0 0.0
        %3549 = vmatpush1.msra.mxu0 0.0
        %3550 = vmatprep.subr.mxu0 0.0
        %3551 = vmatpush1.msra.mxu0 0.0
        %3552 = vmatprep.subr.mxu0 0.0
        %3553 = vmatpush1.msra.mxu0 0.0
        %3554 = vmatprep.subr.mxu0 0.0
        %3555 = vmatpush1.msra.mxu0 0.0
        %3556 = vmatprep.subr.mxu0 0.0
        %3557 = vmatpush1.msra.mxu0 %v3355
        %3558 = vmatprep.subr.mxu0 0.0
        %3559 = vmatpush1.msra.mxu0 %v3354
        %3560 = vmatprep.subr.mxu0 0.0
        %3561 = vmatpush1.msra.mxu0 %v3353
        %3562 = vmatprep.subr.mxu0 0.0
        %3563 = vmatpush1.msra.mxu0 %v3352
        %3564 = vmatprep.subr.mxu0 0.0
        %3565 = vmatpush1.msra.mxu0 %v3351
        %3566 = vmatprep.subr.mxu0 0.0
        %3567 = vmatpush1.msra.mxu0 %v3350
        %3568 = vmatprep.subr.mxu0 0.0
        %3569 = vmatpush1.msra.mxu0 %v3349
        %3570 = vmatprep.subr.mxu0 0.0
        %3571 = vmatpush1.msra.mxu0 %v3348
        %3572 = vmatprep.subr.mxu0 0.0
        %3573 = vmatpush2.msra.mxu0 0.0
        %3574 = vmatprep.subr.mxu0 0.0
        %3575 = vmatpush2.msra.mxu0 0.0
        %3576 = vmatprep.subr.mxu0 0.0
        %3577 = vmatpush2.msra.mxu0 0.0
        %3578 = vmatprep.subr.mxu0 0.0
        %3579 = vmatpush2.msra.mxu0 0.0
        %3580 = vmatprep.subr.mxu0 0.0
        %3581 = vmatpush2.msra.mxu0 0.0
        %3582 = vmatprep.subr.mxu0 0.0
        %3583 = vmatpush2.msra.mxu0 0.0
        %3584 = vmatprep.subr.mxu0 0.0
        %3585 = vmatpush2.msra.mxu0 0.0
        %3586 = vmatprep.subr.mxu0 0.0
        %3587 = vmatpush2.msra.mxu0 0.0
        %3588 = vmatprep.subr.mxu0 0.0
        %3589 = vmatpush2.msra.mxu0 0.0
        %3590 = vmatprep.subr.mxu0 0.0
        %3591 = vmatpush2.msra.mxu0 0.0
        %3592 = vmatprep.subr.mxu0 0.0
        %3593 = vmatpush2.msra.mxu0 0.0
        %3594 = vmatprep.subr.mxu0 0.0
        %3595 = vmatpush2.msra.mxu0 0.0
        %3596 = vmatprep.subr.mxu0 0.0
        %3597 = vmatpush2.msra.mxu0 0.0
        %3598 = vmatprep.subr.mxu0 0.0
        %3599 = vmatpush2.msra.mxu0 0.0
        %3600 = vmatprep.subr.mxu0 0.0
        %3601 = vmatpush2.msra.mxu0 0.0
        %3602 = vmatprep.subr.mxu0 0.0
        %3603 = vmatpush2.msra.mxu0 0.0
        %3604 = vmatprep.mubr.f32.mxu0 0.0
        %3605 = vmatmul.mubr.f32.gmra.mxu0 %v3538
        %v3606 = vpop.f32.mrf.mxu0
        %v3607 = vadd.f32 0.0, %v3606
        %v3608 = vpop.f32.mrf.mxu0
        %3609 = vdwg.mxu0
        %v3610 = vadd.f32 %v3498, %v3607
        %v3611 = vlaneseq
        %v3612 = vshrl.u32 %v3611, 7
        %v3613 = vsub.s32 2, %v3612
        %v3614 = vrot.slane %v3328, %v3613
        %v3615 = vlaneseq
        %v3616 = vshrl.u32 %v3615, 7
        %v3617 = vsub.s32 2, %v3616
        %v3618 = vrot.slane %v3336, %v3617
        %v3619 = vlaneseq
        %v3620 = vshrl.u32 %v3619, 7
        %v3621 = vsub.s32 2, %v3620
        %v3622 = vrot.slane %v3329, %v3621
        %v3623 = vlaneseq
        %v3624 = vshrl.u32 %v3623, 7
        %v3625 = vsub.s32 2, %v3624
        %v3626 = vrot.slane %v3337, %v3625
        %v3627 = vlaneseq
        %v3628 = vshrl.u32 %v3627, 7
        %v3629 = vsub.s32 2, %v3628
        %v3630 = vrot.slane %v3330, %v3629
        %v3631 = vlaneseq
        %v3632 = vshrl.u32 %v3631, 7
        %v3633 = vsub.s32 2, %v3632
        %v3634 = vrot.slane %v3338, %v3633
        %v3635 = vlaneseq
        %v3636 = vshrl.u32 %v3635, 7
        %v3637 = vsub.s32 2, %v3636
        %v3638 = vrot.slane %v3331, %v3637
        %v3639 = vlaneseq
        %v3640 = vshrl.u32 %v3639, 7
        %v3641 = vsub.s32 2, %v3640
        %v3642 = vrot.slane %v3339, %v3641
        %v3643 = vsel %vm3405, %v3618, %v3614
        %v3644 = vsel %vm3407, %v3622, %v3643
        %v3645 = vsel %vm3409, %v3626, %v3644
        %v3646 = vsel %vm3411, %v3630, %v3645
        %v3647 = vsel %vm3413, %v3634, %v3646
        %v3648 = vsel %vm3415, %v3638, %v3647
        %v3649 = vsel %vm3417, %v3642, %v3648
        %v3650 = vsel %vm3419, %v3649, 0
        %3652 = vmatprep.subr.mxu0 0.0
        %3653 = vmatpush1.msra.mxu0 0.0
        %3654 = vmatprep.subr.mxu0 0.0
        %3655 = vmatpush1.msra.mxu0 0.0
        %3656 = vmatprep.subr.mxu0 0.0
        %3657 = vmatpush1.msra.mxu0 0.0
        %3658 = vmatprep.subr.mxu0 0.0
        %3659 = vmatpush1.msra.mxu0 0.0
        %3660 = vmatprep.subr.mxu0 0.0
        %3661 = vmatpush1.msra.mxu0 0.0
        %3662 = vmatprep.subr.mxu0 0.0
        %3663 = vmatpush1.msra.mxu0 0.0
        %3664 = vmatprep.subr.mxu0 0.0
        %3665 = vmatpush1.msra.mxu0 0.0
        %3666 = vmatprep.subr.mxu0 0.0
        %3667 = vmatpush1.msra.mxu0 0.0
        %3668 = vmatprep.subr.mxu0 0.0
        %3669 = vmatpush1.msra.mxu0 %v3363
        %3670 = vmatprep.subr.mxu0 0.0
        %3671 = vmatpush1.msra.mxu0 %v3362
        %3672 = vmatprep.subr.mxu0 0.0
        %3673 = vmatpush1.msra.mxu0 %v3361
        %3674 = vmatprep.subr.mxu0 0.0
        %3675 = vmatpush1.msra.mxu0 %v3360
        %3676 = vmatprep.subr.mxu0 0.0
        %3677 = vmatpush1.msra.mxu0 %v3359
        %3678 = vmatprep.subr.mxu0 0.0
        %3679 = vmatpush1.msra.mxu0 %v3358
        %3680 = vmatprep.subr.mxu0 0.0
        %3681 = vmatpush1.msra.mxu0 %v3357
        %3682 = vmatprep.subr.mxu0 0.0
        %3683 = vmatpush1.msra.mxu0 %v3356
        %3684 = vmatprep.subr.mxu0 0.0
        %3685 = vmatpush2.msra.mxu0 0.0
        %3686 = vmatprep.subr.mxu0 0.0
        %3687 = vmatpush2.msra.mxu0 0.0
        %3688 = vmatprep.subr.mxu0 0.0
        %3689 = vmatpush2.msra.mxu0 0.0
        %3690 = vmatprep.subr.mxu0 0.0
        %3691 = vmatpush2.msra.mxu0 0.0
        %3692 = vmatprep.subr.mxu0 0.0
        %3693 = vmatpush2.msra.mxu0 0.0
        %3694 = vmatprep.subr.mxu0 0.0
        %3695 = vmatpush2.msra.mxu0 0.0
        %3696 = vmatprep.subr.mxu0 0.0
        %3697 = vmatpush2.msra.mxu0 0.0
        %3698 = vmatprep.subr.mxu0 0.0
        %3699 = vmatpush2.msra.mxu0 0.0
        %3700 = vmatprep.subr.mxu0 0.0
        %3701 = vmatpush2.msra.mxu0 0.0
        %3702 = vmatprep.subr.mxu0 0.0
        %3703 = vmatpush2.msra.mxu0 0.0
        %3704 = vmatprep.subr.mxu0 0.0
        %3705 = vmatpush2.msra.mxu0 0.0
        %3706 = vmatprep.subr.mxu0 0.0
        %3707 = vmatpush2.msra.mxu0 0.0
        %3708 = vmatprep.subr.mxu0 0.0
        %3709 = vmatpush2.msra.mxu0 0.0
        %3710 = vmatprep.subr.mxu0 0.0
        %3711 = vmatpush2.msra.mxu0 0.0
        %3712 = vmatprep.subr.mxu0 0.0
        %3713 = vmatpush2.msra.mxu0 0.0
        %3714 = vmatprep.subr.mxu0 0.0
        %3715 = vmatpush2.msra.mxu0 0.0
        %3716 = vmatprep.mubr.f32.mxu0 0.0
        %3717 = vmatmul.mubr.f32.gmra.mxu0 %v3650
        %v3718 = vpop.f32.mrf.mxu0
        %v3719 = vadd.f32 0.0, %v3718
        %v3720 = vpop.f32.mrf.mxu0
        %3721 = vdwg.mxu0
        %v3722 = vadd.f32 %v3610, %v3719
        %v3723 = vlaneseq
        %v3724 = vshrl.u32 %v3723, 7
        %v3725 = vsub.s32 3, %v3724
        %v3726 = vrot.slane %v3328, %v3725
        %v3727 = vlaneseq
        %v3728 = vshrl.u32 %v3727, 7
        %v3729 = vsub.s32 3, %v3728
        %v3730 = vrot.slane %v3336, %v3729
        %v3731 = vlaneseq
        %v3732 = vshrl.u32 %v3731, 7
        %v3733 = vsub.s32 3, %v3732
        %v3734 = vrot.slane %v3329, %v3733
        %v3735 = vlaneseq
        %v3736 = vshrl.u32 %v3735, 7
        %v3737 = vsub.s32 3, %v3736
        %v3738 = vrot.slane %v3337, %v3737
        %v3739 = vlaneseq
        %v3740 = vshrl.u32 %v3739, 7
        %v3741 = vsub.s32 3, %v3740
        %v3742 = vrot.slane %v3330, %v3741
        %v3743 = vlaneseq
        %v3744 = vshrl.u32 %v3743, 7
        %v3745 = vsub.s32 3, %v3744
        %v3746 = vrot.slane %v3338, %v3745
        %v3747 = vlaneseq
        %v3748 = vshrl.u32 %v3747, 7
        %v3749 = vsub.s32 3, %v3748
        %v3750 = vrot.slane %v3331, %v3749
        %v3751 = vlaneseq
        %v3752 = vshrl.u32 %v3751, 7
        %v3753 = vsub.s32 3, %v3752
        %v3754 = vrot.slane %v3339, %v3753
        %v3755 = vsel %vm3405, %v3730, %v3726
        %v3756 = vsel %vm3407, %v3734, %v3755
        %v3757 = vsel %vm3409, %v3738, %v3756
        %v3758 = vsel %vm3411, %v3742, %v3757
        %v3759 = vsel %vm3413, %v3746, %v3758
        %v3760 = vsel %vm3415, %v3750, %v3759
        %v3761 = vsel %vm3417, %v3754, %v3760
        %v3762 = vsel %vm3419, %v3761, 0
        %3764 = vmatprep.subr.mxu0 0.0
        %3765 = vmatpush1.msra.mxu0 0.0
        %3766 = vmatprep.subr.mxu0 0.0
        %3767 = vmatpush1.msra.mxu0 0.0
        %3768 = vmatprep.subr.mxu0 0.0
        %3769 = vmatpush1.msra.mxu0 0.0
        %3770 = vmatprep.subr.mxu0 0.0
        %3771 = vmatpush1.msra.mxu0 0.0
        %3772 = vmatprep.subr.mxu0 0.0
        %3773 = vmatpush1.msra.mxu0 0.0
        %3774 = vmatprep.subr.mxu0 0.0
        %3775 = vmatpush1.msra.mxu0 0.0
        %3776 = vmatprep.subr.mxu0 0.0
        %3777 = vmatpush1.msra.mxu0 0.0
        %3778 = vmatprep.subr.mxu0 0.0
        %3779 = vmatpush1.msra.mxu0 0.0
        %3780 = vmatprep.subr.mxu0 0.0
        %3781 = vmatpush1.msra.mxu0 %v3371
        %3782 = vmatprep.subr.mxu0 0.0
        %3783 = vmatpush1.msra.mxu0 %v3370
        %3784 = vmatprep.subr.mxu0 0.0
        %3785 = vmatpush1.msra.mxu0 %v3369
        %3786 = vmatprep.subr.mxu0 0.0
        %3787 = vmatpush1.msra.mxu0 %v3368
        %3788 = vmatprep.subr.mxu0 0.0
        %3789 = vmatpush1.msra.mxu0 %v3367
        %3790 = vmatprep.subr.mxu0 0.0
        %3791 = vmatpush1.msra.mxu0 %v3366
        %3792 = vmatprep.subr.mxu0 0.0
        %3793 = vmatpush1.msra.mxu0 %v3365
        %3794 = vmatprep.subr.mxu0 0.0
        %3795 = vmatpush1.msra.mxu0 %v3364
        %3796 = vmatprep.subr.mxu0 0.0
        %3797 = vmatpush2.msra.mxu0 0.0
        %3798 = vmatprep.subr.mxu0 0.0
        %3799 = vmatpush2.msra.mxu0 0.0
        %3800 = vmatprep.subr.mxu0 0.0
        %3801 = vmatpush2.msra.mxu0 0.0
        %3802 = vmatprep.subr.mxu0 0.0
        %3803 = vmatpush2.msra.mxu0 0.0
        %3804 = vmatprep.subr.mxu0 0.0
        %3805 = vmatpush2.msra.mxu0 0.0
        %3806 = vmatprep.subr.mxu0 0.0
        %3807 = vmatpush2.msra.mxu0 0.0
        %3808 = vmatprep.subr.mxu0 0.0
        %3809 = vmatpush2.msra.mxu0 0.0
        %3810 = vmatprep.subr.mxu0 0.0
        %3811 = vmatpush2.msra.mxu0 0.0
        %3812 = vmatprep.subr.mxu0 0.0
        %3813 = vmatpush2.msra.mxu0 0.0
        %3814 = vmatprep.subr.mxu0 0.0
        %3815 = vmatpush2.msra.mxu0 0.0
        %3816 = vmatprep.subr.mxu0 0.0
        %3817 = vmatpush2.msra.mxu0 0.0
        %3818 = vmatprep.subr.mxu0 0.0
        %3819 = vmatpush2.msra.mxu0 0.0
        %3820 = vmatprep.subr.mxu0 0.0
        %3821 = vmatpush2.msra.mxu0 0.0
        %3822 = vmatprep.subr.mxu0 0.0
        %3823 = vmatpush2.msra.mxu0 0.0
        %3824 = vmatprep.subr.mxu0 0.0
        %3825 = vmatpush2.msra.mxu0 0.0
        %3826 = vmatprep.subr.mxu0 0.0
        %3827 = vmatpush2.msra.mxu0 0.0
        %3828 = vmatprep.mubr.f32.mxu0 0.0
        %3829 = vmatmul.mubr.f32.gmra.mxu0 %v3762
        %v3830 = vpop.f32.mrf.mxu0
        %v3831 = vadd.f32 0.0, %v3830
        %v3832 = vpop.f32.mrf.mxu0
        %3833 = vdwg.mxu0
        %v3834 = vadd.f32 %v3722, %v3831
        %v3835 = vld [vmem:[%s7] sm:$0xff]
        %v3836 = vld [vmem:[%s7 + $0x8] sm:$0xff]
        %v3837 = vld [vmem:[%s7 + $0x10] sm:$0xff]
        %v3838 = vld [vmem:[%s7 + $0x18] sm:$0xff]
        %v3839 = vld [vmem:[%s7 + $0x20] sm:$0xff]
        %v3840 = vld [vmem:[%s7 + $0x28] sm:$0xff]
        %v3841 = vld [vmem:[%s7 + $0x30] sm:$0xff]
        %v3842 = vld [vmem:[%s7 + $0x38] sm:$0xff]
        %v3843 = vld [vmem:[%s7 + $0x40] sm:$0xff]
        %v3844 = vld [vmem:[%s7 + $0x48] sm:$0xff]
        %v3845 = vld [vmem:[%s7 + $0x50] sm:$0xff]
        %v3846 = vld [vmem:[%s7 + $0x58] sm:$0xff]
        %v3847 = vld [vmem:[%s7 + $0x60] sm:$0xff]
        %v3848 = vld [vmem:[%s7 + $0x68] sm:$0xff]
        %v3849 = vld [vmem:[%s7 + $0x70] sm:$0xff]
        %v3850 = vld [vmem:[%s8] sm:$0x1]
        %v3852 = vlaneseq
        %v3853 = vshrl.u32 %v3852, 7
        %v3854 = vsub.s32 0, %v3853
        %v3855 = vrot.slane %v3850, %v3854
        %vm3857 = vcmask 982016
        %v3859 = vsel %vm3857, %v3834, 0
        %3861 = vmatprep.subr.mxu0 0.0
        %3862 = vmatpush1.msra.mxu0 0.0
        %3863 = vmatprep.subr.mxu0 0.0
        %3864 = vmatpush1.msra.mxu0 %v3849
        %3865 = vmatprep.subr.mxu0 0.0
        %3866 = vmatpush1.msra.mxu0 %v3848
        %3867 = vmatprep.subr.mxu0 0.0
        %3868 = vmatpush1.msra.mxu0 %v3847
        %3869 = vmatprep.subr.mxu0 0.0
        %3870 = vmatpush1.msra.mxu0 %v3846
        %3871 = vmatprep.subr.mxu0 0.0
        %3872 = vmatpush1.msra.mxu0 %v3845
        %3873 = vmatprep.subr.mxu0 0.0
        %3874 = vmatpush1.msra.mxu0 %v3844
        %3875 = vmatprep.subr.mxu0 0.0
        %3876 = vmatpush1.msra.mxu0 %v3843
        %3877 = vmatprep.subr.mxu0 0.0
        %3878 = vmatpush1.msra.mxu0 %v3842
        %3879 = vmatprep.subr.mxu0 0.0
        %3880 = vmatpush1.msra.mxu0 %v3841
        %3881 = vmatprep.subr.mxu0 0.0
        %3882 = vmatpush1.msra.mxu0 %v3840
        %3883 = vmatprep.subr.mxu0 0.0
        %3884 = vmatpush1.msra.mxu0 %v3839
        %3885 = vmatprep.subr.mxu0 0.0
        %3886 = vmatpush1.msra.mxu0 %v3838
        %3887 = vmatprep.subr.mxu0 0.0
        %3888 = vmatpush1.msra.mxu0 %v3837
        %3889 = vmatprep.subr.mxu0 0.0
        %3890 = vmatpush1.msra.mxu0 %v3836
        %3891 = vmatprep.subr.mxu0 0.0
        %3892 = vmatpush1.msra.mxu0 %v3835
        %3893 = vmatprep.subr.mxu0 0.0
        %3894 = vmatpush2.msra.mxu0 0.0
        %3895 = vmatprep.subr.mxu0 0.0
        %3896 = vmatpush2.msra.mxu0 0.0
        %3897 = vmatprep.subr.mxu0 0.0
        %3898 = vmatpush2.msra.mxu0 0.0
        %3899 = vmatprep.subr.mxu0 0.0
        %3900 = vmatpush2.msra.mxu0 0.0
        %3901 = vmatprep.subr.mxu0 0.0
        %3902 = vmatpush2.msra.mxu0 0.0
        %3903 = vmatprep.subr.mxu0 0.0
        %3904 = vmatpush2.msra.mxu0 0.0
        %3905 = vmatprep.subr.mxu0 0.0
        %3906 = vmatpush2.msra.mxu0 0.0
        %3907 = vmatprep.subr.mxu0 0.0
        %3908 = vmatpush2.msra.mxu0 0.0
        %3909 = vmatprep.subr.mxu0 0.0
        %3910 = vmatpush2.msra.mxu0 0.0
        %3911 = vmatprep.subr.mxu0 0.0
        %3912 = vmatpush2.msra.mxu0 0.0
        %3913 = vmatprep.subr.mxu0 0.0
        %3914 = vmatpush2.msra.mxu0 0.0
        %3915 = vmatprep.subr.mxu0 0.0
        %3916 = vmatpush2.msra.mxu0 0.0
        %3917 = vmatprep.subr.mxu0 0.0
        %3918 = vmatpush2.msra.mxu0 0.0
        %3919 = vmatprep.subr.mxu0 0.0
        %3920 = vmatpush2.msra.mxu0 0.0
        %3921 = vmatprep.subr.mxu0 0.0
        %3922 = vmatpush2.msra.mxu0 0.0
        %3923 = vmatprep.subr.mxu0 0.0
        %3924 = vmatpush2.msra.mxu0 0.0
        %3925 = vmatprep.mubr.f32.mxu0 0.0
        %3926 = vmatmul.mubr.f32.gmra.mxu0 %v3859
        %v3927 = vpop.f32.mrf.mxu0
        %v3928 = vadd.f32 %v3855, %v3927
        %v3929 = vpop.f32.mrf.mxu0
        %3930 = vdwg.mxu0
        %v3931 = vld [vmem:[%s9] sm:$0xff]
        %v3932 = vld [vmem:[%s9 + $0x8] sm:$0xff]
        %v3933 = vld [vmem:[%s9 + $0x10] sm:$0xff]
        %v3934 = vld [vmem:[%s9 + $0x18] sm:$0xff]
        %v3935 = vld [vmem:[%s9 + $0x20] sm:$0xff]
        %v3936 = vld [vmem:[%s9 + $0x28] sm:$0xff]
        %v3937 = vld [vmem:[%s9 + $0x30] sm:$0xff]
        %v3938 = vld [vmem:[%s9 + $0x38] sm:$0xff]
        %v3939 = vld [vmem:[%s9 + $0x40] sm:$0xff]
        %v3940 = vld [vmem:[%s9 + $0x48] sm:$0xff]
        %v3941 = vld [vmem:[%s9 + $0x50] sm:$0xf]
        %v3942 = vld [vmem:[%s10] sm:$0x1]
        %v3944 = vlaneseq
        %v3945 = vshrl.u32 %v3944, 7
        %v3946 = vsub.s32 0, %v3945
        %v3947 = vrot.slane %v3942, %v3946
        %v3950 = vsel %vm781, %v3928, 0
        %vm3952 = vcmask 1043456
        %v3954 = vsel %vm3952, %v3941, 0
        %3956 = vmatprep.subr.mxu0 0.0
        %3957 = vmatpush1.msra.mxu0 0.0
        %3958 = vmatprep.subr.mxu0 0.0
        %3959 = vmatpush1.msra.mxu0 0.0
        %3960 = vmatprep.subr.mxu0 0.0
        %3961 = vmatpush1.msra.mxu0 0.0
        %3962 = vmatprep.subr.mxu0 0.0
        %3963 = vmatpush1.msra.mxu0 0.0
        %3964 = vmatprep.subr.mxu0 0.0
        %3965 = vmatpush1.msra.mxu0 0.0
        %3966 = vmatprep.subr.mxu0 0.0
        %3967 = vmatpush1.msra.mxu0 %v3954
        %3968 = vmatprep.subr.mxu0 0.0
        %3969 = vmatpush1.msra.mxu0 %v3940
        %3970 = vmatprep.subr.mxu0 0.0
        %3971 = vmatpush1.msra.mxu0 %v3939
        %3972 = vmatprep.subr.mxu0 0.0
        %3973 = vmatpush1.msra.mxu0 %v3938
        %3974 = vmatprep.subr.mxu0 0.0
        %3975 = vmatpush1.msra.mxu0 %v3937
        %3976 = vmatprep.subr.mxu0 0.0
        %3977 = vmatpush1.msra.mxu0 %v3936
        %3978 = vmatprep.subr.mxu0 0.0
        %3979 = vmatpush1.msra.mxu0 %v3935
        %3980 = vmatprep.subr.mxu0 0.0
        %3981 = vmatpush1.msra.mxu0 %v3934
        %3982 = vmatprep.subr.mxu0 0.0
        %3983 = vmatpush1.msra.mxu0 %v3933
        %3984 = vmatprep.subr.mxu0 0.0
        %3985 = vmatpush1.msra.mxu0 %v3932
        %3986 = vmatprep.subr.mxu0 0.0
        %3987 = vmatpush1.msra.mxu0 %v3931
        %3988 = vmatprep.subr.mxu0 0.0
        %3989 = vmatpush2.msra.mxu0 0.0
        %3990 = vmatprep.subr.mxu0 0.0
        %3991 = vmatpush2.msra.mxu0 0.0
        %3992 = vmatprep.subr.mxu0 0.0
        %3993 = vmatpush2.msra.mxu0 0.0
        %3994 = vmatprep.subr.mxu0 0.0
        %3995 = vmatpush2.msra.mxu0 0.0
        %3996 = vmatprep.subr.mxu0 0.0
        %3997 = vmatpush2.msra.mxu0 0.0
        %3998 = vmatprep.subr.mxu0 0.0
        %3999 = vmatpush2.msra.mxu0 0.0
        %4000 = vmatprep.subr.mxu0 0.0
        %4001 = vmatpush2.msra.mxu0 0.0
        %4002 = vmatprep.subr.mxu0 0.0
        %4003 = vmatpush2.msra.mxu0 0.0
        %4004 = vmatprep.subr.mxu0 0.0
        %4005 = vmatpush2.msra.mxu0 0.0
        %4006 = vmatprep.subr.mxu0 0.0
        %4007 = vmatpush2.msra.mxu0 0.0
        %4008 = vmatprep.subr.mxu0 0.0
        %4009 = vmatpush2.msra.mxu0 0.0
        %4010 = vmatprep.subr.mxu0 0.0
        %4011 = vmatpush2.msra.mxu0 0.0
        %4012 = vmatprep.subr.mxu0 0.0
        %4013 = vmatpush2.msra.mxu0 0.0
        %4014 = vmatprep.subr.mxu0 0.0
        %4015 = vmatpush2.msra.mxu0 0.0
        %4016 = vmatprep.subr.mxu0 0.0
        %4017 = vmatpush2.msra.mxu0 0.0
        %4018 = vmatprep.subr.mxu0 0.0
        %4019 = vmatpush2.msra.mxu0 0.0
        %4020 = vmatprep.mubr.f32.mxu0 0.0
        %4021 = vmatmul.mubr.f32.gmra.mxu0 %v3950
        %v4022 = vpop.f32.mrf.mxu0
        %v4023 = vadd.f32 %v3947, %v4022
        %v4024 = vpop.f32.mrf.mxu0
        %4025 = vdwg.mxu0
        %vm4026 = vcmask 80896
        %v4027 = vsel %vm4026, %v4023, -inf
        %4028 = vmax.xlane.f32.xlu0 %v4027
        %v4029 = vpop.xlane.xlu0 %4028
        %v4030 = vsub.f32 %v4023, %v4029
        %v4031 = vmul.f32 %v4030, 1.442695
        %v4032 = vpow.pop %v4031
        %v4033 = vsel %vm4026, %v4032, 0.0
        %4034 = vadd.xlane.f32.xlu0 %v4033
        %v4035 = vpop.xlane.xlu0 %4034
        %v4036 = vrcp.pop %v4035
        %v4037 = vmul.f32 %v4032, %v4036
        %4038 = vst.msk [vmem:[%s382] sm:$0xff] %vm4026, %v4037
        %s4039 = sand.u32 %s269, 1
        %s4040 = scalar_lea.sflag [#allocation3], %s4039
        %s4041 = sand.u32 %s269, 1
        %s4042 = smul.addr %s4041, 8
        %s4043 = scalar_lea.vmem [#allocation2], %s4042
        // Predicated region
        $region65: #{model_forward.1} parent=63 // pred_check
          %p4044 = pneg %p279
        $region66: #{model_forward.1} parent=63 // pred_check_branch
          %4046 = sbr.rel (%p4044) target = $region68
        $region67: #{model_forward.1} parent=63 // pred_region
          %s4048 = ssub.s32 128, 128
          %4049 = vsyncadd %s4040, %s4048
          %s4050 = smul.addr %s25, 128
          %s4051 = scalar_lea.hbm %s11, %s4050
          %s4053 = sshll.u32 %s4043, 4
          %s4054 = int_to_ptr.vmem [resolvable:$true] %s4053
          %4056 = dma.vmem_to_hbm [thread:$0]  %s4054, 128, %s4051, %s4040
        $region68: #{model_forward.1} parent=63 // pred_fallthru
          _
      $region64: #{model_forward.1} parent=5 // pred_fallthru
        _
      %p4057 = scmp.le.s32.totalorder 2, %s20
      // Predicated region
      $region69: #{model_forward.1} parent=5 // pred_check
        %p4058 = pneg %p4057
      $region70: #{model_forward.1} parent=5 // pred_check_branch
        %4060 = sbr.rel (%p4058) target = $region72
      $region71: #{model_forward.1} parent=5 // pred_region
        %s4061 = ssub.s32 %s20, 2
        // Predicated region
        $region73: #{model_forward.1} parent=71 // pred_check
          %p4062 = pneg %p285
        $region74: #{model_forward.1} parent=71 // pred_check_branch
          %4064 = sbr.rel (%p4062) target = $region76
        $region75: #{model_forward.1} parent=71 // pred_region
          %s4065 = sand.u32 %s270, 1
          %s4066 = scalar_lea.sflag [#allocation3], %s4065
          %s4067 = sand.u32 %s270, 1
          %s4068 = smul.addr %s4067, 8
          %s4069 = scalar_lea.vmem [#allocation2], %s4068
          %4070 = dma.done %s4066, 128
        $region76: #{model_forward.1} parent=71 // pred_fallthru
          _
      $region72: #{model_forward.1} parent=5 // pred_fallthru
        _
    $region6: #{model_forward.1} parent=1 // loop_footer
      %s24 = sadd.s32 1, %s20
    $region7: #{model_forward.1} parent=1 // loop_footer_branch
      %19 = sbr.rel target = $region3
    $region8: #{model_forward.1} parent=1 // loop_exit
      _
    %4071 = vsyncpa [#allocation3], 1
    %s4072 = scalar_lea.sflag [#allocation3], 1
    %4073 = vsyncpa %s4072, 1

</llo_original>
